<compile_context>
chip_gen: v7x
topology: tpu7x:2x2x1
jax: 0.10.0
libtpu: 0.0.40
codegen_flags: <defaults>
</compile_context>

<pallas_src>
import functools

import jax
import jax.numpy as jnp
from jax import lax
from jax.experimental import pallas as pl
from jax.experimental.pallas import tpu as pltpu


_TN = 512       # set1 points per tile (sublane dim of the d^2 tile)
_TM = 1024      # set2 points per tile (lane dim of the d^2 tile)
_DP = 8         # augmented-coordinate lanes (4 used, padded to 8)
_BIG = 1e30     # "never updated" accumulator sentinel (squared space)
_POISON = 3.0e4  # pad-point coordinate: far from any real pixel, no f32 overflow


# ----------------------------- Pallas kernel ------------------------------ #
def _phd_kernel(counts_ref, p_ref, qt_ref, out_ref,
                row_min_ref, col_min_ref, dmax_ref, *, tol_sq):
    i = pl.program_id(0)            # row tile over set1
    j = pl.program_id(1)            # col tile over set2 (innermost)
    n_row_t = pl.num_programs(0)
    n_col_t = pl.num_programs(1)

    n_valid = counts_ref[0]         # real points in set1
    m_valid = counts_ref[1]         # real points in set2

    tn = p_ref.shape[0]
    tm = qt_ref.shape[1]
    row_start = i * tn
    col_start = j * tm

    # -------- init accumulators --------
    @pl.when(jnp.logical_and(i == 0, j == 0))
    def _():
        col_min_ref[...] = jnp.full_like(col_min_ref, _BIG)
        dmax_ref[...] = jnp.full_like(dmax_ref, -1.0)

    @pl.when(j == 0)
    def _():
        row_min_ref[...] = jnp.full_like(row_min_ref, _BIG)

    # -------- per-tile compute (padding-only tiles are skipped) --------
    tile_active = jnp.logical_and(row_start < n_valid, col_start < m_valid)

    @pl.when(tile_active)
    def _():
        # One MXU dot yields squared distances directly (augmented coords).
        # Pad points are "poisoned" far away, so no masking is needed here.
        d2 = lax.dot_general(p_ref[...], qt_ref[...],
                             (((1,), (0,)), ((), ())),
                             preferred_element_type=jnp.float32)      # (tn, tm)

        # direction set1 -> set2: fold TM lanes down to 128 with VPU-only
        # halving minimums; the cross-lane reduce is deferred to finalize.
        rm = d2
        while rm.shape[1] > 128:
            h = rm.shape[1] // 2
            rm = jnp.minimum(rm[:, :h], rm[:, h:])
        row_min_ref[...] = jnp.minimum(row_min_ref[...], rm)          # (tn, 128)

        # direction set2 -> set1: fold TN sublanes down to 8 with VPU-only
        # halving minimums; the sublane reduce is deferred to the final step.
        cm = d2
        while cm.shape[0] > 8:
            h = cm.shape[0] // 2
            cm = jnp.minimum(cm[:h, :], cm[h:, :])
        col_min_ref[j] = jnp.minimum(col_min_ref[j], cm)              # (8, tm)

    # -------- finish a row tile: mask pads, 128->1 reduce, running max ------
    @pl.when(j == n_col_t - 1)
    def _():
        rm = row_min_ref[...]                                         # (tn, 128)
        row_ids = row_start + lax.broadcasted_iota(jnp.int32, (tn, 1), 0)
        rm = jnp.where(row_ids < n_valid, rm, -1.0)                   # pads can't win max
        tile_max = jnp.max(jnp.min(rm, axis=1, keepdims=True))        # scalar, d^2 space
        dmax_ref[...] = jnp.maximum(dmax_ref[...], tile_max)

    # -------- final grid step: fold set2 -> set1, tolerance+sqrt, emit -----
    @pl.when(jnp.logical_and(i == n_row_t - 1, j == n_col_t - 1))
    def _():
        h2 = dmax_ref[...]                                            # (1, 1)
        for c in range(col_min_ref.shape[0]):                         # static unroll
            cm = jnp.min(col_min_ref[c], axis=0, keepdims=True)       # (1, tm)
            col_ids = c * tm + lax.broadcasted_iota(jnp.int32, (1, tm), 1)
            cm = jnp.where(col_ids < m_valid, cm, -1.0)
            h2 = jnp.maximum(h2, jnp.max(cm))
        # tolerance + sqrt applied once to the final scalar (monotone ops
        # commute with the max/min chain); matches `if whd == 0: whd = 0`.
        whd = jnp.where(h2 <= tol_sq, jnp.zeros_like(h2),
                        jnp.sqrt(jnp.maximum(h2, 0.0)))
        out_ref[...] = whd


def _hausdorff_with_tolerance(p_aug, qt_aug, n1, n2, tolerance):
    """p_aug: (N_pad, 8) f32 LHS, qt_aug: (8, M_pad) f32 RHS^T, n1/n2: counts."""
    n_pad, dp = p_aug.shape
    _, m_pad = qt_aug.shape
    n_row_t = n_pad // _TN
    n_col_t = m_pad // _TM
    counts = jnp.stack([jnp.asarray(n1, jnp.int32), jnp.asarray(n2, jnp.int32)])

    kernel = functools.partial(_phd_kernel, tol_sq=float(tolerance) ** 2)
    out = pl.pallas_call(
        kernel,
        out_shape=jax.ShapeDtypeStruct((1, 1), jnp.float32),
        grid_spec=pltpu.PrefetchScalarGridSpec(
            num_scalar_prefetch=1,                        # counts -> SMEM
            grid=(n_row_t, n_col_t),
            in_specs=[pl.BlockSpec((_TN, dp), lambda i, j, cnt: (i, 0)),
                      pl.BlockSpec((dp, _TM), lambda i, j, cnt: (0, j))],
            out_specs=pl.BlockSpec((1, 1), lambda i, j, cnt: (0, 0)),
            scratch_shapes=[
                pltpu.VMEM((_TN, 128), jnp.float32),           # lane-dense row partial mins
                pltpu.VMEM((n_col_t, 8, _TM), jnp.float32),    # 8-sublane col partial mins
                pltpu.VMEM((1, 1), jnp.float32),               # running max (d^2), dir 1
            ]),
        compiler_params=pltpu.CompilerParams(
            dimension_semantics=("arbitrary", "arbitrary"),    # both axes carry reductions
            vmem_limit_bytes=32 * 1024 * 1024),
    )(counts, p_aug, qt_aug)

    whd = out[0, 0]
    # Empty-set guard (PyTorch falls back to 0 on failure).
    return jnp.where(jnp.logical_and(n1 > 0, n2 > 0), whd, jnp.float32(0.0))


# ------------------------------- JAX glue ---------------------------------- #
def _extract_points(img):
    """cv2.threshold(img, 0.5, 1, THRESH_BINARY_INV): binary = 1 where img <= 0.5."""
    # TODO(synk): skimage.morphology.skeletonize has no clean Pallas/JAX
    # equivalent; the thresholded mask's pixel coordinates are used directly.
    h, w = img.shape
    mask = (img <= 0.5).ravel()
    rr, cc = jnp.meshgrid(jnp.arange(h, dtype=jnp.float32),
                          jnp.arange(w, dtype=jnp.float32), indexing="ij")
    coords = jnp.stack([rr.ravel(), cc.ravel()], axis=1)    # argwhere order
    n_valid = jnp.sum(mask.astype(jnp.int32))
    # O(HW) cumsum-based compaction (valid points first).
    pos = jnp.cumsum(mask.astype(jnp.int32)) - 1
    dst = jnp.where(mask, pos, h * w)                       # OOB index -> dropped
    pts = jnp.zeros((h * w, 2), jnp.float32).at[dst].set(coords, mode="drop")
    return pts, n_valid


def _pad_poison_center(pts, n_valid, tile, center):
    """Pad the compacted point list to a tile multiple. Valid rows become
    centered coordinates; pad rows get a far-away 'poison' coordinate so the
    kernel's hot loop needs no masking."""
    n = pts.shape[0]
    n_pad = max(((n + tile - 1) // tile) * tile, tile)
    idx = jnp.arange(n_pad)
    coords = pts[jnp.minimum(idx, n - 1)] - center           # (n_pad, 2)
    valid = (idx < n_valid)[:, None]
    return jnp.where(valid, coords, _POISON)


def _augment_lhs(coords):
    """[-2r, -2c, |p|^2, 1] packed into 8 lanes (LHS of the MXU dot)."""
    r, c = coords[:, 0], coords[:, 1]
    sq = r * r + c * c
    ones = jnp.ones_like(r)
    aug = jnp.stack([-2.0 * r, -2.0 * c, sq, ones], axis=1)  # (N, 4)
    out = jnp.zeros((coords.shape[0], _DP), jnp.float32)
    return out.at[:, :4].set(aug)


def _augment_rhs_t(coords):
    """[r, c, 1, |q|^2] pre-transposed to (8, M): native KxN MXU layout."""
    r, c = coords[:, 0], coords[:, 1]
    sq = r * r + c * c
    ones = jnp.ones_like(r)
    aug = jnp.stack([r, c, ones, sq], axis=0)                # (4, M)
    out = jnp.zeros((_DP, coords.shape[0]), jnp.float32)
    return out.at[:4, :].set(aug)


@functools.partial(jax.jit, static_argnames=("tolerance",))
def perceptual_hausdorff_loss(set1, set2, tolerance=2):
    """set1, set2: NCHW score maps of shape (B, 1, H, W)."""
    s1 = jnp.squeeze(set1, axis=1)
    s2 = jnp.squeeze(set2, axis=1)
    # PyTorch's get_points returns inside the batch loop -> only batch 0 is used.
    img1, img2 = s1[0], s2[0]
    h, w = img1.shape
    p1, n1 = _extract_points(img1)
    p2, n2 = _extract_points(img2)
    # Shared static centering shift (distance-preserving) limits f32
    # cancellation in the expanded squared-distance form.
    center = jnp.array([(h - 1) * 0.5, (w - 1) * 0.5], jnp.float32)
    P = _augment_lhs(_pad_poison_center(p1, n1, _TN, center))
    Qt = _augment_rhs_t(_pad_poison_center(p2, n2, _TM, center))
    return _hausdorff_with_tolerance(P, Qt, n1, n2, tolerance)


# ----------------------------- reference check ----------------------------- #
def _reference_whd(img1, img2, tolerance):
    p1, n1 = _extract_points(img1)
    p2, n2 = _extract_points(img2)
    P = p1[: int(n1)]
    Q = p2[: int(n2)]
    d = jnp.sqrt(jnp.sum((P[:, None, :] - Q[None, :, :]) ** 2, axis=-1))
    d = jnp.where(d <= tolerance, 0.0, d)
    whd = jnp.maximum(jnp.max(jnp.min(d, axis=1)), jnp.max(jnp.min(d, axis=0)))
    return jnp.maximum(whd, 0.0)


def _check(a, b, tol=1e-4):
    assert abs(float(a) - float(b)) <= tol * max(1.0, abs(float(b))), (a, b)


if __name__ == "__main__":
    key = jax.random.PRNGKey(0)
    k1, k2, k3, k4, k5, k6 = jax.random.split(key, 6)

    # Case 1: small shapes consistent with the module: (B, 1, H, W).
    set1 = jax.random.uniform(k1, (2, 1, 16, 16), dtype=jnp.float32)
    set2 = jax.random.uniform(k2, (2, 1, 16, 16), dtype=jnp.float32)
    whd = perceptual_hausdorff_loss(set1, set2, tolerance=2)
    jax.block_until_ready(whd)
    _check(whd, _reference_whd(set1[0, 0], set2[0, 0], 2))

    # Case 2: multi-row-tile grid with padding rows.
    big1 = jax.random.uniform(k3, (1, 1, 32, 32), dtype=jnp.float32)
    big2 = jax.random.uniform(k4, (1, 1, 32, 32), dtype=jnp.float32)
    whd2 = perceptual_hausdorff_loss(big1, big2, tolerance=2)
    jax.block_until_ready(whd2)
    _check(whd2, _reference_whd(big1[0, 0], big2[0, 0], 2))

    # Case 3: multi-row AND multi-col tiles (40x40 -> 4 x 2 grid w/ pad tiles).
    m1 = jax.random.uniform(k5, (1, 1, 40, 40), dtype=jnp.float32)
    m2 = jax.random.uniform(k6, (1, 1, 40, 40), dtype=jnp.float32)
    whd3 = perceptual_hausdorff_loss(m1, m2, tolerance=2)
    jax.block_until_ready(whd3)
    _check(whd3, _reference_whd(m1[0, 0], m2[0, 0], 2))

    # Case 4: sparse, crafted point sets -> non-zero loss path exercised.
    img_a = jnp.ones((16, 16), jnp.float32).at[2, 3].set(0.0).at[4, 5].set(0.0)
    img_b = jnp.ones((16, 16), jnp.float32).at[12, 13].set(0.0)
    sp1 = img_a[None, None]
    sp2 = img_b[None, None]
    whd4 = perceptual_hausdorff_loss(sp1, sp2, tolerance=2)
    jax.block_until_ready(whd4)
    _check(whd4, _reference_whd(img_a, img_b, 2))

    print("KERNEL_OK")
</pallas_src>

<mosaic_0001>
module attributes {stable_mosaic.version = 11 : i64} {
  func.func @_phd_kernel(%arg0: i32, %arg1: i32, %arg2: memref<2xi32, #tpu.memory_space<smem>>, %arg3: memref<512x8xf32, #tpu.memory_space<vmem>>, %arg4: memref<8x1024xf32, #tpu.memory_space<vmem>>, %arg5: memref<1x1xf32, #tpu.memory_space<vmem>>, %arg6: memref<512x128xf32, #tpu.memory_space<vmem>>, %arg7: memref<1x8x1024xf32, #tpu.memory_space<vmem>>, %arg8: memref<1x1xf32, #tpu.memory_space<vmem>>) attributes {dimension_semantics = [#tpu.dimension_semantics<arbitrary>, #tpu.dimension_semantics<arbitrary>], iteration_bounds = array<i64: 1, 1>, scalar_prefetch = 1 : i64, scratch_operands = 3 : i64, tpu.core_type = #tpu.core_type<tc>, window_params = [{transform_indices = @transform_0, window_bounds = array<i64: 512, 8>}, {transform_indices = @transform_1, window_bounds = array<i64: 8, 1024>}, {pipeline_mode = #tpu.pipeline_mode<synchronous>, transform_indices = @transform_2, window_bounds = array<i64: 1, 1>}]} {
    %c0 = arith.constant 0 : index
    %0 = memref.load %arg2[%c0] : memref<2xi32, #tpu.memory_space<smem>>
    %c1 = arith.constant 1 : index
    %1 = memref.load %arg2[%c1] : memref<2xi32, #tpu.memory_space<smem>>
    %c512_i32 = arith.constant 512 : i32
    %2 = arith.muli %arg0, %c512_i32 : i32
    %c1024_i32 = arith.constant 1024 : i32
    %3 = arith.muli %arg1, %c1024_i32 : i32
    %c0_i32 = arith.constant 0 : i32
    %4 = arith.cmpi eq, %arg0, %c0_i32 : i32
    %c0_i32_0 = arith.constant 0 : i32
    %5 = arith.cmpi eq, %arg1, %c0_i32_0 : i32
    %6 = arith.andi %4, %5 : i1
    %7 = arith.extui %6 : i1 to i32
    %c0_i32_1 = arith.constant 0 : i32
    %8 = arith.cmpi ne, %7, %c0_i32_1 : i32
    scf.if %8 {
      %cst = arith.constant 1.000000e+30 : f32
      %25 = vector.broadcast %cst : f32 to vector<1x8x1024xf32>
      %c0_10 = arith.constant 0 : index
      %c0_11 = arith.constant 0 : index
      %c0_12 = arith.constant 0 : index
      %26 = vector.load %arg7[%c0_10, %c0_11, %c0_12] : memref<1x8x1024xf32, #tpu.memory_space<vmem>>, vector<1x8x1024xf32>
      tpu.vector_store %arg7[%c0_10, %c0_11, %c0_12], %25 {strides = array<i32>} : memref<1x8x1024xf32, #tpu.memory_space<vmem>>, vector<1x8x1024xf32>,
      %cst_13 = arith.constant -1.000000e+00 : f32
      %27 = vector.broadcast %cst_13 : f32 to vector<1x1xf32>
      %c0_14 = arith.constant 0 : index
      %c0_15 = arith.constant 0 : index
      %28 = vector.load %arg8[%c0_14, %c0_15] : memref<1x1xf32, #tpu.memory_space<vmem>>, vector<1x1xf32>
      tpu.vector_store %arg8[%c0_14, %c0_15], %27 {strides = array<i32>} : memref<1x1xf32, #tpu.memory_space<vmem>>, vector<1x1xf32>,
    } else {
    }
    %c0_i32_2 = arith.constant 0 : i32
    %9 = arith.cmpi eq, %arg1, %c0_i32_2 : i32
    %10 = arith.extui %9 : i1 to i32
    %c0_i32_3 = arith.constant 0 : i32
    %11 = arith.cmpi ne, %10, %c0_i32_3 : i32
    scf.if %11 {
      %cst = arith.constant 1.000000e+30 : f32
      %25 = vector.broadcast %cst : f32 to vector<512x128xf32>
      %c0_10 = arith.constant 0 : index
      %c0_11 = arith.constant 0 : index
      %26 = vector.load %arg6[%c0_10, %c0_11] : memref<512x128xf32, #tpu.memory_space<vmem>>, vector<512x128xf32>
      tpu.vector_store %arg6[%c0_10, %c0_11], %25 {strides = array<i32>} : memref<512x128xf32, #tpu.memory_space<vmem>>, vector<512x128xf32>,
    } else {
    }
    %12 = arith.cmpi slt, %2, %0 : i32
    %13 = arith.cmpi slt, %3, %1 : i32
    %14 = arith.andi %12, %13 : i1
    %15 = arith.extui %14 : i1 to i32
    %c0_i32_4 = arith.constant 0 : i32
    %16 = arith.cmpi ne, %15, %c0_i32_4 : i32
    scf.if %16 {
      %c0_10 = arith.constant 0 : index
      %c0_11 = arith.constant 0 : index
      %25 = vector.load %arg3[%c0_10, %c0_11] : memref<512x8xf32, #tpu.memory_space<vmem>>, vector<512x8xf32>
      %c0_12 = arith.constant 0 : index
      %c0_13 = arith.constant 0 : index
      %26 = vector.load %arg4[%c0_12, %c0_13] : memref<8x1024xf32, #tpu.memory_space<vmem>>, vector<8x1024xf32>
      %cst = arith.constant dense<0.000000e+00> : vector<512x1024xf32>
      %27 = tpu.matmul %25, %26, %cst {dimension_numbers = #tpu.dot_dimension_numbers<[1], [0], [0], [1], [0, 0, 1, 1], [], []>} : vector<512x8xf32>, vector<8x1024xf32>, vector<512x1024xf32> -> vector<512x1024xf32>
      %28 = vector.extract_strided_slice %27 {offsets = [0, 0], sizes = [512, 512], strides = [1, 1]} : vector<512x1024xf32> to vector<512x512xf32>
      %29 = vector.extract_strided_slice %27 {offsets = [0, 512], sizes = [512, 512], strides = [1, 1]} : vector<512x1024xf32> to vector<512x512xf32>
      %30 = arith.minimumf %28, %29 : vector<512x512xf32>
      %31 = vector.extract_strided_slice %30 {offsets = [0, 0], sizes = [512, 256], strides = [1, 1]} : vector<512x512xf32> to vector<512x256xf32>
      %32 = vector.extract_strided_slice %30 {offsets = [0, 256], sizes = [512, 256], strides = [1, 1]} : vector<512x512xf32> to vector<512x256xf32>
      %33 = arith.minimumf %31, %32 : vector<512x256xf32>
      %34 = vector.extract_strided_slice %33 {offsets = [0, 0], sizes = [512, 128], strides = [1, 1]} : vector<512x256xf32> to vector<512x128xf32>
      %35 = vector.extract_strided_slice %33 {offsets = [0, 128], sizes = [512, 128], strides = [1, 1]} : vector<512x256xf32> to vector<512x128xf32>
      %36 = arith.minimumf %34, %35 : vector<512x128xf32>
      %c0_14 = arith.constant 0 : index
      %c0_15 = arith.constant 0 : index
      %37 = vector.load %arg6[%c0_14, %c0_15] : memref<512x128xf32, #tpu.memory_space<vmem>>, vector<512x128xf32>
      %38 = arith.minimumf %37, %36 : vector<512x128xf32>
      %c0_16 = arith.constant 0 : index
      %c0_17 = arith.constant 0 : index
      %39 = vector.load %arg6[%c0_16, %c0_17] : memref<512x128xf32, #tpu.memory_space<vmem>>, vector<512x128xf32>
      tpu.vector_store %arg6[%c0_16, %c0_17], %38 {strides = array<i32>} : memref<512x128xf32, #tpu.memory_space<vmem>>, vector<512x128xf32>,
      %40 = vector.extract_strided_slice %27 {offsets = [0, 0], sizes = [256, 1024], strides = [1, 1]} : vector<512x1024xf32> to vector<256x1024xf32>
      %41 = vector.extract_strided_slice %27 {offsets = [256, 0], sizes = [256, 1024], strides = [1, 1]} : vector<512x1024xf32> to vector<256x1024xf32>
      %42 = arith.minimumf %40, %41 : vector<256x1024xf32>
      %43 = vector.extract_strided_slice %42 {offsets = [0, 0], sizes = [128, 1024], strides = [1, 1]} : vector<256x1024xf32> to vector<128x1024xf32>
      %44 = vector.extract_strided_slice %42 {offsets = [128, 0], sizes = [128, 1024], strides = [1, 1]} : vector<256x1024xf32> to vector<128x1024xf32>
      %45 = arith.minimumf %43, %44 : vector<128x1024xf32>
      %46 = vector.extract_strided_slice %45 {offsets = [0, 0], sizes = [64, 1024], strides = [1, 1]} : vector<128x1024xf32> to vector<64x1024xf32>
      %47 = vector.extract_strided_slice %45 {offsets = [64, 0], sizes = [64, 1024], strides = [1, 1]} : vector<128x1024xf32> to vector<64x1024xf32>
      %48 = arith.minimumf %46, %47 : vector<64x1024xf32>
      %49 = vector.extract_strided_slice %48 {offsets = [0, 0], sizes = [32, 1024], strides = [1, 1]} : vector<64x1024xf32> to vector<32x1024xf32>
      %50 = vector.extract_strided_slice %48 {offsets = [32, 0], sizes = [32, 1024], strides = [1, 1]} : vector<64x1024xf32> to vector<32x1024xf32>
      %51 = arith.minimumf %49, %50 : vector<32x1024xf32>
      %52 = vector.extract_strided_slice %51 {offsets = [0, 0], sizes = [16, 1024], strides = [1, 1]} : vector<32x1024xf32> to vector<16x1024xf32>
      %53 = vector.extract_strided_slice %51 {offsets = [16, 0], sizes = [16, 1024], strides = [1, 1]} : vector<32x1024xf32> to vector<16x1024xf32>
      %54 = arith.minimumf %52, %53 : vector<16x1024xf32>
      %55 = vector.extract_strided_slice %54 {offsets = [0, 0], sizes = [8, 1024], strides = [1, 1]} : vector<16x1024xf32> to vector<8x1024xf32>
      %56 = vector.extract_strided_slice %54 {offsets = [8, 0], sizes = [8, 1024], strides = [1, 1]} : vector<16x1024xf32> to vector<8x1024xf32>
      %57 = arith.minimumf %55, %56 : vector<8x1024xf32>
      %58 = arith.index_cast %arg1 : i32 to index
      %c0_18 = arith.constant 0 : index
      %c0_19 = arith.constant 0 : index
      %59 = vector.load %arg7[%58, %c0_18, %c0_19] : memref<1x8x1024xf32, #tpu.memory_space<vmem>>, vector<1x8x1024xf32>
      %60 = vector.shape_cast %59 : vector<1x8x1024xf32> to vector<8x1024xf32>
      %61 = arith.minimumf %60, %57 : vector<8x1024xf32>
      %62 = arith.index_cast %arg1 : i32 to index
      %c0_20 = arith.constant 0 : index
      %c0_21 = arith.constant 0 : index
      %63 = vector.load %arg7[%62, %c0_20, %c0_21] : memref<1x8x1024xf32, #tpu.memory_space<vmem>>, vector<1x8x1024xf32>
      %64 = vector.shape_cast %63 : vector<1x8x1024xf32> to vector<8x1024xf32>
      %65 = vector.shape_cast %61 : vector<8x1024xf32> to vector<1x8x1024xf32>
      tpu.vector_store %arg7[%62, %c0_20, %c0_21], %65 {strides = array<i32>} : memref<1x8x1024xf32, #tpu.memory_space<vmem>>, vector<1x8x1024xf32>,
    } else {
    }
    %c0_i32_5 = arith.constant 0 : i32
    %17 = arith.cmpi eq, %arg1, %c0_i32_5 : i32
    %18 = arith.extui %17 : i1 to i32
    %c0_i32_6 = arith.constant 0 : i32
    %19 = arith.cmpi ne, %18, %c0_i32_6 : i32
    scf.if %19 {
      %c0_10 = arith.constant 0 : index
      %c0_11 = arith.constant 0 : index
      %25 = vector.load %arg6[%c0_10, %c0_11] : memref<512x128xf32, #tpu.memory_space<vmem>>, vector<512x128xf32>
      %26 = tpu.iota {dimensions = array<i32: 0>} : vector<512x1xi32>
      %27 = vector.broadcast %2 : i32 to vector<512x1xi32>
      %28 = arith.addi %27, %26 : vector<512x1xi32>
      %29 = vector.broadcast %0 : i32 to vector<512x1xi32>
      %30 = arith.cmpi slt, %28, %29 : vector<512x1xi32>
      %cst = arith.constant -1.000000e+00 : f32
      %31 = vector.shape_cast %30 : vector<512x1xi1> to vector<512x1xi1>
      %32 = vector.broadcast %31 : vector<512x1xi1> to vector<512x128xi1>
      %33 = vector.broadcast %cst : f32 to vector<512x128xf32>
      %34 = arith.select %32, %25, %33 : vector<512x128xi1>, vector<512x128xf32>
      %cst_12 = arith.constant dense<0x7F800000> : vector<512xf32>
      %35 = vector.multi_reduction <minimumf>, %34, %cst_12 [1] : vector<512x128xf32> to vector<512xf32>
      %36 = vector.shape_cast %35 : vector<512xf32> to vector<512x1xf32>
      %37 = vector.shape_cast %36 : vector<512x1xf32> to vector<1x512x1xf32>
      %cst_13 = arith.constant dense<0xFF800000> : vector<1xf32>
      %38 = vector.multi_reduction <maximumf>, %37, %cst_13 [1, 2] : vector<1x512x1xf32> to vector<1xf32>
      %39 = vector.shape_cast %38 : vector<1xf32> to vector<1x1x1xf32>
      %40 = vector.extract %39[0, 0, 0] : f32 from vector<1x1x1xf32>
      %c0_14 = arith.constant 0 : index
      %c0_15 = arith.constant 0 : index
      %41 = vector.load %arg8[%c0_14, %c0_15] : memref<1x1xf32, #tpu.memory_space<vmem>>, vector<1x1xf32>
      %42 = vector.broadcast %40 : f32 to vector<1x1xf32>
      %43 = arith.maximumf %41, %42 : vector<1x1xf32>
      %c0_16 = arith.constant 0 : index
      %c0_17 = arith.constant 0 : index
      %44 = vector.load %arg8[%c0_16, %c0_17] : memref<1x1xf32, #tpu.memory_space<vmem>>, vector<1x1xf32>
      tpu.vector_store %arg8[%c0_16, %c0_17], %43 {strides = array<i32>} : memref<1x1xf32, #tpu.memory_space<vmem>>, vector<1x1xf32>,
    } else {
    }
    %c0_i32_7 = arith.constant 0 : i32
    %20 = arith.cmpi eq, %arg0, %c0_i32_7 : i32
    %c0_i32_8 = arith.constant 0 : i32
    %21 = arith.cmpi eq, %arg1, %c0_i32_8 : i32
    %22 = arith.andi %20, %21 : i1
    %23 = arith.extui %22 : i1 to i32
    %c0_i32_9 = arith.constant 0 : i32
    %24 = arith.cmpi ne, %23, %c0_i32_9 : i32
    scf.if %24 {
      %c0_10 = arith.constant 0 : index
      %c0_11 = arith.constant 0 : index
      %25 = vector.load %arg8[%c0_10, %c0_11] : memref<1x1xf32, #tpu.memory_space<vmem>>, vector<1x1xf32>
      %c0_12 = arith.constant 0 : index
      %c0_13 = arith.constant 0 : index
      %c0_14 = arith.constant 0 : index
      %26 = vector.load %arg7[%c0_12, %c0_13, %c0_14] : memref<1x8x1024xf32, #tpu.memory_space<vmem>>, vector<1x8x1024xf32>
      %27 = vector.shape_cast %26 : vector<1x8x1024xf32> to vector<8x1024xf32>
      %cst = arith.constant dense<0x7F800000> : vector<1024xf32>
      %28 = vector.multi_reduction <minimumf>, %27, %cst [0] : vector<8x1024xf32> to vector<1024xf32>
      %29 = vector.shape_cast %28 : vector<1024xf32> to vector<1x1024xf32>
      %30 = tpu.iota {dimensions = array<i32: 1>} : vector<1x1024xi32>
      %c0_i32_15 = arith.constant 0 : i32
      %31 = vector.broadcast %c0_i32_15 : i32 to vector<1x1024xi32>
      %32 = arith.addi %31, %30 : vector<1x1024xi32>
      %33 = vector.broadcast %1 : i32 to vector<1x1024xi32>
      %34 = arith.cmpi slt, %32, %33 : vector<1x1024xi32>
      %cst_16 = arith.constant -1.000000e+00 : f32
      %35 = vector.broadcast %cst_16 : f32 to vector<1x1024xf32>
      %36 = arith.select %34, %29, %35 : vector<1x1024xi1>, vector<1x1024xf32>
      %37 = vector.shape_cast %36 : vector<1x1024xf32> to vector<1x1x1024xf32>
      %cst_17 = arith.constant dense<0xFF800000> : vector<1xf32>
      %38 = vector.multi_reduction <maximumf>, %37, %cst_17 [1, 2] : vector<1x1x1024xf32> to vector<1xf32>
      %39 = vector.shape_cast %38 : vector<1xf32> to vector<1x1x1xf32>
      %40 = vector.extract %39[0, 0, 0] : f32 from vector<1x1x1xf32>
      %41 = vector.broadcast %40 : f32 to vector<1x1xf32>
      %42 = arith.maximumf %25, %41 : vector<1x1xf32>
      %cst_18 = arith.constant 4.000000e+00 : f32
      %43 = vector.broadcast %cst_18 : f32 to vector<1x1xf32>
      %44 = arith.cmpf ole, %42, %43 : vector<1x1xf32>
      %cst_19 = arith.constant 0.000000e+00 : f32
      %45 = vector.broadcast %cst_19 : f32 to vector<1x1xf32>
      %cst_20 = arith.constant 0.000000e+00 : f32
      %46 = vector.broadcast %cst_20 : f32 to vector<1x1xf32>
      %47 = arith.maximumf %42, %46 : vector<1x1xf32>
      %48 = math.sqrt %47 : vector<1x1xf32>
      %49 = arith.select %44, %45, %48 : vector<1x1xi1>, vector<1x1xf32>
      %c0_21 = arith.constant 0 : index
      %c0_22 = arith.constant 0 : index
      %50 = vector.load %arg5[%c0_21, %c0_22] : memref<1x1xf32, #tpu.memory_space<vmem>>, vector<1x1xf32>
      tpu.vector_store %arg5[%c0_21, %c0_22], %49 {strides = array<i32>} : memref<1x1xf32, #tpu.memory_space<vmem>>, vector<1x1xf32>,
    } else {
    }
    return
  }
  func.func @transform_0(%arg0: i32, %arg1: i32, %arg2: memref<2xi32, #tpu.memory_space<smem>>) -> (i32, i32) {
    %c0_i32 = arith.constant 0 : i32
    %c0_i32_0 = arith.constant 0 : i32
    return %arg0, %c0_i32 : i32, i32
  }
  func.func @transform_1(%arg0: i32, %arg1: i32, %arg2: memref<2xi32, #tpu.memory_space<smem>>) -> (i32, i32) {
    %c0_i32 = arith.constant 0 : i32
    %c0_i32_0 = arith.constant 0 : i32
    return %c0_i32, %arg1 : i32, i32
  }
  func.func @transform_2(%arg0: i32, %arg1: i32, %arg2: memref<2xi32, #tpu.memory_space<smem>>) -> (i32, i32) {
    %c0_i32 = arith.constant 0 : i32
    %c0_i32_0 = arith.constant 0 : i32
    %c0_i32_1 = arith.constant 0 : i32
    return %c0_i32, %c0_i32_0 : i32, i32
  }
}

</mosaic_0001>

<llo_original>
// kernel: perceptual_hausdorff_loss.1
$region0: #{perceptual_hausdorff_loss.1}
  #allocation0 [shape = 'u32[]', space=smem, size = 0x4, offset = 0x4, fixed_abs, tag = 'smem constant byte address 0x4 - core index']
  #allocation1 [shape = 'u32[144,128]{1,0:T(1,128)}', space=vmem, size = 0x12000, scoped, tag = 'internal scratch']
  #allocation2 [shape = 'f32[512,128]{1,0:T(8,128)}', space=vmem, size = 0x40000, scoped, tag = 'scratch operand']
  #allocation3 [shape = 'f32[1,8,1024]{2,1,0:T(8,128)}', space=vmem, size = 0x8000, scoped, tag = 'scratch operand']
  #allocation4 [shape = 'f32[1,1]{1,0:T(1,128)}', space=vmem, size = 0x200, scoped, tag = 'scratch operand']
  #allocation5 [shape = 's32[1]{0}', space=sflag, size = 0x4, scoped, tag = 'scoped memory for perceptual_hausdorff_loss.1']
  #allocation6 [shape = 'u8[512]{0}', space=smem, size = 0x200, scoped, tag = 'prefetched SMEM operand 0']
  %s0 = inlined_call_operand.vmem [shape: s32[2], index: 0, kind: input, shape index: {}]
  %s1 = inlined_call_operand.vmem [shape: f32[512,8], index: 1, kind: input, shape index: {}]
  %s2 = inlined_call_operand.vmem [shape: f32[8,1024], index: 2, kind: input, shape index: {}]
  %s3 = inlined_call_operand.hbm [shape: f32[1,1], index: 3, kind: output, shape index: {}]
  %s4 = sld [smem:[#allocation0]]
  $region38: #{perceptual_hausdorff_loss.1} parent=0
    _
  %s6 = ssub.s32 1, %s4
  %s7 = scalar_select 0, %s6, %s4
  %s8 = sshll.u32 %s0, 4
  %s9 = int_to_ptr.vmem [resolvable:$true] %s8
  %11 = dma.vmem_to_smem %s9, 16, [#allocation6], [#allocation5]
  %12 = dma.done [#allocation5], 16
  %13 = sfence
  $region1: #{perceptual_hausdorff_loss.1} parent=0
    #allocation7 [shape = 'u8[512]{0}', space=vmem, size = 0x400, scoped, tag = 'output window, operand 0, single buffered']
    #allocation8 [shape = 's32[1]{0}', space=sflag, size = 0x4, scoped, tag = 'scoped memory for perceptual_hausdorff_loss.1']
    %14 = vsyncpa [#allocation8], 0
    // Predicated region
    $region2: #{perceptual_hausdorff_loss.1} parent=1 // pred_check
      _
    $region3: #{perceptual_hausdorff_loss.1} parent=1 // pred_check_branch
      %16 = sbr.rel (0) target = $region5
    $region4: #{perceptual_hausdorff_loss.1} parent=1 // pred_region
      _
    $region5: #{perceptual_hausdorff_loss.1} parent=1 // pred_fallthru
      _
    // Predicated region
    $region6: #{perceptual_hausdorff_loss.1} parent=1 // pred_check
      _
    $region7: #{perceptual_hausdorff_loss.1} parent=1 // pred_check_branch
      %18 = sbr.rel (0) target = $region9
    $region8: #{perceptual_hausdorff_loss.1} parent=1 // pred_region
      _
    $region9: #{perceptual_hausdorff_loss.1} parent=1 // pred_fallthru
      _
    %s19 = sld [smem:[#allocation6]]
    %s20 = sld [smem:[#allocation6 + $0x1]]
    %s21 = smul.u32 0, 512
    %s22 = smul.u32 0, 1024
    %p23 = scmp.eq.s32.totalorder 0, 0
    %p24 = scmp.eq.s32.totalorder 0, 0
    %p25 = pnand %p23, %p24
    %p26 = pneg %p25
    // Predicated region
    $region10: #{perceptual_hausdorff_loss.1} parent=1 // pred_check
      _
    $region11: #{perceptual_hausdorff_loss.1} parent=1 // pred_check_branch
      %28 = sbr.rel (%p25) target = $region13
    $region12: #{perceptual_hausdorff_loss.1} parent=1 // pred_region
      %29 = vst [vmem:[#allocation3] sm:$0xff] 1e+30
      %30 = vst [vmem:[#allocation3 + $0x8] sm:$0xff] 1e+30
      %31 = vst [vmem:[#allocation3 + $0x10] sm:$0xff] 1e+30
      %32 = vst [vmem:[#allocation3 + $0x18] sm:$0xff] 1e+30
      %33 = vst [vmem:[#allocation3 + $0x20] sm:$0xff] 1e+30
      %34 = vst [vmem:[#allocation3 + $0x28] sm:$0xff] 1e+30
      %35 = vst [vmem:[#allocation3 + $0x30] sm:$0xff] 1e+30
      %36 = vst [vmem:[#allocation3 + $0x38] sm:$0xff] 1e+30
      %vm37 = vcmask 0
      %38 = vst.msk [vmem:[#allocation4] sm:$0x1] %vm37, -1.0
    $region13: #{perceptual_hausdorff_loss.1} parent=1 // pred_fallthru
      _
    // Predicated region
    $region14: #{perceptual_hausdorff_loss.1} parent=1 // pred_check
      %p39 = pneg %p24
    $region15: #{perceptual_hausdorff_loss.1} parent=1 // pred_check_branch
      %41 = sbr.rel (%p39) target = $region17
    $region16: #{perceptual_hausdorff_loss.1} parent=1 // pred_region
      %42 = vst [vmem:[#allocation2] sm:$0xff] 1e+30
      %43 = vst [vmem:[#allocation2 + $0x8] sm:$0xff] 1e+30
      %44 = vst [vmem:[#allocation2 + $0x10] sm:$0xff] 1e+30
      %45 = vst [vmem:[#allocation2 + $0x18] sm:$0xff] 1e+30
      %46 = vst [vmem:[#allocation2 + $0x20] sm:$0xff] 1e+30
      %47 = vst [vmem:[#allocation2 + $0x28] sm:$0xff] 1e+30
      %48 = vst [vmem:[#allocation2 + $0x30] sm:$0xff] 1e+30
      %49 = vst [vmem:[#allocation2 + $0x38] sm:$0xff] 1e+30
      %50 = vst [vmem:[#allocation2 + $0x40] sm:$0xff] 1e+30
      %51 = vst [vmem:[#allocation2 + $0x48] sm:$0xff] 1e+30
      %52 = vst [vmem:[#allocation2 + $0x50] sm:$0xff] 1e+30
      %53 = vst [vmem:[#allocation2 + $0x58] sm:$0xff] 1e+30
      %54 = vst [vmem:[#allocation2 + $0x60] sm:$0xff] 1e+30
      %55 = vst [vmem:[#allocation2 + $0x68] sm:$0xff] 1e+30
      %56 = vst [vmem:[#allocation2 + $0x70] sm:$0xff] 1e+30
      %57 = vst [vmem:[#allocation2 + $0x78] sm:$0xff] 1e+30
      %58 = vst [vmem:[#allocation2 + $0x80] sm:$0xff] 1e+30
      %59 = vst [vmem:[#allocation2 + $0x88] sm:$0xff] 1e+30
      %60 = vst [vmem:[#allocation2 + $0x90] sm:$0xff] 1e+30
      %61 = vst [vmem:[#allocation2 + $0x98] sm:$0xff] 1e+30
      %62 = vst [vmem:[#allocation2 + $0xa0] sm:$0xff] 1e+30
      %63 = vst [vmem:[#allocation2 + $0xa8] sm:$0xff] 1e+30
      %64 = vst [vmem:[#allocation2 + $0xb0] sm:$0xff] 1e+30
      %65 = vst [vmem:[#allocation2 + $0xb8] sm:$0xff] 1e+30
      %66 = vst [vmem:[#allocation2 + $0xc0] sm:$0xff] 1e+30
      %67 = vst [vmem:[#allocation2 + $0xc8] sm:$0xff] 1e+30
      %68 = vst [vmem:[#allocation2 + $0xd0] sm:$0xff] 1e+30
      %69 = vst [vmem:[#allocation2 + $0xd8] sm:$0xff] 1e+30
      %70 = vst [vmem:[#allocation2 + $0xe0] sm:$0xff] 1e+30
      %71 = vst [vmem:[#allocation2 + $0xe8] sm:$0xff] 1e+30
      %72 = vst [vmem:[#allocation2 + $0xf0] sm:$0xff] 1e+30
      %73 = vst [vmem:[#allocation2 + $0xf8] sm:$0xff] 1e+30
      %74 = vst [vmem:[#allocation2 + $0x100] sm:$0xff] 1e+30
      %75 = vst [vmem:[#allocation2 + $0x108] sm:$0xff] 1e+30
      %76 = vst [vmem:[#allocation2 + $0x110] sm:$0xff] 1e+30
      %77 = vst [vmem:[#allocation2 + $0x118] sm:$0xff] 1e+30
      %78 = vst [vmem:[#allocation2 + $0x120] sm:$0xff] 1e+30
      %79 = vst [vmem:[#allocation2 + $0x128] sm:$0xff] 1e+30
      %80 = vst [vmem:[#allocation2 + $0x130] sm:$0xff] 1e+30
      %81 = vst [vmem:[#allocation2 + $0x138] sm:$0xff] 1e+30
      %82 = vst [vmem:[#allocation2 + $0x140] sm:$0xff] 1e+30
      %83 = vst [vmem:[#allocation2 + $0x148] sm:$0xff] 1e+30
      %84 = vst [vmem:[#allocation2 + $0x150] sm:$0xff] 1e+30
      %85 = vst [vmem:[#allocation2 + $0x158] sm:$0xff] 1e+30
      %86 = vst [vmem:[#allocation2 + $0x160] sm:$0xff] 1e+30
      %87 = vst [vmem:[#allocation2 + $0x168] sm:$0xff] 1e+30
      %88 = vst [vmem:[#allocation2 + $0x170] sm:$0xff] 1e+30
      %89 = vst [vmem:[#allocation2 + $0x178] sm:$0xff] 1e+30
      %90 = vst [vmem:[#allocation2 + $0x180] sm:$0xff] 1e+30
      %91 = vst [vmem:[#allocation2 + $0x188] sm:$0xff] 1e+30
      %92 = vst [vmem:[#allocation2 + $0x190] sm:$0xff] 1e+30
      %93 = vst [vmem:[#allocation2 + $0x198] sm:$0xff] 1e+30
      %94 = vst [vmem:[#allocation2 + $0x1a0] sm:$0xff] 1e+30
      %95 = vst [vmem:[#allocation2 + $0x1a8] sm:$0xff] 1e+30
      %96 = vst [vmem:[#allocation2 + $0x1b0] sm:$0xff] 1e+30
      %97 = vst [vmem:[#allocation2 + $0x1b8] sm:$0xff] 1e+30
      %98 = vst [vmem:[#allocation2 + $0x1c0] sm:$0xff] 1e+30
      %99 = vst [vmem:[#allocation2 + $0x1c8] sm:$0xff] 1e+30
      %100 = vst [vmem:[#allocation2 + $0x1d0] sm:$0xff] 1e+30
      %101 = vst [vmem:[#allocation2 + $0x1d8] sm:$0xff] 1e+30
      %102 = vst [vmem:[#allocation2 + $0x1e0] sm:$0xff] 1e+30
      %103 = vst [vmem:[#allocation2 + $0x1e8] sm:$0xff] 1e+30
      %104 = vst [vmem:[#allocation2 + $0x1f0] sm:$0xff] 1e+30
      %105 = vst [vmem:[#allocation2 + $0x1f8] sm:$0xff] 1e+30
    $region17: #{perceptual_hausdorff_loss.1} parent=1 // pred_fallthru
      _
    %p106 = scmp.lt.s32.totalorder %s21, %s19
    %p107 = scmp.lt.s32.totalorder %s22, %s20
    %p108 = pnand %p106, %p107
    %p109 = pneg %p108
    // Predicated region
    $region18: #{perceptual_hausdorff_loss.1} parent=1 // pred_check
      _
    $region19: #{perceptual_hausdorff_loss.1} parent=1 // pred_check_branch
      %111 = sbr.rel (%p108) target = $region21
    $region20: #{perceptual_hausdorff_loss.1} parent=1 // pred_region
      %v112 = vld [vmem:[%s1] sm:$0xff]
      %v113 = vld [vmem:[%s1 + $0x8] sm:$0xff]
      %v114 = vld [vmem:[%s1 + $0x10] sm:$0xff]
      %v115 = vld [vmem:[%s1 + $0x18] sm:$0xff]
      %v116 = vld [vmem:[%s1 + $0x20] sm:$0xff]
      %v117 = vld [vmem:[%s1 + $0x28] sm:$0xff]
      %v118 = vld [vmem:[%s1 + $0x30] sm:$0xff]
      %v119 = vld [vmem:[%s1 + $0x38] sm:$0xff]
      %v120 = vld [vmem:[%s1 + $0x40] sm:$0xff]
      %v121 = vld [vmem:[%s1 + $0x48] sm:$0xff]
      %v122 = vld [vmem:[%s1 + $0x50] sm:$0xff]
      %v123 = vld [vmem:[%s1 + $0x58] sm:$0xff]
      %v124 = vld [vmem:[%s1 + $0x60] sm:$0xff]
      %v125 = vld [vmem:[%s1 + $0x68] sm:$0xff]
      %v126 = vld [vmem:[%s1 + $0x70] sm:$0xff]
      %v127 = vld [vmem:[%s1 + $0x78] sm:$0xff]
      %v128 = vld [vmem:[%s1 + $0x80] sm:$0xff]
      %v129 = vld [vmem:[%s1 + $0x88] sm:$0xff]
      %v130 = vld [vmem:[%s1 + $0x90] sm:$0xff]
      %v131 = vld [vmem:[%s1 + $0x98] sm:$0xff]
      %v132 = vld [vmem:[%s1 + $0xa0] sm:$0xff]
      %v133 = vld [vmem:[%s1 + $0xa8] sm:$0xff]
      %v134 = vld [vmem:[%s1 + $0xb0] sm:$0xff]
      %v135 = vld [vmem:[%s1 + $0xb8] sm:$0xff]
      %v136 = vld [vmem:[%s1 + $0xc0] sm:$0xff]
      %v137 = vld [vmem:[%s1 + $0xc8] sm:$0xff]
      %v138 = vld [vmem:[%s1 + $0xd0] sm:$0xff]
      %v139 = vld [vmem:[%s1 + $0xd8] sm:$0xff]
      %v140 = vld [vmem:[%s1 + $0xe0] sm:$0xff]
      %v141 = vld [vmem:[%s1 + $0xe8] sm:$0xff]
      %v142 = vld [vmem:[%s1 + $0xf0] sm:$0xff]
      %v143 = vld [vmem:[%s1 + $0xf8] sm:$0xff]
      %v144 = vld [vmem:[%s1 + $0x100] sm:$0xff]
      %v145 = vld [vmem:[%s1 + $0x108] sm:$0xff]
      %v146 = vld [vmem:[%s1 + $0x110] sm:$0xff]
      %v147 = vld [vmem:[%s1 + $0x118] sm:$0xff]
      %v148 = vld [vmem:[%s1 + $0x120] sm:$0xff]
      %v149 = vld [vmem:[%s1 + $0x128] sm:$0xff]
      %v150 = vld [vmem:[%s1 + $0x130] sm:$0xff]
      %v151 = vld [vmem:[%s1 + $0x138] sm:$0xff]
      %v152 = vld [vmem:[%s1 + $0x140] sm:$0xff]
      %v153 = vld [vmem:[%s1 + $0x148] sm:$0xff]
      %v154 = vld [vmem:[%s1 + $0x150] sm:$0xff]
      %v155 = vld [vmem:[%s1 + $0x158] sm:$0xff]
      %v156 = vld [vmem:[%s1 + $0x160] sm:$0xff]
      %v157 = vld [vmem:[%s1 + $0x168] sm:$0xff]
      %v158 = vld [vmem:[%s1 + $0x170] sm:$0xff]
      %v159 = vld [vmem:[%s1 + $0x178] sm:$0xff]
      %v160 = vld [vmem:[%s1 + $0x180] sm:$0xff]
      %v161 = vld [vmem:[%s1 + $0x188] sm:$0xff]
      %v162 = vld [vmem:[%s1 + $0x190] sm:$0xff]
      %v163 = vld [vmem:[%s1 + $0x198] sm:$0xff]
      %v164 = vld [vmem:[%s1 + $0x1a0] sm:$0xff]
      %v165 = vld [vmem:[%s1 + $0x1a8] sm:$0xff]
      %v166 = vld [vmem:[%s1 + $0x1b0] sm:$0xff]
      %v167 = vld [vmem:[%s1 + $0x1b8] sm:$0xff]
      %v168 = vld [vmem:[%s1 + $0x1c0] sm:$0xff]
      %v169 = vld [vmem:[%s1 + $0x1c8] sm:$0xff]
      %v170 = vld [vmem:[%s1 + $0x1d0] sm:$0xff]
      %v171 = vld [vmem:[%s1 + $0x1d8] sm:$0xff]
      %v172 = vld [vmem:[%s1 + $0x1e0] sm:$0xff]
      %v173 = vld [vmem:[%s1 + $0x1e8] sm:$0xff]
      %v174 = vld [vmem:[%s1 + $0x1f0] sm:$0xff]
      %v175 = vld [vmem:[%s1 + $0x1f8] sm:$0xff]
      %v176 = vld [vmem:[%s2] sm:$0xff]
      %v177 = vld [vmem:[%s2 + $0x8] sm:$0xff]
      %v178 = vld [vmem:[%s2 + $0x10] sm:$0xff]
      %v179 = vld [vmem:[%s2 + $0x18] sm:$0xff]
      %v180 = vld [vmem:[%s2 + $0x20] sm:$0xff]
      %v181 = vld [vmem:[%s2 + $0x28] sm:$0xff]
      %v182 = vld [vmem:[%s2 + $0x30] sm:$0xff]
      %v183 = vld [vmem:[%s2 + $0x38] sm:$0xff]
      %vm184 = vcmask 64512
      %v186 = vsel %vm184, %v112, 0
      %v189 = vsel %vm184, %v113, 0
      %v192 = vsel %vm184, %v114, 0
      %v195 = vsel %vm184, %v115, 0
      %v198 = vsel %vm184, %v116, 0
      %v201 = vsel %vm184, %v117, 0
      %v204 = vsel %vm184, %v118, 0
      %v207 = vsel %vm184, %v119, 0
      %v210 = vsel %vm184, %v120, 0
      %v213 = vsel %vm184, %v121, 0
      %v216 = vsel %vm184, %v122, 0
      %v219 = vsel %vm184, %v123, 0
      %v222 = vsel %vm184, %v124, 0
      %v225 = vsel %vm184, %v125, 0
      %v228 = vsel %vm184, %v126, 0
      %v231 = vsel %vm184, %v127, 0
      %v234 = vsel %vm184, %v128, 0
      %v237 = vsel %vm184, %v129, 0
      %v240 = vsel %vm184, %v130, 0
      %v243 = vsel %vm184, %v131, 0
      %v246 = vsel %vm184, %v132, 0
      %v249 = vsel %vm184, %v133, 0
      %v252 = vsel %vm184, %v134, 0
      %v255 = vsel %vm184, %v135, 0
      %v258 = vsel %vm184, %v136, 0
      %v261 = vsel %vm184, %v137, 0
      %v264 = vsel %vm184, %v138, 0
      %v267 = vsel %vm184, %v139, 0
      %v270 = vsel %vm184, %v140, 0
      %v273 = vsel %vm184, %v141, 0
      %v276 = vsel %vm184, %v142, 0
      %v279 = vsel %vm184, %v143, 0
      %v282 = vsel %vm184, %v144, 0
      %v285 = vsel %vm184, %v145, 0
      %v288 = vsel %vm184, %v146, 0
      %v291 = vsel %vm184, %v147, 0
      %v294 = vsel %vm184, %v148, 0
      %v297 = vsel %vm184, %v149, 0
      %v300 = vsel %vm184, %v150, 0
      %v303 = vsel %vm184, %v151, 0
      %v306 = vsel %vm184, %v152, 0
      %v309 = vsel %vm184, %v153, 0
      %v312 = vsel %vm184, %v154, 0
      %v315 = vsel %vm184, %v155, 0
      %v318 = vsel %vm184, %v156, 0
      %v321 = vsel %vm184, %v157, 0
      %v324 = vsel %vm184, %v158, 0
      %v327 = vsel %vm184, %v159, 0
      %v330 = vsel %vm184, %v160, 0
      %v333 = vsel %vm184, %v161, 0
      %v336 = vsel %vm184, %v162, 0
      %v339 = vsel %vm184, %v163, 0
      %v342 = vsel %vm184, %v164, 0
      %v345 = vsel %vm184, %v165, 0
      %v348 = vsel %vm184, %v166, 0
      %v351 = vsel %vm184, %v167, 0
      %v354 = vsel %vm184, %v168, 0
      %v357 = vsel %vm184, %v169, 0
      %v360 = vsel %vm184, %v170, 0
      %v363 = vsel %vm184, %v171, 0
      %v366 = vsel %vm184, %v172, 0
      %v369 = vsel %vm184, %v173, 0
      %v372 = vsel %vm184, %v174, 0
      %v375 = vsel %vm184, %v175, 0
      %377 = vmatprep.subr.mxu0 %v177
      %378 = vmatpush1.msra.mxu0 %v176
      %379 = vmatprep.subr.mxu0 0.0
      %380 = vmatpush1.msra.mxu0 0.0
      %381 = vmatprep.subr.mxu0 0.0
      %382 = vmatpush1.msra.mxu0 0.0
      %383 = vmatprep.subr.mxu0 0.0
      %384 = vmatpush1.msra.mxu0 0.0
      %385 = vmatprep.subr.mxu0 0.0
      %386 = vmatpush1.msra.mxu0 0.0
      %387 = vmatprep.subr.mxu0 0.0
      %388 = vmatpush1.msra.mxu0 0.0
      %389 = vmatprep.subr.mxu0 0.0
      %390 = vmatpush1.msra.mxu0 0.0
      %391 = vmatprep.subr.mxu0 0.0
      %392 = vmatpush1.msra.mxu0 0.0
      %393 = vmatprep.subr.mxu0 0.0
      %394 = vmatpush1.msra.mxu0 0.0
      %395 = vmatprep.subr.mxu0 0.0
      %396 = vmatpush1.msra.mxu0 0.0
      %397 = vmatprep.subr.mxu0 0.0
      %398 = vmatpush1.msra.mxu0 0.0
      %399 = vmatprep.subr.mxu0 0.0
      %400 = vmatpush1.msra.mxu0 0.0
      %401 = vmatprep.subr.mxu0 0.0
      %402 = vmatpush1.msra.mxu0 0.0
      %403 = vmatprep.subr.mxu0 0.0
      %404 = vmatpush1.msra.mxu0 0.0
      %405 = vmatprep.subr.mxu0 0.0
      %406 = vmatpush1.msra.mxu0 0.0
      %407 = vmatprep.subr.mxu0 0.0
      %408 = vmatpush1.msra.mxu0 0.0
      %409 = vmatprep.subr.mxu0 0.0
      %410 = vmatpush1.msra.mxu0 0.0
      %411 = vmatprep.subr.mxu0 0.0
      %412 = vmatpush1.msra.mxu0 0.0
      %413 = vmatprep.subr.mxu0 0.0
      %414 = vmatpush1.msra.mxu0 0.0
      %415 = vmatprep.subr.mxu0 0.0
      %416 = vmatpush1.msra.mxu0 0.0
      %417 = vmatprep.subr.mxu0 0.0
      %418 = vmatpush1.msra.mxu0 0.0
      %419 = vmatprep.subr.mxu0 0.0
      %420 = vmatpush1.msra.mxu0 0.0
      %421 = vmatprep.subr.mxu0 0.0
      %422 = vmatpush1.msra.mxu0 0.0
      %423 = vmatprep.subr.mxu0 0.0
      %424 = vmatpush1.msra.mxu0 0.0
      %425 = vmatprep.subr.mxu0 0.0
      %426 = vmatpush1.msra.mxu0 0.0
      %427 = vmatprep.subr.mxu0 0.0
      %428 = vmatpush1.msra.mxu0 0.0
      %429 = vmatprep.subr.mxu0 0.0
      %430 = vmatpush1.msra.mxu0 0.0
      %431 = vmatprep.subr.mxu0 0.0
      %432 = vmatpush1.msra.mxu0 0.0
      %433 = vmatprep.subr.mxu0 0.0
      %434 = vmatpush1.msra.mxu0 0.0
      %435 = vmatprep.subr.mxu0 0.0
      %436 = vmatpush1.msra.mxu0 0.0
      %437 = vmatprep.subr.mxu0 0.0
      %438 = vmatpush1.msra.mxu0 0.0
      %439 = vmatprep.subr.mxu0 0.0
      %440 = vmatpush1.msra.mxu0 0.0
      %441 = vmatprep.mubr.f32.mxu0 0.0
      %442 = vmatmul.mubr.f32.gmra.mrb[0].mxu0 %v186
      %v443 = vpop.f32.mrb[0].mxu0
      %v444 = vadd.f32 0.0, %v443
      %v445 = vpop.f32.mrb[0].mxu0
      %v446 = vadd.f32 0.0, %v445
      %447 = vmatprep.mubr.f32.mxu0 0.0
      %448 = vmatmul.mubr.f32.gmra.mrb[0].mxu0 %v189
      %v449 = vpop.f32.mrb[0].mxu0
      %v450 = vadd.f32 0.0, %v449
      %v451 = vpop.f32.mrb[0].mxu0
      %v452 = vadd.f32 0.0, %v451
      %453 = vmatprep.mubr.f32.mxu0 0.0
      %454 = vmatmul.mubr.f32.gmra.mrb[0].mxu0 %v192
      %v455 = vpop.f32.mrb[0].mxu0
      %v456 = vadd.f32 0.0, %v455
      %v457 = vpop.f32.mrb[0].mxu0
      %v458 = vadd.f32 0.0, %v457
      %459 = vmatprep.mubr.f32.mxu0 0.0
      %460 = vmatmul.mubr.f32.gmra.mrb[0].mxu0 %v195
      %v461 = vpop.f32.mrb[0].mxu0
      %v462 = vadd.f32 0.0, %v461
      %v463 = vpop.f32.mrb[0].mxu0
      %v464 = vadd.f32 0.0, %v463
      %465 = vmatprep.mubr.f32.mxu0 0.0
      %466 = vmatmul.mubr.f32.gmra.mrb[0].mxu0 %v198
      %v467 = vpop.f32.mrb[0].mxu0
      %v468 = vadd.f32 0.0, %v467
      %v469 = vpop.f32.mrb[0].mxu0
      %v470 = vadd.f32 0.0, %v469
      %471 = vmatprep.mubr.f32.mxu0 0.0
      %472 = vmatmul.mubr.f32.gmra.mrb[0].mxu0 %v201
      %v473 = vpop.f32.mrb[0].mxu0
      %v474 = vadd.f32 0.0, %v473
      %v475 = vpop.f32.mrb[0].mxu0
      %v476 = vadd.f32 0.0, %v475
      %477 = vmatprep.mubr.f32.mxu0 0.0
      %478 = vmatmul.mubr.f32.gmra.mrb[0].mxu0 %v204
      %v479 = vpop.f32.mrb[0].mxu0
      %v480 = vadd.f32 0.0, %v479
      %v481 = vpop.f32.mrb[0].mxu0
      %v482 = vadd.f32 0.0, %v481
      %483 = vmatprep.mubr.f32.mxu0 0.0
      %484 = vmatmul.mubr.f32.gmra.mrb[0].mxu0 %v207
      %v485 = vpop.f32.mrb[0].mxu0
      %v486 = vadd.f32 0.0, %v485
      %v487 = vpop.f32.mrb[0].mxu0
      %v488 = vadd.f32 0.0, %v487
      %489 = vmatprep.mubr.f32.mxu0 0.0
      %490 = vmatmul.mubr.f32.gmra.mrb[0].mxu0 %v210
      %v491 = vpop.f32.mrb[0].mxu0
      %v492 = vadd.f32 0.0, %v491
      %v493 = vpop.f32.mrb[0].mxu0
      %v494 = vadd.f32 0.0, %v493
      %495 = vmatprep.mubr.f32.mxu0 0.0
      %496 = vmatmul.mubr.f32.gmra.mrb[0].mxu0 %v213
      %v497 = vpop.f32.mrb[0].mxu0
      %v498 = vadd.f32 0.0, %v497
      %v499 = vpop.f32.mrb[0].mxu0
      %v500 = vadd.f32 0.0, %v499
      %501 = vmatprep.mubr.f32.mxu0 0.0
      %502 = vmatmul.mubr.f32.gmra.mrb[0].mxu0 %v216
      %v503 = vpop.f32.mrb[0].mxu0
      %v504 = vadd.f32 0.0, %v503
      %v505 = vpop.f32.mrb[0].mxu0
      %v506 = vadd.f32 0.0, %v505
      %507 = vmatprep.mubr.f32.mxu0 0.0
      %508 = vmatmul.mubr.f32.gmra.mrb[0].mxu0 %v219
      %v509 = vpop.f32.mrb[0].mxu0
      %v510 = vadd.f32 0.0, %v509
      %v511 = vpop.f32.mrb[0].mxu0
      %v512 = vadd.f32 0.0, %v511
      %513 = vmatprep.mubr.f32.mxu0 0.0
      %514 = vmatmul.mubr.f32.gmra.mrb[0].mxu0 %v222
      %v515 = vpop.f32.mrb[0].mxu0
      %v516 = vadd.f32 0.0, %v515
      %v517 = vpop.f32.mrb[0].mxu0
      %v518 = vadd.f32 0.0, %v517
      %519 = vmatprep.mubr.f32.mxu0 0.0
      %520 = vmatmul.mubr.f32.gmra.mrb[0].mxu0 %v225
      %v521 = vpop.f32.mrb[0].mxu0
      %v522 = vadd.f32 0.0, %v521
      %v523 = vpop.f32.mrb[0].mxu0
      %v524 = vadd.f32 0.0, %v523
      %525 = vmatprep.mubr.f32.mxu0 0.0
      %526 = vmatmul.mubr.f32.gmra.mrb[0].mxu0 %v228
      %v527 = vpop.f32.mrb[0].mxu0
      %v528 = vadd.f32 0.0, %v527
      %v529 = vpop.f32.mrb[0].mxu0
      %v530 = vadd.f32 0.0, %v529
      %531 = vmatprep.mubr.f32.mxu0 0.0
      %532 = vmatmul.mubr.f32.gmra.mrb[0].mxu0 %v231
      %v533 = vpop.f32.mrb[0].mxu0
      %v534 = vadd.f32 0.0, %v533
      %v535 = vpop.f32.mrb[0].mxu0
      %v536 = vadd.f32 0.0, %v535
      %537 = vmatprep.mubr.f32.mxu0 0.0
      %538 = vmatmul.mubr.f32.gmra.mrb[0].mxu0 %v234
      %v539 = vpop.f32.mrb[0].mxu0
      %v540 = vadd.f32 0.0, %v539
      %v541 = vpop.f32.mrb[0].mxu0
      %v542 = vadd.f32 0.0, %v541
      %543 = vmatprep.mubr.f32.mxu0 0.0
      %544 = vmatmul.mubr.f32.gmra.mrb[0].mxu0 %v237
      %v545 = vpop.f32.mrb[0].mxu0
      %v546 = vadd.f32 0.0, %v545
      %v547 = vpop.f32.mrb[0].mxu0
      %v548 = vadd.f32 0.0, %v547
      %549 = vmatprep.mubr.f32.mxu0 0.0
      %550 = vmatmul.mubr.f32.gmra.mrb[0].mxu0 %v240
      %v551 = vpop.f32.mrb[0].mxu0
      %v552 = vadd.f32 0.0, %v551
      %v553 = vpop.f32.mrb[0].mxu0
      %v554 = vadd.f32 0.0, %v553
      %555 = vmatprep.mubr.f32.mxu0 0.0
      %556 = vmatmul.mubr.f32.gmra.mrb[0].mxu0 %v243
      %v557 = vpop.f32.mrb[0].mxu0
      %v558 = vadd.f32 0.0, %v557
      %v559 = vpop.f32.mrb[0].mxu0
      %v560 = vadd.f32 0.0, %v559
      %561 = vmatprep.mubr.f32.mxu0 0.0
      %562 = vmatmul.mubr.f32.gmra.mrb[0].mxu0 %v246
      %v563 = vpop.f32.mrb[0].mxu0
      %v564 = vadd.f32 0.0, %v563
      %v565 = vpop.f32.mrb[0].mxu0
      %v566 = vadd.f32 0.0, %v565
      %567 = vmatprep.mubr.f32.mxu0 0.0
      %568 = vmatmul.mubr.f32.gmra.mrb[0].mxu0 %v249
      %v569 = vpop.f32.mrb[0].mxu0
      %v570 = vadd.f32 0.0, %v569
      %v571 = vpop.f32.mrb[0].mxu0
      %v572 = vadd.f32 0.0, %v571
      %573 = vmatprep.mubr.f32.mxu0 0.0
      %574 = vmatmul.mubr.f32.gmra.mrb[0].mxu0 %v252
      %v575 = vpop.f32.mrb[0].mxu0
      %v576 = vadd.f32 0.0, %v575
      %v577 = vpop.f32.mrb[0].mxu0
      %v578 = vadd.f32 0.0, %v577
      %579 = vmatprep.mubr.f32.mxu0 0.0
      %580 = vmatmul.mubr.f32.gmra.mrb[0].mxu0 %v255
      %v581 = vpop.f32.mrb[0].mxu0
      %v582 = vadd.f32 0.0, %v581
      %v583 = vpop.f32.mrb[0].mxu0
      %v584 = vadd.f32 0.0, %v583
      %585 = vmatprep.mubr.f32.mxu0 0.0
      %586 = vmatmul.mubr.f32.gmra.mrb[0].mxu0 %v258
      %v587 = vpop.f32.mrb[0].mxu0
      %v588 = vadd.f32 0.0, %v587
      %v589 = vpop.f32.mrb[0].mxu0
      %v590 = vadd.f32 0.0, %v589
      %591 = vmatprep.mubr.f32.mxu0 0.0
      %592 = vmatmul.mubr.f32.gmra.mrb[0].mxu0 %v261
      %v593 = vpop.f32.mrb[0].mxu0
      %v594 = vadd.f32 0.0, %v593
      %v595 = vpop.f32.mrb[0].mxu0
      %v596 = vadd.f32 0.0, %v595
      %597 = vmatprep.mubr.f32.mxu0 0.0
      %598 = vmatmul.mubr.f32.gmra.mrb[0].mxu0 %v264
      %v599 = vpop.f32.mrb[0].mxu0
      %v600 = vadd.f32 0.0, %v599
      %v601 = vpop.f32.mrb[0].mxu0
      %v602 = vadd.f32 0.0, %v601
      %603 = vmatprep.mubr.f32.mxu0 0.0
      %604 = vmatmul.mubr.f32.gmra.mrb[0].mxu0 %v267
      %v605 = vpop.f32.mrb[0].mxu0
      %v606 = vadd.f32 0.0, %v605
      %v607 = vpop.f32.mrb[0].mxu0
      %v608 = vadd.f32 0.0, %v607
      %609 = vmatprep.mubr.f32.mxu0 0.0
      %610 = vmatmul.mubr.f32.gmra.mrb[0].mxu0 %v270
      %v611 = vpop.f32.mrb[0].mxu0
      %v612 = vadd.f32 0.0, %v611
      %v613 = vpop.f32.mrb[0].mxu0
      %v614 = vadd.f32 0.0, %v613
      %615 = vmatprep.mubr.f32.mxu0 0.0
      %616 = vmatmul.mubr.f32.gmra.mrb[0].mxu0 %v273
      %v617 = vpop.f32.mrb[0].mxu0
      %v618 = vadd.f32 0.0, %v617
      %v619 = vpop.f32.mrb[0].mxu0
      %v620 = vadd.f32 0.0, %v619
      %621 = vmatprep.mubr.f32.mxu0 0.0
      %622 = vmatmul.mubr.f32.gmra.mrb[0].mxu0 %v276
      %v623 = vpop.f32.mrb[0].mxu0
      %v624 = vadd.f32 0.0, %v623
      %v625 = vpop.f32.mrb[0].mxu0
      %v626 = vadd.f32 0.0, %v625
      %627 = vmatprep.mubr.f32.mxu0 0.0
      %628 = vmatmul.mubr.f32.gmra.mrb[0].mxu0 %v279
      %v629 = vpop.f32.mrb[0].mxu0
      %v630 = vadd.f32 0.0, %v629
      %v631 = vpop.f32.mrb[0].mxu0
      %v632 = vadd.f32 0.0, %v631
      %633 = vmatprep.mubr.f32.mxu0 0.0
      %634 = vmatmul.mubr.f32.gmra.mrb[0].mxu0 %v282
      %v635 = vpop.f32.mrb[0].mxu0
      %v636 = vadd.f32 0.0, %v635
      %v637 = vpop.f32.mrb[0].mxu0
      %v638 = vadd.f32 0.0, %v637
      %639 = vmatprep.mubr.f32.mxu0 0.0
      %640 = vmatmul.mubr.f32.gmra.mrb[0].mxu0 %v285
      %v641 = vpop.f32.mrb[0].mxu0
      %v642 = vadd.f32 0.0, %v641
      %v643 = vpop.f32.mrb[0].mxu0
      %v644 = vadd.f32 0.0, %v643
      %645 = vmatprep.mubr.f32.mxu0 0.0
      %646 = vmatmul.mubr.f32.gmra.mrb[0].mxu0 %v288
      %v647 = vpop.f32.mrb[0].mxu0
      %v648 = vadd.f32 0.0, %v647
      %v649 = vpop.f32.mrb[0].mxu0
      %v650 = vadd.f32 0.0, %v649
      %651 = vmatprep.mubr.f32.mxu0 0.0
      %652 = vmatmul.mubr.f32.gmra.mrb[0].mxu0 %v291
      %v653 = vpop.f32.mrb[0].mxu0
      %v654 = vadd.f32 0.0, %v653
      %v655 = vpop.f32.mrb[0].mxu0
      %v656 = vadd.f32 0.0, %v655
      %657 = vmatprep.mubr.f32.mxu0 0.0
      %658 = vmatmul.mubr.f32.gmra.mrb[0].mxu0 %v294
      %v659 = vpop.f32.mrb[0].mxu0
      %v660 = vadd.f32 0.0, %v659
      %v661 = vpop.f32.mrb[0].mxu0
      %v662 = vadd.f32 0.0, %v661
      %663 = vmatprep.mubr.f32.mxu0 0.0
      %664 = vmatmul.mubr.f32.gmra.mrb[0].mxu0 %v297
      %v665 = vpop.f32.mrb[0].mxu0
      %v666 = vadd.f32 0.0, %v665
      %v667 = vpop.f32.mrb[0].mxu0
      %v668 = vadd.f32 0.0, %v667
      %669 = vmatprep.mubr.f32.mxu0 0.0
      %670 = vmatmul.mubr.f32.gmra.mrb[0].mxu0 %v300
      %v671 = vpop.f32.mrb[0].mxu0
      %v672 = vadd.f32 0.0, %v671
      %v673 = vpop.f32.mrb[0].mxu0
      %v674 = vadd.f32 0.0, %v673
      %675 = vmatprep.mubr.f32.mxu0 0.0
      %676 = vmatmul.mubr.f32.gmra.mrb[0].mxu0 %v303
      %v677 = vpop.f32.mrb[0].mxu0
      %v678 = vadd.f32 0.0, %v677
      %v679 = vpop.f32.mrb[0].mxu0
      %v680 = vadd.f32 0.0, %v679
      %681 = vmatprep.mubr.f32.mxu0 0.0
      %682 = vmatmul.mubr.f32.gmra.mrb[0].mxu0 %v306
      %v683 = vpop.f32.mrb[0].mxu0
      %v684 = vadd.f32 0.0, %v683
      %v685 = vpop.f32.mrb[0].mxu0
      %v686 = vadd.f32 0.0, %v685
      %687 = vmatprep.mubr.f32.mxu0 0.0
      %688 = vmatmul.mubr.f32.gmra.mrb[0].mxu0 %v309
      %v689 = vpop.f32.mrb[0].mxu0
      %v690 = vadd.f32 0.0, %v689
      %v691 = vpop.f32.mrb[0].mxu0
      %v692 = vadd.f32 0.0, %v691
      %693 = vmatprep.mubr.f32.mxu0 0.0
      %694 = vmatmul.mubr.f32.gmra.mrb[0].mxu0 %v312
      %v695 = vpop.f32.mrb[0].mxu0
      %v696 = vadd.f32 0.0, %v695
      %v697 = vpop.f32.mrb[0].mxu0
      %v698 = vadd.f32 0.0, %v697
      %699 = vmatprep.mubr.f32.mxu0 0.0
      %700 = vmatmul.mubr.f32.gmra.mrb[0].mxu0 %v315
      %v701 = vpop.f32.mrb[0].mxu0
      %v702 = vadd.f32 0.0, %v701
      %v703 = vpop.f32.mrb[0].mxu0
      %v704 = vadd.f32 0.0, %v703
      %705 = vmatprep.mubr.f32.mxu0 0.0
      %706 = vmatmul.mubr.f32.gmra.mrb[0].mxu0 %v318
      %v707 = vpop.f32.mrb[0].mxu0
      %v708 = vadd.f32 0.0, %v707
      %v709 = vpop.f32.mrb[0].mxu0
      %v710 = vadd.f32 0.0, %v709
      %711 = vmatprep.mubr.f32.mxu0 0.0
      %712 = vmatmul.mubr.f32.gmra.mrb[0].mxu0 %v321
      %v713 = vpop.f32.mrb[0].mxu0
      %v714 = vadd.f32 0.0, %v713
      %v715 = vpop.f32.mrb[0].mxu0
      %v716 = vadd.f32 0.0, %v715
      %717 = vmatprep.mubr.f32.mxu0 0.0
      %718 = vmatmul.mubr.f32.gmra.mrb[0].mxu0 %v324
      %v719 = vpop.f32.mrb[0].mxu0
      %v720 = vadd.f32 0.0, %v719
      %v721 = vpop.f32.mrb[0].mxu0
      %v722 = vadd.f32 0.0, %v721
      %723 = vmatprep.mubr.f32.mxu0 0.0
      %724 = vmatmul.mubr.f32.gmra.mrb[0].mxu0 %v327
      %v725 = vpop.f32.mrb[0].mxu0
      %v726 = vadd.f32 0.0, %v725
      %v727 = vpop.f32.mrb[0].mxu0
      %v728 = vadd.f32 0.0, %v727
      %729 = vmatprep.mubr.f32.mxu0 0.0
      %730 = vmatmul.mubr.f32.gmra.mrb[0].mxu0 %v330
      %v731 = vpop.f32.mrb[0].mxu0
      %v732 = vadd.f32 0.0, %v731
      %v733 = vpop.f32.mrb[0].mxu0
      %v734 = vadd.f32 0.0, %v733
      %735 = vmatprep.mubr.f32.mxu0 0.0
      %736 = vmatmul.mubr.f32.gmra.mrb[0].mxu0 %v333
      %v737 = vpop.f32.mrb[0].mxu0
      %v738 = vadd.f32 0.0, %v737
      %v739 = vpop.f32.mrb[0].mxu0
      %v740 = vadd.f32 0.0, %v739
      %741 = vmatprep.mubr.f32.mxu0 0.0
      %742 = vmatmul.mubr.f32.gmra.mrb[0].mxu0 %v336
      %v743 = vpop.f32.mrb[0].mxu0
      %v744 = vadd.f32 0.0, %v743
      %v745 = vpop.f32.mrb[0].mxu0
      %v746 = vadd.f32 0.0, %v745
      %747 = vmatprep.mubr.f32.mxu0 0.0
      %748 = vmatmul.mubr.f32.gmra.mrb[0].mxu0 %v339
      %v749 = vpop.f32.mrb[0].mxu0
      %v750 = vadd.f32 0.0, %v749
      %v751 = vpop.f32.mrb[0].mxu0
      %v752 = vadd.f32 0.0, %v751
      %753 = vmatprep.mubr.f32.mxu0 0.0
      %754 = vmatmul.mubr.f32.gmra.mrb[0].mxu0 %v342
      %v755 = vpop.f32.mrb[0].mxu0
      %v756 = vadd.f32 0.0, %v755
      %v757 = vpop.f32.mrb[0].mxu0
      %v758 = vadd.f32 0.0, %v757
      %759 = vmatprep.mubr.f32.mxu0 0.0
      %760 = vmatmul.mubr.f32.gmra.mrb[0].mxu0 %v345
      %v761 = vpop.f32.mrb[0].mxu0
      %v762 = vadd.f32 0.0, %v761
      %v763 = vpop.f32.mrb[0].mxu0
      %v764 = vadd.f32 0.0, %v763
      %765 = vmatprep.mubr.f32.mxu0 0.0
      %766 = vmatmul.mubr.f32.gmra.mrb[0].mxu0 %v348
      %v767 = vpop.f32.mrb[0].mxu0
      %v768 = vadd.f32 0.0, %v767
      %v769 = vpop.f32.mrb[0].mxu0
      %v770 = vadd.f32 0.0, %v769
      %771 = vmatprep.mubr.f32.mxu0 0.0
      %772 = vmatmul.mubr.f32.gmra.mrb[0].mxu0 %v351
      %v773 = vpop.f32.mrb[0].mxu0
      %v774 = vadd.f32 0.0, %v773
      %v775 = vpop.f32.mrb[0].mxu0
      %v776 = vadd.f32 0.0, %v775
      %777 = vmatprep.mubr.f32.mxu0 0.0
      %778 = vmatmul.mubr.f32.gmra.mrb[0].mxu0 %v354
      %v779 = vpop.f32.mrb[0].mxu0
      %v780 = vadd.f32 0.0, %v779
      %v781 = vpop.f32.mrb[0].mxu0
      %v782 = vadd.f32 0.0, %v781
      %783 = vmatprep.mubr.f32.mxu0 0.0
      %784 = vmatmul.mubr.f32.gmra.mrb[0].mxu0 %v357
      %v785 = vpop.f32.mrb[0].mxu0
      %v786 = vadd.f32 0.0, %v785
      %v787 = vpop.f32.mrb[0].mxu0
      %v788 = vadd.f32 0.0, %v787
      %789 = vmatprep.mubr.f32.mxu0 0.0
      %790 = vmatmul.mubr.f32.gmra.mrb[0].mxu0 %v360
      %v791 = vpop.f32.mrb[0].mxu0
      %v792 = vadd.f32 0.0, %v791
      %v793 = vpop.f32.mrb[0].mxu0
      %v794 = vadd.f32 0.0, %v793
      %795 = vmatprep.mubr.f32.mxu0 0.0
      %796 = vmatmul.mubr.f32.gmra.mrb[0].mxu0 %v363
      %v797 = vpop.f32.mrb[0].mxu0
      %v798 = vadd.f32 0.0, %v797
      %v799 = vpop.f32.mrb[0].mxu0
      %v800 = vadd.f32 0.0, %v799
      %801 = vmatprep.mubr.f32.mxu0 0.0
      %802 = vmatmul.mubr.f32.gmra.mrb[0].mxu0 %v366
      %v803 = vpop.f32.mrb[0].mxu0
      %v804 = vadd.f32 0.0, %v803
      %v805 = vpop.f32.mrb[0].mxu0
      %v806 = vadd.f32 0.0, %v805
      %807 = vmatprep.mubr.f32.mxu0 0.0
      %808 = vmatmul.mubr.f32.gmra.mrb[0].mxu0 %v369
      %v809 = vpop.f32.mrb[0].mxu0
      %v810 = vadd.f32 0.0, %v809
      %v811 = vpop.f32.mrb[0].mxu0
      %v812 = vadd.f32 0.0, %v811
      %813 = vmatprep.mubr.f32.mxu0 0.0
      %814 = vmatmul.mubr.f32.gmra.mrb[0].mxu0 %v372
      %v815 = vpop.f32.mrb[0].mxu0
      %v816 = vadd.f32 0.0, %v815
      %v817 = vpop.f32.mrb[0].mxu0
      %v818 = vadd.f32 0.0, %v817
      %819 = vmatprep.mubr.f32.mxu0 0.0
      %820 = vmatmul.mubr.f32.gmra.mrb[0].mxu0 %v375
      %v821 = vpop.f32.mrb[0].mxu0
      %v822 = vadd.f32 0.0, %v821
      %v823 = vpop.f32.mrb[0].mxu0
      %v824 = vadd.f32 0.0, %v823
      %825 = vdwg.mxu0
      %826 = vmatprep.subr.mxu0 %v179
      %827 = vmatpush1.msra.mxu0 %v178
      %828 = vmatprep.subr.mxu0 0.0
      %829 = vmatpush1.msra.mxu0 0.0
      %830 = vmatprep.subr.mxu0 0.0
      %831 = vmatpush1.msra.mxu0 0.0
      %832 = vmatprep.subr.mxu0 0.0
      %833 = vmatpush1.msra.mxu0 0.0
      %834 = vmatprep.subr.mxu0 0.0
      %835 = vmatpush1.msra.mxu0 0.0
      %836 = vmatprep.subr.mxu0 0.0
      %837 = vmatpush1.msra.mxu0 0.0
      %838 = vmatprep.subr.mxu0 0.0
      %839 = vmatpush1.msra.mxu0 0.0
      %840 = vmatprep.subr.mxu0 0.0
      %841 = vmatpush1.msra.mxu0 0.0
      %842 = vmatprep.subr.mxu0 0.0
      %843 = vmatpush1.msra.mxu0 0.0
      %844 = vmatprep.subr.mxu0 0.0
      %845 = vmatpush1.msra.mxu0 0.0
      %846 = vmatprep.subr.mxu0 0.0
      %847 = vmatpush1.msra.mxu0 0.0
      %848 = vmatprep.subr.mxu0 0.0
      %849 = vmatpush1.msra.mxu0 0.0
      %850 = vmatprep.subr.mxu0 0.0
      %851 = vmatpush1.msra.mxu0 0.0
      %852 = vmatprep.subr.mxu0 0.0
      %853 = vmatpush1.msra.mxu0 0.0
      %854 = vmatprep.subr.mxu0 0.0
      %855 = vmatpush1.msra.mxu0 0.0
      %856 = vmatprep.subr.mxu0 0.0
      %857 = vmatpush1.msra.mxu0 0.0
      %858 = vmatprep.subr.mxu0 0.0
      %859 = vmatpush1.msra.mxu0 0.0
      %860 = vmatprep.subr.mxu0 0.0
      %861 = vmatpush1.msra.mxu0 0.0
      %862 = vmatprep.subr.mxu0 0.0
      %863 = vmatpush1.msra.mxu0 0.0
      %864 = vmatprep.subr.mxu0 0.0
      %865 = vmatpush1.msra.mxu0 0.0
      %866 = vmatprep.subr.mxu0 0.0
      %867 = vmatpush1.msra.mxu0 0.0
      %868 = vmatprep.subr.mxu0 0.0
      %869 = vmatpush1.msra.mxu0 0.0
      %870 = vmatprep.subr.mxu0 0.0
      %871 = vmatpush1.msra.mxu0 0.0
      %872 = vmatprep.subr.mxu0 0.0
      %873 = vmatpush1.msra.mxu0 0.0
      %874 = vmatprep.subr.mxu0 0.0
      %875 = vmatpush1.msra.mxu0 0.0
      %876 = vmatprep.subr.mxu0 0.0
      %877 = vmatpush1.msra.mxu0 0.0
      %878 = vmatprep.subr.mxu0 0.0
      %879 = vmatpush1.msra.mxu0 0.0
      %880 = vmatprep.subr.mxu0 0.0
      %881 = vmatpush1.msra.mxu0 0.0
      %882 = vmatprep.subr.mxu0 0.0
      %883 = vmatpush1.msra.mxu0 0.0
      %884 = vmatprep.subr.mxu0 0.0
      %885 = vmatpush1.msra.mxu0 0.0
      %886 = vmatprep.subr.mxu0 0.0
      %887 = vmatpush1.msra.mxu0 0.0
      %888 = vmatprep.subr.mxu0 0.0
      %889 = vmatpush1.msra.mxu0 0.0
      %890 = vmatprep.mubr.f32.mxu0 0.0
      %891 = vmatmul.mubr.f32.gmra.mrb[0].mxu0 %v186
      %v892 = vpop.f32.mrb[0].mxu0
      %v893 = vadd.f32 0.0, %v892
      %v894 = vpop.f32.mrb[0].mxu0
      %v895 = vadd.f32 0.0, %v894
      %896 = vmatprep.mubr.f32.mxu0 0.0
      %897 = vmatmul.mubr.f32.gmra.mrb[0].mxu0 %v189
      %v898 = vpop.f32.mrb[0].mxu0
      %v899 = vadd.f32 0.0, %v898
      %v900 = vpop.f32.mrb[0].mxu0
      %v901 = vadd.f32 0.0, %v900
      %902 = vmatprep.mubr.f32.mxu0 0.0
      %903 = vmatmul.mubr.f32.gmra.mrb[0].mxu0 %v192
      %v904 = vpop.f32.mrb[0].mxu0
      %v905 = vadd.f32 0.0, %v904
      %v906 = vpop.f32.mrb[0].mxu0
      %v907 = vadd.f32 0.0, %v906
      %908 = vmatprep.mubr.f32.mxu0 0.0
      %909 = vmatmul.mubr.f32.gmra.mrb[0].mxu0 %v195
      %v910 = vpop.f32.mrb[0].mxu0
      %v911 = vadd.f32 0.0, %v910
      %v912 = vpop.f32.mrb[0].mxu0
      %v913 = vadd.f32 0.0, %v912
      %914 = vmatprep.mubr.f32.mxu0 0.0
      %915 = vmatmul.mubr.f32.gmra.mrb[0].mxu0 %v198
      %v916 = vpop.f32.mrb[0].mxu0
      %v917 = vadd.f32 0.0, %v916
      %v918 = vpop.f32.mrb[0].mxu0
      %v919 = vadd.f32 0.0, %v918
      %920 = vmatprep.mubr.f32.mxu0 0.0
      %921 = vmatmul.mubr.f32.gmra.mrb[0].mxu0 %v201
      %v922 = vpop.f32.mrb[0].mxu0
      %v923 = vadd.f32 0.0, %v922
      %v924 = vpop.f32.mrb[0].mxu0
      %v925 = vadd.f32 0.0, %v924
      %926 = vmatprep.mubr.f32.mxu0 0.0
      %927 = vmatmul.mubr.f32.gmra.mrb[0].mxu0 %v204
      %v928 = vpop.f32.mrb[0].mxu0
      %v929 = vadd.f32 0.0, %v928
      %v930 = vpop.f32.mrb[0].mxu0
      %v931 = vadd.f32 0.0, %v930
      %932 = vmatprep.mubr.f32.mxu0 0.0
      %933 = vmatmul.mubr.f32.gmra.mrb[0].mxu0 %v207
      %v934 = vpop.f32.mrb[0].mxu0
      %v935 = vadd.f32 0.0, %v934
      %v936 = vpop.f32.mrb[0].mxu0
      %v937 = vadd.f32 0.0, %v936
      %938 = vmatprep.mubr.f32.mxu0 0.0
      %939 = vmatmul.mubr.f32.gmra.mrb[0].mxu0 %v210
      %v940 = vpop.f32.mrb[0].mxu0
      %v941 = vadd.f32 0.0, %v940
      %v942 = vpop.f32.mrb[0].mxu0
      %v943 = vadd.f32 0.0, %v942
      %944 = vmatprep.mubr.f32.mxu0 0.0
      %945 = vmatmul.mubr.f32.gmra.mrb[0].mxu0 %v213
      %v946 = vpop.f32.mrb[0].mxu0
      %v947 = vadd.f32 0.0, %v946
      %v948 = vpop.f32.mrb[0].mxu0
      %v949 = vadd.f32 0.0, %v948
      %950 = vmatprep.mubr.f32.mxu0 0.0
      %951 = vmatmul.mubr.f32.gmra.mrb[0].mxu0 %v216
      %v952 = vpop.f32.mrb[0].mxu0
      %v953 = vadd.f32 0.0, %v952
      %v954 = vpop.f32.mrb[0].mxu0
      %v955 = vadd.f32 0.0, %v954
      %956 = vmatprep.mubr.f32.mxu0 0.0
      %957 = vmatmul.mubr.f32.gmra.mrb[0].mxu0 %v219
      %v958 = vpop.f32.mrb[0].mxu0
      %v959 = vadd.f32 0.0, %v958
      %v960 = vpop.f32.mrb[0].mxu0
      %v961 = vadd.f32 0.0, %v960
      %962 = vmatprep.mubr.f32.mxu0 0.0
      %963 = vmatmul.mubr.f32.gmra.mrb[0].mxu0 %v222
      %v964 = vpop.f32.mrb[0].mxu0
      %v965 = vadd.f32 0.0, %v964
      %v966 = vpop.f32.mrb[0].mxu0
      %v967 = vadd.f32 0.0, %v966
      %968 = vmatprep.mubr.f32.mxu0 0.0
      %969 = vmatmul.mubr.f32.gmra.mrb[0].mxu0 %v225
      %v970 = vpop.f32.mrb[0].mxu0
      %v971 = vadd.f32 0.0, %v970
      %v972 = vpop.f32.mrb[0].mxu0
      %v973 = vadd.f32 0.0, %v972
      %974 = vmatprep.mubr.f32.mxu0 0.0
      %975 = vmatmul.mubr.f32.gmra.mrb[0].mxu0 %v228
      %v976 = vpop.f32.mrb[0].mxu0
      %v977 = vadd.f32 0.0, %v976
      %v978 = vpop.f32.mrb[0].mxu0
      %v979 = vadd.f32 0.0, %v978
      %980 = vmatprep.mubr.f32.mxu0 0.0
      %981 = vmatmul.mubr.f32.gmra.mrb[0].mxu0 %v231
      %v982 = vpop.f32.mrb[0].mxu0
      %v983 = vadd.f32 0.0, %v982
      %v984 = vpop.f32.mrb[0].mxu0
      %v985 = vadd.f32 0.0, %v984
      %986 = vmatprep.mubr.f32.mxu0 0.0
      %987 = vmatmul.mubr.f32.gmra.mrb[0].mxu0 %v234
      %v988 = vpop.f32.mrb[0].mxu0
      %v989 = vadd.f32 0.0, %v988
      %v990 = vpop.f32.mrb[0].mxu0
      %v991 = vadd.f32 0.0, %v990
      %992 = vmatprep.mubr.f32.mxu0 0.0
      %993 = vmatmul.mubr.f32.gmra.mrb[0].mxu0 %v237
      %v994 = vpop.f32.mrb[0].mxu0
      %v995 = vadd.f32 0.0, %v994
      %v996 = vpop.f32.mrb[0].mxu0
      %v997 = vadd.f32 0.0, %v996
      %998 = vmatprep.mubr.f32.mxu0 0.0
      %999 = vmatmul.mubr.f32.gmra.mrb[0].mxu0 %v240
      %v1000 = vpop.f32.mrb[0].mxu0
      %v1001 = vadd.f32 0.0, %v1000
      %v1002 = vpop.f32.mrb[0].mxu0
      %v1003 = vadd.f32 0.0, %v1002
      %1004 = vmatprep.mubr.f32.mxu0 0.0
      %1005 = vmatmul.mubr.f32.gmra.mrb[0].mxu0 %v243
      %v1006 = vpop.f32.mrb[0].mxu0
      %v1007 = vadd.f32 0.0, %v1006
      %v1008 = vpop.f32.mrb[0].mxu0
      %v1009 = vadd.f32 0.0, %v1008
      %1010 = vmatprep.mubr.f32.mxu0 0.0
      %1011 = vmatmul.mubr.f32.gmra.mrb[0].mxu0 %v246
      %v1012 = vpop.f32.mrb[0].mxu0
      %v1013 = vadd.f32 0.0, %v1012
      %v1014 = vpop.f32.mrb[0].mxu0
      %v1015 = vadd.f32 0.0, %v1014
      %1016 = vmatprep.mubr.f32.mxu0 0.0
      %1017 = vmatmul.mubr.f32.gmra.mrb[0].mxu0 %v249
      %v1018 = vpop.f32.mrb[0].mxu0
      %v1019 = vadd.f32 0.0, %v1018
      %v1020 = vpop.f32.mrb[0].mxu0
      %v1021 = vadd.f32 0.0, %v1020
      %1022 = vmatprep.mubr.f32.mxu0 0.0
      %1023 = vmatmul.mubr.f32.gmra.mrb[0].mxu0 %v252
      %v1024 = vpop.f32.mrb[0].mxu0
      %v1025 = vadd.f32 0.0, %v1024
      %v1026 = vpop.f32.mrb[0].mxu0
      %v1027 = vadd.f32 0.0, %v1026
      %1028 = vmatprep.mubr.f32.mxu0 0.0
      %1029 = vmatmul.mubr.f32.gmra.mrb[0].mxu0 %v255
      %v1030 = vpop.f32.mrb[0].mxu0
      %v1031 = vadd.f32 0.0, %v1030
      %v1032 = vpop.f32.mrb[0].mxu0
      %v1033 = vadd.f32 0.0, %v1032
      %1034 = vmatprep.mubr.f32.mxu0 0.0
      %1035 = vmatmul.mubr.f32.gmra.mrb[0].mxu0 %v258
      %v1036 = vpop.f32.mrb[0].mxu0
      %v1037 = vadd.f32 0.0, %v1036
      %v1038 = vpop.f32.mrb[0].mxu0
      %v1039 = vadd.f32 0.0, %v1038
      %1040 = vmatprep.mubr.f32.mxu0 0.0
      %1041 = vmatmul.mubr.f32.gmra.mrb[0].mxu0 %v261
      %v1042 = vpop.f32.mrb[0].mxu0
      %v1043 = vadd.f32 0.0, %v1042
      %v1044 = vpop.f32.mrb[0].mxu0
      %v1045 = vadd.f32 0.0, %v1044
      %1046 = vmatprep.mubr.f32.mxu0 0.0
      %1047 = vmatmul.mubr.f32.gmra.mrb[0].mxu0 %v264
      %v1048 = vpop.f32.mrb[0].mxu0
      %v1049 = vadd.f32 0.0, %v1048
      %v1050 = vpop.f32.mrb[0].mxu0
      %v1051 = vadd.f32 0.0, %v1050
      %1052 = vmatprep.mubr.f32.mxu0 0.0
      %1053 = vmatmul.mubr.f32.gmra.mrb[0].mxu0 %v267
      %v1054 = vpop.f32.mrb[0].mxu0
      %v1055 = vadd.f32 0.0, %v1054
      %v1056 = vpop.f32.mrb[0].mxu0
      %v1057 = vadd.f32 0.0, %v1056
      %1058 = vmatprep.mubr.f32.mxu0 0.0
      %1059 = vmatmul.mubr.f32.gmra.mrb[0].mxu0 %v270
      %v1060 = vpop.f32.mrb[0].mxu0
      %v1061 = vadd.f32 0.0, %v1060
      %v1062 = vpop.f32.mrb[0].mxu0
      %v1063 = vadd.f32 0.0, %v1062
      %1064 = vmatprep.mubr.f32.mxu0 0.0
      %1065 = vmatmul.mubr.f32.gmra.mrb[0].mxu0 %v273
      %v1066 = vpop.f32.mrb[0].mxu0
      %v1067 = vadd.f32 0.0, %v1066
      %v1068 = vpop.f32.mrb[0].mxu0
      %v1069 = vadd.f32 0.0, %v1068
      %1070 = vmatprep.mubr.f32.mxu0 0.0
      %1071 = vmatmul.mubr.f32.gmra.mrb[0].mxu0 %v276
      %v1072 = vpop.f32.mrb[0].mxu0
      %v1073 = vadd.f32 0.0, %v1072
      %v1074 = vpop.f32.mrb[0].mxu0
      %v1075 = vadd.f32 0.0, %v1074
      %1076 = vmatprep.mubr.f32.mxu0 0.0
      %1077 = vmatmul.mubr.f32.gmra.mrb[0].mxu0 %v279
      %v1078 = vpop.f32.mrb[0].mxu0
      %v1079 = vadd.f32 0.0, %v1078
      %v1080 = vpop.f32.mrb[0].mxu0
      %v1081 = vadd.f32 0.0, %v1080
      %1082 = vmatprep.mubr.f32.mxu0 0.0
      %1083 = vmatmul.mubr.f32.gmra.mrb[0].mxu0 %v282
      %v1084 = vpop.f32.mrb[0].mxu0
      %v1085 = vadd.f32 0.0, %v1084
      %v1086 = vpop.f32.mrb[0].mxu0
      %v1087 = vadd.f32 0.0, %v1086
      %1088 = vmatprep.mubr.f32.mxu0 0.0
      %1089 = vmatmul.mubr.f32.gmra.mrb[0].mxu0 %v285
      %v1090 = vpop.f32.mrb[0].mxu0
      %v1091 = vadd.f32 0.0, %v1090
      %v1092 = vpop.f32.mrb[0].mxu0
      %v1093 = vadd.f32 0.0, %v1092
      %1094 = vmatprep.mubr.f32.mxu0 0.0
      %1095 = vmatmul.mubr.f32.gmra.mrb[0].mxu0 %v288
      %v1096 = vpop.f32.mrb[0].mxu0
      %v1097 = vadd.f32 0.0, %v1096
      %v1098 = vpop.f32.mrb[0].mxu0
      %v1099 = vadd.f32 0.0, %v1098
      %1100 = vmatprep.mubr.f32.mxu0 0.0
      %1101 = vmatmul.mubr.f32.gmra.mrb[0].mxu0 %v291
      %v1102 = vpop.f32.mrb[0].mxu0
      %v1103 = vadd.f32 0.0, %v1102
      %v1104 = vpop.f32.mrb[0].mxu0
      %v1105 = vadd.f32 0.0, %v1104
      %1106 = vmatprep.mubr.f32.mxu0 0.0
      %1107 = vmatmul.mubr.f32.gmra.mrb[0].mxu0 %v294
      %v1108 = vpop.f32.mrb[0].mxu0
      %v1109 = vadd.f32 0.0, %v1108
      %v1110 = vpop.f32.mrb[0].mxu0
      %v1111 = vadd.f32 0.0, %v1110
      %1112 = vmatprep.mubr.f32.mxu0 0.0
      %1113 = vmatmul.mubr.f32.gmra.mrb[0].mxu0 %v297
      %v1114 = vpop.f32.mrb[0].mxu0
      %v1115 = vadd.f32 0.0, %v1114
      %v1116 = vpop.f32.mrb[0].mxu0
      %v1117 = vadd.f32 0.0, %v1116
      %1118 = vmatprep.mubr.f32.mxu0 0.0
      %1119 = vmatmul.mubr.f32.gmra.mrb[0].mxu0 %v300
      %v1120 = vpop.f32.mrb[0].mxu0
      %v1121 = vadd.f32 0.0, %v1120
      %v1122 = vpop.f32.mrb[0].mxu0
      %v1123 = vadd.f32 0.0, %v1122
      %1124 = vmatprep.mubr.f32.mxu0 0.0
      %1125 = vmatmul.mubr.f32.gmra.mrb[0].mxu0 %v303
      %v1126 = vpop.f32.mrb[0].mxu0
      %v1127 = vadd.f32 0.0, %v1126
      %v1128 = vpop.f32.mrb[0].mxu0
      %v1129 = vadd.f32 0.0, %v1128
      %1130 = vmatprep.mubr.f32.mxu0 0.0
      %1131 = vmatmul.mubr.f32.gmra.mrb[0].mxu0 %v306
      %v1132 = vpop.f32.mrb[0].mxu0
      %v1133 = vadd.f32 0.0, %v1132
      %v1134 = vpop.f32.mrb[0].mxu0
      %v1135 = vadd.f32 0.0, %v1134
      %1136 = vmatprep.mubr.f32.mxu0 0.0
      %1137 = vmatmul.mubr.f32.gmra.mrb[0].mxu0 %v309
      %v1138 = vpop.f32.mrb[0].mxu0
      %v1139 = vadd.f32 0.0, %v1138
      %v1140 = vpop.f32.mrb[0].mxu0
      %v1141 = vadd.f32 0.0, %v1140
      %1142 = vmatprep.mubr.f32.mxu0 0.0
      %1143 = vmatmul.mubr.f32.gmra.mrb[0].mxu0 %v312
      %v1144 = vpop.f32.mrb[0].mxu0
      %v1145 = vadd.f32 0.0, %v1144
      %v1146 = vpop.f32.mrb[0].mxu0
      %v1147 = vadd.f32 0.0, %v1146
      %1148 = vmatprep.mubr.f32.mxu0 0.0
      %1149 = vmatmul.mubr.f32.gmra.mrb[0].mxu0 %v315
      %v1150 = vpop.f32.mrb[0].mxu0
      %v1151 = vadd.f32 0.0, %v1150
      %v1152 = vpop.f32.mrb[0].mxu0
      %v1153 = vadd.f32 0.0, %v1152
      %1154 = vmatprep.mubr.f32.mxu0 0.0
      %1155 = vmatmul.mubr.f32.gmra.mrb[0].mxu0 %v318
      %v1156 = vpop.f32.mrb[0].mxu0
      %v1157 = vadd.f32 0.0, %v1156
      %v1158 = vpop.f32.mrb[0].mxu0
      %v1159 = vadd.f32 0.0, %v1158
      %1160 = vmatprep.mubr.f32.mxu0 0.0
      %1161 = vmatmul.mubr.f32.gmra.mrb[0].mxu0 %v321
      %v1162 = vpop.f32.mrb[0].mxu0
      %v1163 = vadd.f32 0.0, %v1162
      %v1164 = vpop.f32.mrb[0].mxu0
      %v1165 = vadd.f32 0.0, %v1164
      %1166 = vmatprep.mubr.f32.mxu0 0.0
      %1167 = vmatmul.mubr.f32.gmra.mrb[0].mxu0 %v324
      %v1168 = vpop.f32.mrb[0].mxu0
      %v1169 = vadd.f32 0.0, %v1168
      %v1170 = vpop.f32.mrb[0].mxu0
      %v1171 = vadd.f32 0.0, %v1170
      %1172 = vmatprep.mubr.f32.mxu0 0.0
      %1173 = vmatmul.mubr.f32.gmra.mrb[0].mxu0 %v327
      %v1174 = vpop.f32.mrb[0].mxu0
      %v1175 = vadd.f32 0.0, %v1174
      %v1176 = vpop.f32.mrb[0].mxu0
      %v1177 = vadd.f32 0.0, %v1176
      %1178 = vmatprep.mubr.f32.mxu0 0.0
      %1179 = vmatmul.mubr.f32.gmra.mrb[0].mxu0 %v330
      %v1180 = vpop.f32.mrb[0].mxu0
      %v1181 = vadd.f32 0.0, %v1180
      %v1182 = vpop.f32.mrb[0].mxu0
      %v1183 = vadd.f32 0.0, %v1182
      %1184 = vmatprep.mubr.f32.mxu0 0.0
      %1185 = vmatmul.mubr.f32.gmra.mrb[0].mxu0 %v333
      %v1186 = vpop.f32.mrb[0].mxu0
      %v1187 = vadd.f32 0.0, %v1186
      %v1188 = vpop.f32.mrb[0].mxu0
      %v1189 = vadd.f32 0.0, %v1188
      %1190 = vmatprep.mubr.f32.mxu0 0.0
      %1191 = vmatmul.mubr.f32.gmra.mrb[0].mxu0 %v336
      %v1192 = vpop.f32.mrb[0].mxu0
      %v1193 = vadd.f32 0.0, %v1192
      %v1194 = vpop.f32.mrb[0].mxu0
      %v1195 = vadd.f32 0.0, %v1194
      %1196 = vmatprep.mubr.f32.mxu0 0.0
      %1197 = vmatmul.mubr.f32.gmra.mrb[0].mxu0 %v339
      %v1198 = vpop.f32.mrb[0].mxu0
      %v1199 = vadd.f32 0.0, %v1198
      %v1200 = vpop.f32.mrb[0].mxu0
      %v1201 = vadd.f32 0.0, %v1200
      %1202 = vmatprep.mubr.f32.mxu0 0.0
      %1203 = vmatmul.mubr.f32.gmra.mrb[0].mxu0 %v342
      %v1204 = vpop.f32.mrb[0].mxu0
      %v1205 = vadd.f32 0.0, %v1204
      %v1206 = vpop.f32.mrb[0].mxu0
      %v1207 = vadd.f32 0.0, %v1206
      %1208 = vmatprep.mubr.f32.mxu0 0.0
      %1209 = vmatmul.mubr.f32.gmra.mrb[0].mxu0 %v345
      %v1210 = vpop.f32.mrb[0].mxu0
      %v1211 = vadd.f32 0.0, %v1210
      %v1212 = vpop.f32.mrb[0].mxu0
      %v1213 = vadd.f32 0.0, %v1212
      %1214 = vmatprep.mubr.f32.mxu0 0.0
      %1215 = vmatmul.mubr.f32.gmra.mrb[0].mxu0 %v348
      %v1216 = vpop.f32.mrb[0].mxu0
      %v1217 = vadd.f32 0.0, %v1216
      %v1218 = vpop.f32.mrb[0].mxu0
      %v1219 = vadd.f32 0.0, %v1218
      %1220 = vmatprep.mubr.f32.mxu0 0.0
      %1221 = vmatmul.mubr.f32.gmra.mrb[0].mxu0 %v351
      %v1222 = vpop.f32.mrb[0].mxu0
      %v1223 = vadd.f32 0.0, %v1222
      %v1224 = vpop.f32.mrb[0].mxu0
      %v1225 = vadd.f32 0.0, %v1224
      %1226 = vmatprep.mubr.f32.mxu0 0.0
      %1227 = vmatmul.mubr.f32.gmra.mrb[0].mxu0 %v354
      %v1228 = vpop.f32.mrb[0].mxu0
      %v1229 = vadd.f32 0.0, %v1228
      %v1230 = vpop.f32.mrb[0].mxu0
      %v1231 = vadd.f32 0.0, %v1230
      %1232 = vmatprep.mubr.f32.mxu0 0.0
      %1233 = vmatmul.mubr.f32.gmra.mrb[0].mxu0 %v357
      %v1234 = vpop.f32.mrb[0].mxu0
      %v1235 = vadd.f32 0.0, %v1234
      %v1236 = vpop.f32.mrb[0].mxu0
      %v1237 = vadd.f32 0.0, %v1236
      %1238 = vmatprep.mubr.f32.mxu0 0.0
      %1239 = vmatmul.mubr.f32.gmra.mrb[0].mxu0 %v360
      %v1240 = vpop.f32.mrb[0].mxu0
      %v1241 = vadd.f32 0.0, %v1240
      %v1242 = vpop.f32.mrb[0].mxu0
      %v1243 = vadd.f32 0.0, %v1242
      %1244 = vmatprep.mubr.f32.mxu0 0.0
      %1245 = vmatmul.mubr.f32.gmra.mrb[0].mxu0 %v363
      %v1246 = vpop.f32.mrb[0].mxu0
      %v1247 = vadd.f32 0.0, %v1246
      %v1248 = vpop.f32.mrb[0].mxu0
      %v1249 = vadd.f32 0.0, %v1248
      %1250 = vmatprep.mubr.f32.mxu0 0.0
      %1251 = vmatmul.mubr.f32.gmra.mrb[0].mxu0 %v366
      %v1252 = vpop.f32.mrb[0].mxu0
      %v1253 = vadd.f32 0.0, %v1252
      %v1254 = vpop.f32.mrb[0].mxu0
      %v1255 = vadd.f32 0.0, %v1254
      %1256 = vmatprep.mubr.f32.mxu0 0.0
      %1257 = vmatmul.mubr.f32.gmra.mrb[0].mxu0 %v369
      %v1258 = vpop.f32.mrb[0].mxu0
      %v1259 = vadd.f32 0.0, %v1258
      %v1260 = vpop.f32.mrb[0].mxu0
      %v1261 = vadd.f32 0.0, %v1260
      %1262 = vmatprep.mubr.f32.mxu0 0.0
      %1263 = vmatmul.mubr.f32.gmra.mrb[0].mxu0 %v372
      %v1264 = vpop.f32.mrb[0].mxu0
      %v1265 = vadd.f32 0.0, %v1264
      %v1266 = vpop.f32.mrb[0].mxu0
      %v1267 = vadd.f32 0.0, %v1266
      %1268 = vmatprep.mubr.f32.mxu0 0.0
      %1269 = vmatmul.mubr.f32.gmra.mrb[0].mxu0 %v375
      %v1270 = vpop.f32.mrb[0].mxu0
      %v1271 = vadd.f32 0.0, %v1270
      %v1272 = vpop.f32.mrb[0].mxu0
      %v1273 = vadd.f32 0.0, %v1272
      %1274 = vdwg.mxu0
      %1275 = vmatprep.subr.mxu0 %v181
      %1276 = vmatpush1.msra.mxu0 %v180
      %1277 = vmatprep.subr.mxu0 0.0
      %1278 = vmatpush1.msra.mxu0 0.0
      %1279 = vmatprep.subr.mxu0 0.0
      %1280 = vmatpush1.msra.mxu0 0.0
      %1281 = vmatprep.subr.mxu0 0.0
      %1282 = vmatpush1.msra.mxu0 0.0
      %1283 = vmatprep.subr.mxu0 0.0
      %1284 = vmatpush1.msra.mxu0 0.0
      %1285 = vmatprep.subr.mxu0 0.0
      %1286 = vmatpush1.msra.mxu0 0.0
      %1287 = vmatprep.subr.mxu0 0.0
      %1288 = vmatpush1.msra.mxu0 0.0
      %1289 = vmatprep.subr.mxu0 0.0
      %1290 = vmatpush1.msra.mxu0 0.0
      %1291 = vmatprep.subr.mxu0 0.0
      %1292 = vmatpush1.msra.mxu0 0.0
      %1293 = vmatprep.subr.mxu0 0.0
      %1294 = vmatpush1.msra.mxu0 0.0
      %1295 = vmatprep.subr.mxu0 0.0
      %1296 = vmatpush1.msra.mxu0 0.0
      %1297 = vmatprep.subr.mxu0 0.0
      %1298 = vmatpush1.msra.mxu0 0.0
      %1299 = vmatprep.subr.mxu0 0.0
      %1300 = vmatpush1.msra.mxu0 0.0
      %1301 = vmatprep.subr.mxu0 0.0
      %1302 = vmatpush1.msra.mxu0 0.0
      %1303 = vmatprep.subr.mxu0 0.0
      %1304 = vmatpush1.msra.mxu0 0.0
      %1305 = vmatprep.subr.mxu0 0.0
      %1306 = vmatpush1.msra.mxu0 0.0
      %1307 = vmatprep.subr.mxu0 0.0
      %1308 = vmatpush1.msra.mxu0 0.0
      %1309 = vmatprep.subr.mxu0 0.0
      %1310 = vmatpush1.msra.mxu0 0.0
      %1311 = vmatprep.subr.mxu0 0.0
      %1312 = vmatpush1.msra.mxu0 0.0
      %1313 = vmatprep.subr.mxu0 0.0
      %1314 = vmatpush1.msra.mxu0 0.0
      %1315 = vmatprep.subr.mxu0 0.0
      %1316 = vmatpush1.msra.mxu0 0.0
      %1317 = vmatprep.subr.mxu0 0.0
      %1318 = vmatpush1.msra.mxu0 0.0
      %1319 = vmatprep.subr.mxu0 0.0
      %1320 = vmatpush1.msra.mxu0 0.0
      %1321 = vmatprep.subr.mxu0 0.0
      %1322 = vmatpush1.msra.mxu0 0.0
      %1323 = vmatprep.subr.mxu0 0.0
      %1324 = vmatpush1.msra.mxu0 0.0
      %1325 = vmatprep.subr.mxu0 0.0
      %1326 = vmatpush1.msra.mxu0 0.0
      %1327 = vmatprep.subr.mxu0 0.0
      %1328 = vmatpush1.msra.mxu0 0.0
      %1329 = vmatprep.subr.mxu0 0.0
      %1330 = vmatpush1.msra.mxu0 0.0
      %1331 = vmatprep.subr.mxu0 0.0
      %1332 = vmatpush1.msra.mxu0 0.0
      %1333 = vmatprep.subr.mxu0 0.0
      %1334 = vmatpush1.msra.mxu0 0.0
      %1335 = vmatprep.subr.mxu0 0.0
      %1336 = vmatpush1.msra.mxu0 0.0
      %1337 = vmatprep.subr.mxu0 0.0
      %1338 = vmatpush1.msra.mxu0 0.0
      %1339 = vmatprep.mubr.f32.mxu0 0.0
      %1340 = vmatmul.mubr.f32.gmra.mrb[0].mxu0 %v186
      %v1341 = vpop.f32.mrb[0].mxu0
      %v1342 = vadd.f32 0.0, %v1341
      %v1343 = vpop.f32.mrb[0].mxu0
      %v1344 = vadd.f32 0.0, %v1343
      %1345 = vmatprep.mubr.f32.mxu0 0.0
      %1346 = vmatmul.mubr.f32.gmra.mrb[0].mxu0 %v189
      %v1347 = vpop.f32.mrb[0].mxu0
      %v1348 = vadd.f32 0.0, %v1347
      %v1349 = vpop.f32.mrb[0].mxu0
      %v1350 = vadd.f32 0.0, %v1349
      %1351 = vmatprep.mubr.f32.mxu0 0.0
      %1352 = vmatmul.mubr.f32.gmra.mrb[0].mxu0 %v192
      %v1353 = vpop.f32.mrb[0].mxu0
      %v1354 = vadd.f32 0.0, %v1353
      %v1355 = vpop.f32.mrb[0].mxu0
      %v1356 = vadd.f32 0.0, %v1355
      %1357 = vmatprep.mubr.f32.mxu0 0.0
      %1358 = vmatmul.mubr.f32.gmra.mrb[0].mxu0 %v195
      %v1359 = vpop.f32.mrb[0].mxu0
      %v1360 = vadd.f32 0.0, %v1359
      %v1361 = vpop.f32.mrb[0].mxu0
      %v1362 = vadd.f32 0.0, %v1361
      %1363 = vmatprep.mubr.f32.mxu0 0.0
      %1364 = vmatmul.mubr.f32.gmra.mrb[0].mxu0 %v198
      %v1365 = vpop.f32.mrb[0].mxu0
      %v1366 = vadd.f32 0.0, %v1365
      %v1367 = vpop.f32.mrb[0].mxu0
      %v1368 = vadd.f32 0.0, %v1367
      %1369 = vmatprep.mubr.f32.mxu0 0.0
      %1370 = vmatmul.mubr.f32.gmra.mrb[0].mxu0 %v201
      %v1371 = vpop.f32.mrb[0].mxu0
      %v1372 = vadd.f32 0.0, %v1371
      %v1373 = vpop.f32.mrb[0].mxu0
      %v1374 = vadd.f32 0.0, %v1373
      %1375 = vmatprep.mubr.f32.mxu0 0.0
      %1376 = vmatmul.mubr.f32.gmra.mrb[0].mxu0 %v204
      %v1377 = vpop.f32.mrb[0].mxu0
      %v1378 = vadd.f32 0.0, %v1377
      %v1379 = vpop.f32.mrb[0].mxu0
      %v1380 = vadd.f32 0.0, %v1379
      %1381 = vmatprep.mubr.f32.mxu0 0.0
      %1382 = vmatmul.mubr.f32.gmra.mrb[0].mxu0 %v207
      %v1383 = vpop.f32.mrb[0].mxu0
      %v1384 = vadd.f32 0.0, %v1383
      %v1385 = vpop.f32.mrb[0].mxu0
      %v1386 = vadd.f32 0.0, %v1385
      %1387 = vmatprep.mubr.f32.mxu0 0.0
      %1388 = vmatmul.mubr.f32.gmra.mrb[0].mxu0 %v210
      %v1389 = vpop.f32.mrb[0].mxu0
      %v1390 = vadd.f32 0.0, %v1389
      %v1391 = vpop.f32.mrb[0].mxu0
      %v1392 = vadd.f32 0.0, %v1391
      %1393 = vmatprep.mubr.f32.mxu0 0.0
      %1394 = vmatmul.mubr.f32.gmra.mrb[0].mxu0 %v213
      %v1395 = vpop.f32.mrb[0].mxu0
      %v1396 = vadd.f32 0.0, %v1395
      %v1397 = vpop.f32.mrb[0].mxu0
      %v1398 = vadd.f32 0.0, %v1397
      %1399 = vmatprep.mubr.f32.mxu0 0.0
      %1400 = vmatmul.mubr.f32.gmra.mrb[0].mxu0 %v216
      %v1401 = vpop.f32.mrb[0].mxu0
      %v1402 = vadd.f32 0.0, %v1401
      %v1403 = vpop.f32.mrb[0].mxu0
      %v1404 = vadd.f32 0.0, %v1403
      %1405 = vmatprep.mubr.f32.mxu0 0.0
      %1406 = vmatmul.mubr.f32.gmra.mrb[0].mxu0 %v219
      %v1407 = vpop.f32.mrb[0].mxu0
      %v1408 = vadd.f32 0.0, %v1407
      %v1409 = vpop.f32.mrb[0].mxu0
      %v1410 = vadd.f32 0.0, %v1409
      %1411 = vmatprep.mubr.f32.mxu0 0.0
      %1412 = vmatmul.mubr.f32.gmra.mrb[0].mxu0 %v222
      %v1413 = vpop.f32.mrb[0].mxu0
      %v1414 = vadd.f32 0.0, %v1413
      %v1415 = vpop.f32.mrb[0].mxu0
      %v1416 = vadd.f32 0.0, %v1415
      %1417 = vmatprep.mubr.f32.mxu0 0.0
      %1418 = vmatmul.mubr.f32.gmra.mrb[0].mxu0 %v225
      %v1419 = vpop.f32.mrb[0].mxu0
      %v1420 = vadd.f32 0.0, %v1419
      %v1421 = vpop.f32.mrb[0].mxu0
      %v1422 = vadd.f32 0.0, %v1421
      %1423 = vmatprep.mubr.f32.mxu0 0.0
      %1424 = vmatmul.mubr.f32.gmra.mrb[0].mxu0 %v228
      %v1425 = vpop.f32.mrb[0].mxu0
      %v1426 = vadd.f32 0.0, %v1425
      %v1427 = vpop.f32.mrb[0].mxu0
      %v1428 = vadd.f32 0.0, %v1427
      %1429 = vmatprep.mubr.f32.mxu0 0.0
      %1430 = vmatmul.mubr.f32.gmra.mrb[0].mxu0 %v231
      %v1431 = vpop.f32.mrb[0].mxu0
      %v1432 = vadd.f32 0.0, %v1431
      %v1433 = vpop.f32.mrb[0].mxu0
      %v1434 = vadd.f32 0.0, %v1433
      %1435 = vmatprep.mubr.f32.mxu0 0.0
      %1436 = vmatmul.mubr.f32.gmra.mrb[0].mxu0 %v234
      %v1437 = vpop.f32.mrb[0].mxu0
      %v1438 = vadd.f32 0.0, %v1437
      %v1439 = vpop.f32.mrb[0].mxu0
      %v1440 = vadd.f32 0.0, %v1439
      %1441 = vmatprep.mubr.f32.mxu0 0.0
      %1442 = vmatmul.mubr.f32.gmra.mrb[0].mxu0 %v237
      %v1443 = vpop.f32.mrb[0].mxu0
      %v1444 = vadd.f32 0.0, %v1443
      %v1445 = vpop.f32.mrb[0].mxu0
      %v1446 = vadd.f32 0.0, %v1445
      %1447 = vmatprep.mubr.f32.mxu0 0.0
      %1448 = vmatmul.mubr.f32.gmra.mrb[0].mxu0 %v240
      %v1449 = vpop.f32.mrb[0].mxu0
      %v1450 = vadd.f32 0.0, %v1449
      %v1451 = vpop.f32.mrb[0].mxu0
      %v1452 = vadd.f32 0.0, %v1451
      %1453 = vmatprep.mubr.f32.mxu0 0.0
      %1454 = vmatmul.mubr.f32.gmra.mrb[0].mxu0 %v243
      %v1455 = vpop.f32.mrb[0].mxu0
      %v1456 = vadd.f32 0.0, %v1455
      %v1457 = vpop.f32.mrb[0].mxu0
      %v1458 = vadd.f32 0.0, %v1457
      %1459 = vmatprep.mubr.f32.mxu0 0.0
      %1460 = vmatmul.mubr.f32.gmra.mrb[0].mxu0 %v246
      %v1461 = vpop.f32.mrb[0].mxu0
      %v1462 = vadd.f32 0.0, %v1461
      %v1463 = vpop.f32.mrb[0].mxu0
      %v1464 = vadd.f32 0.0, %v1463
      %1465 = vmatprep.mubr.f32.mxu0 0.0
      %1466 = vmatmul.mubr.f32.gmra.mrb[0].mxu0 %v249
      %v1467 = vpop.f32.mrb[0].mxu0
      %v1468 = vadd.f32 0.0, %v1467
      %v1469 = vpop.f32.mrb[0].mxu0
      %v1470 = vadd.f32 0.0, %v1469
      %1471 = vmatprep.mubr.f32.mxu0 0.0
      %1472 = vmatmul.mubr.f32.gmra.mrb[0].mxu0 %v252
      %v1473 = vpop.f32.mrb[0].mxu0
      %v1474 = vadd.f32 0.0, %v1473
      %v1475 = vpop.f32.mrb[0].mxu0
      %v1476 = vadd.f32 0.0, %v1475
      %1477 = vmatprep.mubr.f32.mxu0 0.0
      %1478 = vmatmul.mubr.f32.gmra.mrb[0].mxu0 %v255
      %v1479 = vpop.f32.mrb[0].mxu0
      %v1480 = vadd.f32 0.0, %v1479
      %v1481 = vpop.f32.mrb[0].mxu0
      %v1482 = vadd.f32 0.0, %v1481
      %1483 = vmatprep.mubr.f32.mxu0 0.0
      %1484 = vmatmul.mubr.f32.gmra.mrb[0].mxu0 %v258
      %v1485 = vpop.f32.mrb[0].mxu0
      %v1486 = vadd.f32 0.0, %v1485
      %v1487 = vpop.f32.mrb[0].mxu0
      %v1488 = vadd.f32 0.0, %v1487
      %1489 = vmatprep.mubr.f32.mxu0 0.0
      %1490 = vmatmul.mubr.f32.gmra.mrb[0].mxu0 %v261
      %v1491 = vpop.f32.mrb[0].mxu0
      %v1492 = vadd.f32 0.0, %v1491
      %v1493 = vpop.f32.mrb[0].mxu0
      %v1494 = vadd.f32 0.0, %v1493
      %1495 = vmatprep.mubr.f32.mxu0 0.0
      %1496 = vmatmul.mubr.f32.gmra.mrb[0].mxu0 %v264
      %v1497 = vpop.f32.mrb[0].mxu0
      %v1498 = vadd.f32 0.0, %v1497
      %v1499 = vpop.f32.mrb[0].mxu0
      %v1500 = vadd.f32 0.0, %v1499
      %1501 = vmatprep.mubr.f32.mxu0 0.0
      %1502 = vmatmul.mubr.f32.gmra.mrb[0].mxu0 %v267
      %v1503 = vpop.f32.mrb[0].mxu0
      %v1504 = vadd.f32 0.0, %v1503
      %v1505 = vpop.f32.mrb[0].mxu0
      %v1506 = vadd.f32 0.0, %v1505
      %1507 = vmatprep.mubr.f32.mxu0 0.0
      %1508 = vmatmul.mubr.f32.gmra.mrb[0].mxu0 %v270
      %v1509 = vpop.f32.mrb[0].mxu0
      %v1510 = vadd.f32 0.0, %v1509
      %v1511 = vpop.f32.mrb[0].mxu0
      %v1512 = vadd.f32 0.0, %v1511
      %1513 = vmatprep.mubr.f32.mxu0 0.0
      %1514 = vmatmul.mubr.f32.gmra.mrb[0].mxu0 %v273
      %v1515 = vpop.f32.mrb[0].mxu0
      %v1516 = vadd.f32 0.0, %v1515
      %v1517 = vpop.f32.mrb[0].mxu0
      %v1518 = vadd.f32 0.0, %v1517
      %1519 = vmatprep.mubr.f32.mxu0 0.0
      %1520 = vmatmul.mubr.f32.gmra.mrb[0].mxu0 %v276
      %v1521 = vpop.f32.mrb[0].mxu0
      %v1522 = vadd.f32 0.0, %v1521
      %v1523 = vpop.f32.mrb[0].mxu0
      %v1524 = vadd.f32 0.0, %v1523
      %1525 = vmatprep.mubr.f32.mxu0 0.0
      %1526 = vmatmul.mubr.f32.gmra.mrb[0].mxu0 %v279
      %v1527 = vpop.f32.mrb[0].mxu0
      %v1528 = vadd.f32 0.0, %v1527
      %v1529 = vpop.f32.mrb[0].mxu0
      %v1530 = vadd.f32 0.0, %v1529
      %1531 = vmatprep.mubr.f32.mxu0 0.0
      %1532 = vmatmul.mubr.f32.gmra.mrb[0].mxu0 %v282
      %v1533 = vpop.f32.mrb[0].mxu0
      %v1534 = vadd.f32 0.0, %v1533
      %v1535 = vpop.f32.mrb[0].mxu0
      %v1536 = vadd.f32 0.0, %v1535
      %1537 = vmatprep.mubr.f32.mxu0 0.0
      %1538 = vmatmul.mubr.f32.gmra.mrb[0].mxu0 %v285
      %v1539 = vpop.f32.mrb[0].mxu0
      %v1540 = vadd.f32 0.0, %v1539
      %v1541 = vpop.f32.mrb[0].mxu0
      %v1542 = vadd.f32 0.0, %v1541
      %1543 = vmatprep.mubr.f32.mxu0 0.0
      %1544 = vmatmul.mubr.f32.gmra.mrb[0].mxu0 %v288
      %v1545 = vpop.f32.mrb[0].mxu0
      %v1546 = vadd.f32 0.0, %v1545
      %v1547 = vpop.f32.mrb[0].mxu0
      %v1548 = vadd.f32 0.0, %v1547
      %1549 = vmatprep.mubr.f32.mxu0 0.0
      %1550 = vmatmul.mubr.f32.gmra.mrb[0].mxu0 %v291
      %v1551 = vpop.f32.mrb[0].mxu0
      %v1552 = vadd.f32 0.0, %v1551
      %v1553 = vpop.f32.mrb[0].mxu0
      %v1554 = vadd.f32 0.0, %v1553
      %1555 = vmatprep.mubr.f32.mxu0 0.0
      %1556 = vmatmul.mubr.f32.gmra.mrb[0].mxu0 %v294
      %v1557 = vpop.f32.mrb[0].mxu0
      %v1558 = vadd.f32 0.0, %v1557
      %v1559 = vpop.f32.mrb[0].mxu0
      %v1560 = vadd.f32 0.0, %v1559
      %1561 = vmatprep.mubr.f32.mxu0 0.0
      %1562 = vmatmul.mubr.f32.gmra.mrb[0].mxu0 %v297
      %v1563 = vpop.f32.mrb[0].mxu0
      %v1564 = vadd.f32 0.0, %v1563
      %v1565 = vpop.f32.mrb[0].mxu0
      %v1566 = vadd.f32 0.0, %v1565
      %1567 = vmatprep.mubr.f32.mxu0 0.0
      %1568 = vmatmul.mubr.f32.gmra.mrb[0].mxu0 %v300
      %v1569 = vpop.f32.mrb[0].mxu0
      %v1570 = vadd.f32 0.0, %v1569
      %v1571 = vpop.f32.mrb[0].mxu0
      %v1572 = vadd.f32 0.0, %v1571
      %1573 = vmatprep.mubr.f32.mxu0 0.0
      %1574 = vmatmul.mubr.f32.gmra.mrb[0].mxu0 %v303
      %v1575 = vpop.f32.mrb[0].mxu0
      %v1576 = vadd.f32 0.0, %v1575
      %v1577 = vpop.f32.mrb[0].mxu0
      %v1578 = vadd.f32 0.0, %v1577
      %1579 = vmatprep.mubr.f32.mxu0 0.0
      %1580 = vmatmul.mubr.f32.gmra.mrb[0].mxu0 %v306
      %v1581 = vpop.f32.mrb[0].mxu0
      %v1582 = vadd.f32 0.0, %v1581
      %v1583 = vpop.f32.mrb[0].mxu0
      %v1584 = vadd.f32 0.0, %v1583
      %1585 = vmatprep.mubr.f32.mxu0 0.0
      %1586 = vmatmul.mubr.f32.gmra.mrb[0].mxu0 %v309
      %v1587 = vpop.f32.mrb[0].mxu0
      %v1588 = vadd.f32 0.0, %v1587
      %v1589 = vpop.f32.mrb[0].mxu0
      %v1590 = vadd.f32 0.0, %v1589
      %1591 = vmatprep.mubr.f32.mxu0 0.0
      %1592 = vmatmul.mubr.f32.gmra.mrb[0].mxu0 %v312
      %v1593 = vpop.f32.mrb[0].mxu0
      %v1594 = vadd.f32 0.0, %v1593
      %v1595 = vpop.f32.mrb[0].mxu0
      %v1596 = vadd.f32 0.0, %v1595
      %1597 = vmatprep.mubr.f32.mxu0 0.0
      %1598 = vmatmul.mubr.f32.gmra.mrb[0].mxu0 %v315
      %v1599 = vpop.f32.mrb[0].mxu0
      %v1600 = vadd.f32 0.0, %v1599
      %v1601 = vpop.f32.mrb[0].mxu0
      %v1602 = vadd.f32 0.0, %v1601
      %1603 = vmatprep.mubr.f32.mxu0 0.0
      %1604 = vmatmul.mubr.f32.gmra.mrb[0].mxu0 %v318
      %v1605 = vpop.f32.mrb[0].mxu0
      %v1606 = vadd.f32 0.0, %v1605
      %v1607 = vpop.f32.mrb[0].mxu0
      %v1608 = vadd.f32 0.0, %v1607
      %1609 = vmatprep.mubr.f32.mxu0 0.0
      %1610 = vmatmul.mubr.f32.gmra.mrb[0].mxu0 %v321
      %v1611 = vpop.f32.mrb[0].mxu0
      %v1612 = vadd.f32 0.0, %v1611
      %v1613 = vpop.f32.mrb[0].mxu0
      %v1614 = vadd.f32 0.0, %v1613
      %1615 = vmatprep.mubr.f32.mxu0 0.0
      %1616 = vmatmul.mubr.f32.gmra.mrb[0].mxu0 %v324
      %v1617 = vpop.f32.mrb[0].mxu0
      %v1618 = vadd.f32 0.0, %v1617
      %v1619 = vpop.f32.mrb[0].mxu0
      %v1620 = vadd.f32 0.0, %v1619
      %1621 = vmatprep.mubr.f32.mxu0 0.0
      %1622 = vmatmul.mubr.f32.gmra.mrb[0].mxu0 %v327
      %v1623 = vpop.f32.mrb[0].mxu0
      %v1624 = vadd.f32 0.0, %v1623
      %v1625 = vpop.f32.mrb[0].mxu0
      %v1626 = vadd.f32 0.0, %v1625
      %1627 = vmatprep.mubr.f32.mxu0 0.0
      %1628 = vmatmul.mubr.f32.gmra.mrb[0].mxu0 %v330
      %v1629 = vpop.f32.mrb[0].mxu0
      %v1630 = vadd.f32 0.0, %v1629
      %v1631 = vpop.f32.mrb[0].mxu0
      %v1632 = vadd.f32 0.0, %v1631
      %1633 = vmatprep.mubr.f32.mxu0 0.0
      %1634 = vmatmul.mubr.f32.gmra.mrb[0].mxu0 %v333
      %v1635 = vpop.f32.mrb[0].mxu0
      %v1636 = vadd.f32 0.0, %v1635
      %v1637 = vpop.f32.mrb[0].mxu0
      %v1638 = vadd.f32 0.0, %v1637
      %1639 = vmatprep.mubr.f32.mxu0 0.0
      %1640 = vmatmul.mubr.f32.gmra.mrb[0].mxu0 %v336
      %v1641 = vpop.f32.mrb[0].mxu0
      %v1642 = vadd.f32 0.0, %v1641
      %v1643 = vpop.f32.mrb[0].mxu0
      %v1644 = vadd.f32 0.0, %v1643
      %1645 = vmatprep.mubr.f32.mxu0 0.0
      %1646 = vmatmul.mubr.f32.gmra.mrb[0].mxu0 %v339
      %v1647 = vpop.f32.mrb[0].mxu0
      %v1648 = vadd.f32 0.0, %v1647
      %v1649 = vpop.f32.mrb[0].mxu0
      %v1650 = vadd.f32 0.0, %v1649
      %1651 = vmatprep.mubr.f32.mxu0 0.0
      %1652 = vmatmul.mubr.f32.gmra.mrb[0].mxu0 %v342
      %v1653 = vpop.f32.mrb[0].mxu0
      %v1654 = vadd.f32 0.0, %v1653
      %v1655 = vpop.f32.mrb[0].mxu0
      %v1656 = vadd.f32 0.0, %v1655
      %1657 = vmatprep.mubr.f32.mxu0 0.0
      %1658 = vmatmul.mubr.f32.gmra.mrb[0].mxu0 %v345
      %v1659 = vpop.f32.mrb[0].mxu0
      %v1660 = vadd.f32 0.0, %v1659
      %v1661 = vpop.f32.mrb[0].mxu0
      %v1662 = vadd.f32 0.0, %v1661
      %1663 = vmatprep.mubr.f32.mxu0 0.0
      %1664 = vmatmul.mubr.f32.gmra.mrb[0].mxu0 %v348
      %v1665 = vpop.f32.mrb[0].mxu0
      %v1666 = vadd.f32 0.0, %v1665
      %v1667 = vpop.f32.mrb[0].mxu0
      %v1668 = vadd.f32 0.0, %v1667
      %1669 = vmatprep.mubr.f32.mxu0 0.0
      %1670 = vmatmul.mubr.f32.gmra.mrb[0].mxu0 %v351
      %v1671 = vpop.f32.mrb[0].mxu0
      %v1672 = vadd.f32 0.0, %v1671
      %v1673 = vpop.f32.mrb[0].mxu0
      %v1674 = vadd.f32 0.0, %v1673
      %1675 = vmatprep.mubr.f32.mxu0 0.0
      %1676 = vmatmul.mubr.f32.gmra.mrb[0].mxu0 %v354
      %v1677 = vpop.f32.mrb[0].mxu0
      %v1678 = vadd.f32 0.0, %v1677
      %v1679 = vpop.f32.mrb[0].mxu0
      %v1680 = vadd.f32 0.0, %v1679
      %1681 = vmatprep.mubr.f32.mxu0 0.0
      %1682 = vmatmul.mubr.f32.gmra.mrb[0].mxu0 %v357
      %v1683 = vpop.f32.mrb[0].mxu0
      %v1684 = vadd.f32 0.0, %v1683
      %v1685 = vpop.f32.mrb[0].mxu0
      %v1686 = vadd.f32 0.0, %v1685
      %1687 = vmatprep.mubr.f32.mxu0 0.0
      %1688 = vmatmul.mubr.f32.gmra.mrb[0].mxu0 %v360
      %v1689 = vpop.f32.mrb[0].mxu0
      %v1690 = vadd.f32 0.0, %v1689
      %v1691 = vpop.f32.mrb[0].mxu0
      %v1692 = vadd.f32 0.0, %v1691
      %1693 = vmatprep.mubr.f32.mxu0 0.0
      %1694 = vmatmul.mubr.f32.gmra.mrb[0].mxu0 %v363
      %v1695 = vpop.f32.mrb[0].mxu0
      %v1696 = vadd.f32 0.0, %v1695
      %v1697 = vpop.f32.mrb[0].mxu0
      %v1698 = vadd.f32 0.0, %v1697
      %1699 = vmatprep.mubr.f32.mxu0 0.0
      %1700 = vmatmul.mubr.f32.gmra.mrb[0].mxu0 %v366
      %v1701 = vpop.f32.mrb[0].mxu0
      %v1702 = vadd.f32 0.0, %v1701
      %v1703 = vpop.f32.mrb[0].mxu0
      %v1704 = vadd.f32 0.0, %v1703
      %1705 = vmatprep.mubr.f32.mxu0 0.0
      %1706 = vmatmul.mubr.f32.gmra.mrb[0].mxu0 %v369
      %v1707 = vpop.f32.mrb[0].mxu0
      %v1708 = vadd.f32 0.0, %v1707
      %v1709 = vpop.f32.mrb[0].mxu0
      %v1710 = vadd.f32 0.0, %v1709
      %1711 = vmatprep.mubr.f32.mxu0 0.0
      %1712 = vmatmul.mubr.f32.gmra.mrb[0].mxu0 %v372
      %v1713 = vpop.f32.mrb[0].mxu0
      %v1714 = vadd.f32 0.0, %v1713
      %v1715 = vpop.f32.mrb[0].mxu0
      %v1716 = vadd.f32 0.0, %v1715
      %1717 = vmatprep.mubr.f32.mxu0 0.0
      %1718 = vmatmul.mubr.f32.gmra.mrb[0].mxu0 %v375
      %v1719 = vpop.f32.mrb[0].mxu0
      %v1720 = vadd.f32 0.0, %v1719
      %v1721 = vpop.f32.mrb[0].mxu0
      %v1722 = vadd.f32 0.0, %v1721
      %1723 = vdwg.mxu0
      %1724 = vmatprep.subr.mxu0 %v183
      %1725 = vmatpush1.msra.mxu0 %v182
      %1726 = vmatprep.subr.mxu0 0.0
      %1727 = vmatpush1.msra.mxu0 0.0
      %1728 = vmatprep.subr.mxu0 0.0
      %1729 = vmatpush1.msra.mxu0 0.0
      %1730 = vmatprep.subr.mxu0 0.0
      %1731 = vmatpush1.msra.mxu0 0.0
      %1732 = vmatprep.subr.mxu0 0.0
      %1733 = vmatpush1.msra.mxu0 0.0
      %1734 = vmatprep.subr.mxu0 0.0
      %1735 = vmatpush1.msra.mxu0 0.0
      %1736 = vmatprep.subr.mxu0 0.0
      %1737 = vmatpush1.msra.mxu0 0.0
      %1738 = vmatprep.subr.mxu0 0.0
      %1739 = vmatpush1.msra.mxu0 0.0
      %1740 = vmatprep.subr.mxu0 0.0
      %1741 = vmatpush1.msra.mxu0 0.0
      %1742 = vmatprep.subr.mxu0 0.0
      %1743 = vmatpush1.msra.mxu0 0.0
      %1744 = vmatprep.subr.mxu0 0.0
      %1745 = vmatpush1.msra.mxu0 0.0
      %1746 = vmatprep.subr.mxu0 0.0
      %1747 = vmatpush1.msra.mxu0 0.0
      %1748 = vmatprep.subr.mxu0 0.0
      %1749 = vmatpush1.msra.mxu0 0.0
      %1750 = vmatprep.subr.mxu0 0.0
      %1751 = vmatpush1.msra.mxu0 0.0
      %1752 = vmatprep.subr.mxu0 0.0
      %1753 = vmatpush1.msra.mxu0 0.0
      %1754 = vmatprep.subr.mxu0 0.0
      %1755 = vmatpush1.msra.mxu0 0.0
      %1756 = vmatprep.subr.mxu0 0.0
      %1757 = vmatpush1.msra.mxu0 0.0
      %1758 = vmatprep.subr.mxu0 0.0
      %1759 = vmatpush1.msra.mxu0 0.0
      %1760 = vmatprep.subr.mxu0 0.0
      %1761 = vmatpush1.msra.mxu0 0.0
      %1762 = vmatprep.subr.mxu0 0.0
      %1763 = vmatpush1.msra.mxu0 0.0
      %1764 = vmatprep.subr.mxu0 0.0
      %1765 = vmatpush1.msra.mxu0 0.0
      %1766 = vmatprep.subr.mxu0 0.0
      %1767 = vmatpush1.msra.mxu0 0.0
      %1768 = vmatprep.subr.mxu0 0.0
      %1769 = vmatpush1.msra.mxu0 0.0
      %1770 = vmatprep.subr.mxu0 0.0
      %1771 = vmatpush1.msra.mxu0 0.0
      %1772 = vmatprep.subr.mxu0 0.0
      %1773 = vmatpush1.msra.mxu0 0.0
      %1774 = vmatprep.subr.mxu0 0.0
      %1775 = vmatpush1.msra.mxu0 0.0
      %1776 = vmatprep.subr.mxu0 0.0
      %1777 = vmatpush1.msra.mxu0 0.0
      %1778 = vmatprep.subr.mxu0 0.0
      %1779 = vmatpush1.msra.mxu0 0.0
      %1780 = vmatprep.subr.mxu0 0.0
      %1781 = vmatpush1.msra.mxu0 0.0
      %1782 = vmatprep.subr.mxu0 0.0
      %1783 = vmatpush1.msra.mxu0 0.0
      %1784 = vmatprep.subr.mxu0 0.0
      %1785 = vmatpush1.msra.mxu0 0.0
      %1786 = vmatprep.subr.mxu0 0.0
      %1787 = vmatpush1.msra.mxu0 0.0
      %1788 = vmatprep.mubr.f32.mxu0 0.0
      %1789 = vmatmul.mubr.f32.gmra.mrb[0].mxu0 %v186
      %v1790 = vpop.f32.mrb[0].mxu0
      %v1791 = vadd.f32 0.0, %v1790
      %v1792 = vpop.f32.mrb[0].mxu0
      %v1793 = vadd.f32 0.0, %v1792
      %1794 = vmatprep.mubr.f32.mxu0 0.0
      %1795 = vmatmul.mubr.f32.gmra.mrb[0].mxu0 %v189
      %v1796 = vpop.f32.mrb[0].mxu0
      %v1797 = vadd.f32 0.0, %v1796
      %v1798 = vpop.f32.mrb[0].mxu0
      %v1799 = vadd.f32 0.0, %v1798
      %1800 = vmatprep.mubr.f32.mxu0 0.0
      %1801 = vmatmul.mubr.f32.gmra.mrb[0].mxu0 %v192
      %v1802 = vpop.f32.mrb[0].mxu0
      %v1803 = vadd.f32 0.0, %v1802
      %v1804 = vpop.f32.mrb[0].mxu0
      %v1805 = vadd.f32 0.0, %v1804
      %1806 = vmatprep.mubr.f32.mxu0 0.0
      %1807 = vmatmul.mubr.f32.gmra.mrb[0].mxu0 %v195
      %v1808 = vpop.f32.mrb[0].mxu0
      %v1809 = vadd.f32 0.0, %v1808
      %v1810 = vpop.f32.mrb[0].mxu0
      %v1811 = vadd.f32 0.0, %v1810
      %1812 = vmatprep.mubr.f32.mxu0 0.0
      %1813 = vmatmul.mubr.f32.gmra.mrb[0].mxu0 %v198
      %v1814 = vpop.f32.mrb[0].mxu0
      %v1815 = vadd.f32 0.0, %v1814
      %v1816 = vpop.f32.mrb[0].mxu0
      %v1817 = vadd.f32 0.0, %v1816
      %1818 = vmatprep.mubr.f32.mxu0 0.0
      %1819 = vmatmul.mubr.f32.gmra.mrb[0].mxu0 %v201
      %v1820 = vpop.f32.mrb[0].mxu0
      %v1821 = vadd.f32 0.0, %v1820
      %v1822 = vpop.f32.mrb[0].mxu0
      %v1823 = vadd.f32 0.0, %v1822
      %1824 = vmatprep.mubr.f32.mxu0 0.0
      %1825 = vmatmul.mubr.f32.gmra.mrb[0].mxu0 %v204
      %v1826 = vpop.f32.mrb[0].mxu0
      %v1827 = vadd.f32 0.0, %v1826
      %v1828 = vpop.f32.mrb[0].mxu0
      %v1829 = vadd.f32 0.0, %v1828
      %1830 = vmatprep.mubr.f32.mxu0 0.0
      %1831 = vmatmul.mubr.f32.gmra.mrb[0].mxu0 %v207
      %v1832 = vpop.f32.mrb[0].mxu0
      %v1833 = vadd.f32 0.0, %v1832
      %v1834 = vpop.f32.mrb[0].mxu0
      %v1835 = vadd.f32 0.0, %v1834
      %1836 = vmatprep.mubr.f32.mxu0 0.0
      %1837 = vmatmul.mubr.f32.gmra.mrb[0].mxu0 %v210
      %v1838 = vpop.f32.mrb[0].mxu0
      %v1839 = vadd.f32 0.0, %v1838
      %v1840 = vpop.f32.mrb[0].mxu0
      %v1841 = vadd.f32 0.0, %v1840
      %1842 = vmatprep.mubr.f32.mxu0 0.0
      %1843 = vmatmul.mubr.f32.gmra.mrb[0].mxu0 %v213
      %v1844 = vpop.f32.mrb[0].mxu0
      %v1845 = vadd.f32 0.0, %v1844
      %v1846 = vpop.f32.mrb[0].mxu0
      %v1847 = vadd.f32 0.0, %v1846
      %1848 = vmatprep.mubr.f32.mxu0 0.0
      %1849 = vmatmul.mubr.f32.gmra.mrb[0].mxu0 %v216
      %v1850 = vpop.f32.mrb[0].mxu0
      %v1851 = vadd.f32 0.0, %v1850
      %v1852 = vpop.f32.mrb[0].mxu0
      %v1853 = vadd.f32 0.0, %v1852
      %1854 = vmatprep.mubr.f32.mxu0 0.0
      %1855 = vmatmul.mubr.f32.gmra.mrb[0].mxu0 %v219
      %v1856 = vpop.f32.mrb[0].mxu0
      %v1857 = vadd.f32 0.0, %v1856
      %v1858 = vpop.f32.mrb[0].mxu0
      %v1859 = vadd.f32 0.0, %v1858
      %1860 = vmatprep.mubr.f32.mxu0 0.0
      %1861 = vmatmul.mubr.f32.gmra.mrb[0].mxu0 %v222
      %v1862 = vpop.f32.mrb[0].mxu0
      %v1863 = vadd.f32 0.0, %v1862
      %v1864 = vpop.f32.mrb[0].mxu0
      %v1865 = vadd.f32 0.0, %v1864
      %1866 = vmatprep.mubr.f32.mxu0 0.0
      %1867 = vmatmul.mubr.f32.gmra.mrb[0].mxu0 %v225
      %v1868 = vpop.f32.mrb[0].mxu0
      %v1869 = vadd.f32 0.0, %v1868
      %v1870 = vpop.f32.mrb[0].mxu0
      %v1871 = vadd.f32 0.0, %v1870
      %1872 = vmatprep.mubr.f32.mxu0 0.0
      %1873 = vmatmul.mubr.f32.gmra.mrb[0].mxu0 %v228
      %v1874 = vpop.f32.mrb[0].mxu0
      %v1875 = vadd.f32 0.0, %v1874
      %v1876 = vpop.f32.mrb[0].mxu0
      %v1877 = vadd.f32 0.0, %v1876
      %1878 = vmatprep.mubr.f32.mxu0 0.0
      %1879 = vmatmul.mubr.f32.gmra.mrb[0].mxu0 %v231
      %v1880 = vpop.f32.mrb[0].mxu0
      %v1881 = vadd.f32 0.0, %v1880
      %v1882 = vpop.f32.mrb[0].mxu0
      %v1883 = vadd.f32 0.0, %v1882
      %1884 = vmatprep.mubr.f32.mxu0 0.0
      %1885 = vmatmul.mubr.f32.gmra.mrb[0].mxu0 %v234
      %v1886 = vpop.f32.mrb[0].mxu0
      %v1887 = vadd.f32 0.0, %v1886
      %v1888 = vpop.f32.mrb[0].mxu0
      %v1889 = vadd.f32 0.0, %v1888
      %1890 = vmatprep.mubr.f32.mxu0 0.0
      %1891 = vmatmul.mubr.f32.gmra.mrb[0].mxu0 %v237
      %v1892 = vpop.f32.mrb[0].mxu0
      %v1893 = vadd.f32 0.0, %v1892
      %v1894 = vpop.f32.mrb[0].mxu0
      %v1895 = vadd.f32 0.0, %v1894
      %1896 = vmatprep.mubr.f32.mxu0 0.0
      %1897 = vmatmul.mubr.f32.gmra.mrb[0].mxu0 %v240
      %v1898 = vpop.f32.mrb[0].mxu0
      %v1899 = vadd.f32 0.0, %v1898
      %v1900 = vpop.f32.mrb[0].mxu0
      %v1901 = vadd.f32 0.0, %v1900
      %1902 = vmatprep.mubr.f32.mxu0 0.0
      %1903 = vmatmul.mubr.f32.gmra.mrb[0].mxu0 %v243
      %v1904 = vpop.f32.mrb[0].mxu0
      %v1905 = vadd.f32 0.0, %v1904
      %v1906 = vpop.f32.mrb[0].mxu0
      %v1907 = vadd.f32 0.0, %v1906
      %1908 = vmatprep.mubr.f32.mxu0 0.0
      %1909 = vmatmul.mubr.f32.gmra.mrb[0].mxu0 %v246
      %v1910 = vpop.f32.mrb[0].mxu0
      %v1911 = vadd.f32 0.0, %v1910
      %v1912 = vpop.f32.mrb[0].mxu0
      %v1913 = vadd.f32 0.0, %v1912
      %1914 = vmatprep.mubr.f32.mxu0 0.0
      %1915 = vmatmul.mubr.f32.gmra.mrb[0].mxu0 %v249
      %v1916 = vpop.f32.mrb[0].mxu0
      %v1917 = vadd.f32 0.0, %v1916
      %v1918 = vpop.f32.mrb[0].mxu0
      %v1919 = vadd.f32 0.0, %v1918
      %1920 = vmatprep.mubr.f32.mxu0 0.0
      %1921 = vmatmul.mubr.f32.gmra.mrb[0].mxu0 %v252
      %v1922 = vpop.f32.mrb[0].mxu0
      %v1923 = vadd.f32 0.0, %v1922
      %v1924 = vpop.f32.mrb[0].mxu0
      %v1925 = vadd.f32 0.0, %v1924
      %1926 = vmatprep.mubr.f32.mxu0 0.0
      %1927 = vmatmul.mubr.f32.gmra.mrb[0].mxu0 %v255
      %v1928 = vpop.f32.mrb[0].mxu0
      %v1929 = vadd.f32 0.0, %v1928
      %v1930 = vpop.f32.mrb[0].mxu0
      %v1931 = vadd.f32 0.0, %v1930
      %1932 = vmatprep.mubr.f32.mxu0 0.0
      %1933 = vmatmul.mubr.f32.gmra.mrb[0].mxu0 %v258
      %v1934 = vpop.f32.mrb[0].mxu0
      %v1935 = vadd.f32 0.0, %v1934
      %v1936 = vpop.f32.mrb[0].mxu0
      %v1937 = vadd.f32 0.0, %v1936
      %1938 = vmatprep.mubr.f32.mxu0 0.0
      %1939 = vmatmul.mubr.f32.gmra.mrb[0].mxu0 %v261
      %v1940 = vpop.f32.mrb[0].mxu0
      %v1941 = vadd.f32 0.0, %v1940
      %v1942 = vpop.f32.mrb[0].mxu0
      %v1943 = vadd.f32 0.0, %v1942
      %1944 = vmatprep.mubr.f32.mxu0 0.0
      %1945 = vmatmul.mubr.f32.gmra.mrb[0].mxu0 %v264
      %v1946 = vpop.f32.mrb[0].mxu0
      %v1947 = vadd.f32 0.0, %v1946
      %v1948 = vpop.f32.mrb[0].mxu0
      %v1949 = vadd.f32 0.0, %v1948
      %1950 = vmatprep.mubr.f32.mxu0 0.0
      %1951 = vmatmul.mubr.f32.gmra.mrb[0].mxu0 %v267
      %v1952 = vpop.f32.mrb[0].mxu0
      %v1953 = vadd.f32 0.0, %v1952
      %v1954 = vpop.f32.mrb[0].mxu0
      %v1955 = vadd.f32 0.0, %v1954
      %1956 = vmatprep.mubr.f32.mxu0 0.0
      %1957 = vmatmul.mubr.f32.gmra.mrb[0].mxu0 %v270
      %v1958 = vpop.f32.mrb[0].mxu0
      %v1959 = vadd.f32 0.0, %v1958
      %v1960 = vpop.f32.mrb[0].mxu0
      %v1961 = vadd.f32 0.0, %v1960
      %1962 = vmatprep.mubr.f32.mxu0 0.0
      %1963 = vmatmul.mubr.f32.gmra.mrb[0].mxu0 %v273
      %v1964 = vpop.f32.mrb[0].mxu0
      %v1965 = vadd.f32 0.0, %v1964
      %v1966 = vpop.f32.mrb[0].mxu0
      %v1967 = vadd.f32 0.0, %v1966
      %1968 = vmatprep.mubr.f32.mxu0 0.0
      %1969 = vmatmul.mubr.f32.gmra.mrb[0].mxu0 %v276
      %v1970 = vpop.f32.mrb[0].mxu0
      %v1971 = vadd.f32 0.0, %v1970
      %v1972 = vpop.f32.mrb[0].mxu0
      %v1973 = vadd.f32 0.0, %v1972
      %1974 = vmatprep.mubr.f32.mxu0 0.0
      %1975 = vmatmul.mubr.f32.gmra.mrb[0].mxu0 %v279
      %v1976 = vpop.f32.mrb[0].mxu0
      %v1977 = vadd.f32 0.0, %v1976
      %v1978 = vpop.f32.mrb[0].mxu0
      %v1979 = vadd.f32 0.0, %v1978
      %1980 = vmatprep.mubr.f32.mxu0 0.0
      %1981 = vmatmul.mubr.f32.gmra.mrb[0].mxu0 %v282
      %v1982 = vpop.f32.mrb[0].mxu0
      %v1983 = vadd.f32 0.0, %v1982
      %v1984 = vpop.f32.mrb[0].mxu0
      %v1985 = vadd.f32 0.0, %v1984
      %1986 = vmatprep.mubr.f32.mxu0 0.0
      %1987 = vmatmul.mubr.f32.gmra.mrb[0].mxu0 %v285
      %v1988 = vpop.f32.mrb[0].mxu0
      %v1989 = vadd.f32 0.0, %v1988
      %v1990 = vpop.f32.mrb[0].mxu0
      %v1991 = vadd.f32 0.0, %v1990
      %1992 = vmatprep.mubr.f32.mxu0 0.0
      %1993 = vmatmul.mubr.f32.gmra.mrb[0].mxu0 %v288
      %v1994 = vpop.f32.mrb[0].mxu0
      %v1995 = vadd.f32 0.0, %v1994
      %v1996 = vpop.f32.mrb[0].mxu0
      %v1997 = vadd.f32 0.0, %v1996
      %1998 = vmatprep.mubr.f32.mxu0 0.0
      %1999 = vmatmul.mubr.f32.gmra.mrb[0].mxu0 %v291
      %v2000 = vpop.f32.mrb[0].mxu0
      %v2001 = vadd.f32 0.0, %v2000
      %v2002 = vpop.f32.mrb[0].mxu0
      %v2003 = vadd.f32 0.0, %v2002
      %2004 = vmatprep.mubr.f32.mxu0 0.0
      %2005 = vmatmul.mubr.f32.gmra.mrb[0].mxu0 %v294
      %v2006 = vpop.f32.mrb[0].mxu0
      %v2007 = vadd.f32 0.0, %v2006
      %v2008 = vpop.f32.mrb[0].mxu0
      %v2009 = vadd.f32 0.0, %v2008
      %2010 = vmatprep.mubr.f32.mxu0 0.0
      %2011 = vmatmul.mubr.f32.gmra.mrb[0].mxu0 %v297
      %v2012 = vpop.f32.mrb[0].mxu0
      %v2013 = vadd.f32 0.0, %v2012
      %v2014 = vpop.f32.mrb[0].mxu0
      %v2015 = vadd.f32 0.0, %v2014
      %2016 = vmatprep.mubr.f32.mxu0 0.0
      %2017 = vmatmul.mubr.f32.gmra.mrb[0].mxu0 %v300
      %v2018 = vpop.f32.mrb[0].mxu0
      %v2019 = vadd.f32 0.0, %v2018
      %v2020 = vpop.f32.mrb[0].mxu0
      %v2021 = vadd.f32 0.0, %v2020
      %2022 = vmatprep.mubr.f32.mxu0 0.0
      %2023 = vmatmul.mubr.f32.gmra.mrb[0].mxu0 %v303
      %v2024 = vpop.f32.mrb[0].mxu0
      %v2025 = vadd.f32 0.0, %v2024
      %v2026 = vpop.f32.mrb[0].mxu0
      %v2027 = vadd.f32 0.0, %v2026
      %2028 = vmatprep.mubr.f32.mxu0 0.0
      %2029 = vmatmul.mubr.f32.gmra.mrb[0].mxu0 %v306
      %v2030 = vpop.f32.mrb[0].mxu0
      %v2031 = vadd.f32 0.0, %v2030
      %v2032 = vpop.f32.mrb[0].mxu0
      %v2033 = vadd.f32 0.0, %v2032
      %2034 = vmatprep.mubr.f32.mxu0 0.0
      %2035 = vmatmul.mubr.f32.gmra.mrb[0].mxu0 %v309
      %v2036 = vpop.f32.mrb[0].mxu0
      %v2037 = vadd.f32 0.0, %v2036
      %v2038 = vpop.f32.mrb[0].mxu0
      %v2039 = vadd.f32 0.0, %v2038
      %2040 = vmatprep.mubr.f32.mxu0 0.0
      %2041 = vmatmul.mubr.f32.gmra.mrb[0].mxu0 %v312
      %v2042 = vpop.f32.mrb[0].mxu0
      %v2043 = vadd.f32 0.0, %v2042
      %v2044 = vpop.f32.mrb[0].mxu0
      %v2045 = vadd.f32 0.0, %v2044
      %2046 = vmatprep.mubr.f32.mxu0 0.0
      %2047 = vmatmul.mubr.f32.gmra.mrb[0].mxu0 %v315
      %v2048 = vpop.f32.mrb[0].mxu0
      %v2049 = vadd.f32 0.0, %v2048
      %v2050 = vpop.f32.mrb[0].mxu0
      %v2051 = vadd.f32 0.0, %v2050
      %2052 = vmatprep.mubr.f32.mxu0 0.0
      %2053 = vmatmul.mubr.f32.gmra.mrb[0].mxu0 %v318
      %v2054 = vpop.f32.mrb[0].mxu0
      %v2055 = vadd.f32 0.0, %v2054
      %v2056 = vpop.f32.mrb[0].mxu0
      %v2057 = vadd.f32 0.0, %v2056
      %2058 = vmatprep.mubr.f32.mxu0 0.0
      %2059 = vmatmul.mubr.f32.gmra.mrb[0].mxu0 %v321
      %v2060 = vpop.f32.mrb[0].mxu0
      %v2061 = vadd.f32 0.0, %v2060
      %v2062 = vpop.f32.mrb[0].mxu0
      %v2063 = vadd.f32 0.0, %v2062
      %2064 = vmatprep.mubr.f32.mxu0 0.0
      %2065 = vmatmul.mubr.f32.gmra.mrb[0].mxu0 %v324
      %v2066 = vpop.f32.mrb[0].mxu0
      %v2067 = vadd.f32 0.0, %v2066
      %v2068 = vpop.f32.mrb[0].mxu0
      %v2069 = vadd.f32 0.0, %v2068
      %2070 = vmatprep.mubr.f32.mxu0 0.0
      %2071 = vmatmul.mubr.f32.gmra.mrb[0].mxu0 %v327
      %v2072 = vpop.f32.mrb[0].mxu0
      %v2073 = vadd.f32 0.0, %v2072
      %v2074 = vpop.f32.mrb[0].mxu0
      %v2075 = vadd.f32 0.0, %v2074
      %2076 = vmatprep.mubr.f32.mxu0 0.0
      %2077 = vmatmul.mubr.f32.gmra.mrb[0].mxu0 %v330
      %v2078 = vpop.f32.mrb[0].mxu0
      %v2079 = vadd.f32 0.0, %v2078
      %v2080 = vpop.f32.mrb[0].mxu0
      %v2081 = vadd.f32 0.0, %v2080
      %2082 = vmatprep.mubr.f32.mxu0 0.0
      %2083 = vmatmul.mubr.f32.gmra.mrb[0].mxu0 %v333
      %v2084 = vpop.f32.mrb[0].mxu0
      %v2085 = vadd.f32 0.0, %v2084
      %v2086 = vpop.f32.mrb[0].mxu0
      %v2087 = vadd.f32 0.0, %v2086
      %2088 = vmatprep.mubr.f32.mxu0 0.0
      %2089 = vmatmul.mubr.f32.gmra.mrb[0].mxu0 %v336
      %v2090 = vpop.f32.mrb[0].mxu0
      %v2091 = vadd.f32 0.0, %v2090
      %v2092 = vpop.f32.mrb[0].mxu0
      %v2093 = vadd.f32 0.0, %v2092
      %2094 = vmatprep.mubr.f32.mxu0 0.0
      %2095 = vmatmul.mubr.f32.gmra.mrb[0].mxu0 %v339
      %v2096 = vpop.f32.mrb[0].mxu0
      %v2097 = vadd.f32 0.0, %v2096
      %v2098 = vpop.f32.mrb[0].mxu0
      %v2099 = vadd.f32 0.0, %v2098
      %2100 = vmatprep.mubr.f32.mxu0 0.0
      %2101 = vmatmul.mubr.f32.gmra.mrb[0].mxu0 %v342
      %v2102 = vpop.f32.mrb[0].mxu0
      %v2103 = vadd.f32 0.0, %v2102
      %v2104 = vpop.f32.mrb[0].mxu0
      %v2105 = vadd.f32 0.0, %v2104
      %2106 = vmatprep.mubr.f32.mxu0 0.0
      %2107 = vmatmul.mubr.f32.gmra.mrb[0].mxu0 %v345
      %v2108 = vpop.f32.mrb[0].mxu0
      %v2109 = vadd.f32 0.0, %v2108
      %v2110 = vpop.f32.mrb[0].mxu0
      %v2111 = vadd.f32 0.0, %v2110
      %2112 = vmatprep.mubr.f32.mxu0 0.0
      %2113 = vmatmul.mubr.f32.gmra.mrb[0].mxu0 %v348
      %v2114 = vpop.f32.mrb[0].mxu0
      %v2115 = vadd.f32 0.0, %v2114
      %v2116 = vpop.f32.mrb[0].mxu0
      %v2117 = vadd.f32 0.0, %v2116
      %2118 = vmatprep.mubr.f32.mxu0 0.0
      %2119 = vmatmul.mubr.f32.gmra.mrb[0].mxu0 %v351
      %v2120 = vpop.f32.mrb[0].mxu0
      %v2121 = vadd.f32 0.0, %v2120
      %v2122 = vpop.f32.mrb[0].mxu0
      %v2123 = vadd.f32 0.0, %v2122
      %2124 = vmatprep.mubr.f32.mxu0 0.0
      %2125 = vmatmul.mubr.f32.gmra.mrb[0].mxu0 %v354
      %v2126 = vpop.f32.mrb[0].mxu0
      %v2127 = vadd.f32 0.0, %v2126
      %v2128 = vpop.f32.mrb[0].mxu0
      %v2129 = vadd.f32 0.0, %v2128
      %2130 = vmatprep.mubr.f32.mxu0 0.0
      %2131 = vmatmul.mubr.f32.gmra.mrb[0].mxu0 %v357
      %v2132 = vpop.f32.mrb[0].mxu0
      %v2133 = vadd.f32 0.0, %v2132
      %v2134 = vpop.f32.mrb[0].mxu0
      %v2135 = vadd.f32 0.0, %v2134
      %2136 = vmatprep.mubr.f32.mxu0 0.0
      %2137 = vmatmul.mubr.f32.gmra.mrb[0].mxu0 %v360
      %v2138 = vpop.f32.mrb[0].mxu0
      %v2139 = vadd.f32 0.0, %v2138
      %v2140 = vpop.f32.mrb[0].mxu0
      %v2141 = vadd.f32 0.0, %v2140
      %2142 = vmatprep.mubr.f32.mxu0 0.0
      %2143 = vmatmul.mubr.f32.gmra.mrb[0].mxu0 %v363
      %v2144 = vpop.f32.mrb[0].mxu0
      %v2145 = vadd.f32 0.0, %v2144
      %v2146 = vpop.f32.mrb[0].mxu0
      %v2147 = vadd.f32 0.0, %v2146
      %2148 = vmatprep.mubr.f32.mxu0 0.0
      %2149 = vmatmul.mubr.f32.gmra.mrb[0].mxu0 %v366
      %v2150 = vpop.f32.mrb[0].mxu0
      %v2151 = vadd.f32 0.0, %v2150
      %v2152 = vpop.f32.mrb[0].mxu0
      %v2153 = vadd.f32 0.0, %v2152
      %2154 = vmatprep.mubr.f32.mxu0 0.0
      %2155 = vmatmul.mubr.f32.gmra.mrb[0].mxu0 %v369
      %v2156 = vpop.f32.mrb[0].mxu0
      %v2157 = vadd.f32 0.0, %v2156
      %v2158 = vpop.f32.mrb[0].mxu0
      %v2159 = vadd.f32 0.0, %v2158
      %2160 = vmatprep.mubr.f32.mxu0 0.0
      %2161 = vmatmul.mubr.f32.gmra.mrb[0].mxu0 %v372
      %v2162 = vpop.f32.mrb[0].mxu0
      %v2163 = vadd.f32 0.0, %v2162
      %v2164 = vpop.f32.mrb[0].mxu0
      %v2165 = vadd.f32 0.0, %v2164
      %2166 = vmatprep.mubr.f32.mxu0 0.0
      %2167 = vmatmul.mubr.f32.gmra.mrb[0].mxu0 %v375
      %v2168 = vpop.f32.mrb[0].mxu0
      %v2169 = vadd.f32 0.0, %v2168
      %v2170 = vpop.f32.mrb[0].mxu0
      %v2171 = vadd.f32 0.0, %v2170
      %2172 = vdwg.mxu0
      %v2173 = vmin.f32 %v444, %v1342
      %v2174 = vmin.f32 %v446, %v1344
      %v2175 = vmin.f32 %v893, %v1791
      %v2176 = vmin.f32 %v895, %v1793
      %v2177 = vmin.f32 %v450, %v1348
      %v2178 = vmin.f32 %v452, %v1350
      %v2179 = vmin.f32 %v899, %v1797
      %v2180 = vmin.f32 %v901, %v1799
      %v2181 = vmin.f32 %v456, %v1354
      %v2182 = vmin.f32 %v458, %v1356
      %v2183 = vmin.f32 %v905, %v1803
      %v2184 = vmin.f32 %v907, %v1805
      %v2185 = vmin.f32 %v462, %v1360
      %v2186 = vmin.f32 %v464, %v1362
      %v2187 = vmin.f32 %v911, %v1809
      %v2188 = vmin.f32 %v913, %v1811
      %v2189 = vmin.f32 %v468, %v1366
      %v2190 = vmin.f32 %v470, %v1368
      %v2191 = vmin.f32 %v917, %v1815
      %v2192 = vmin.f32 %v919, %v1817
      %v2193 = vmin.f32 %v474, %v1372
      %v2194 = vmin.f32 %v476, %v1374
      %v2195 = vmin.f32 %v923, %v1821
      %v2196 = vmin.f32 %v925, %v1823
      %v2197 = vmin.f32 %v480, %v1378
      %v2198 = vmin.f32 %v482, %v1380
      %v2199 = vmin.f32 %v929, %v1827
      %v2200 = vmin.f32 %v931, %v1829
      %v2201 = vmin.f32 %v486, %v1384
      %v2202 = vmin.f32 %v488, %v1386
      %v2203 = vmin.f32 %v935, %v1833
      %v2204 = vmin.f32 %v937, %v1835
      %v2205 = vmin.f32 %v492, %v1390
      %v2206 = vmin.f32 %v494, %v1392
      %v2207 = vmin.f32 %v941, %v1839
      %v2208 = vmin.f32 %v943, %v1841
      %v2209 = vmin.f32 %v498, %v1396
      %v2210 = vmin.f32 %v500, %v1398
      %v2211 = vmin.f32 %v947, %v1845
      %v2212 = vmin.f32 %v949, %v1847
      %v2213 = vmin.f32 %v504, %v1402
      %v2214 = vmin.f32 %v506, %v1404
      %v2215 = vmin.f32 %v953, %v1851
      %v2216 = vmin.f32 %v955, %v1853
      %v2217 = vmin.f32 %v510, %v1408
      %v2218 = vmin.f32 %v512, %v1410
      %v2219 = vmin.f32 %v959, %v1857
      %v2220 = vmin.f32 %v961, %v1859
      %v2221 = vmin.f32 %v516, %v1414
      %v2222 = vmin.f32 %v518, %v1416
      %v2223 = vmin.f32 %v965, %v1863
      %v2224 = vmin.f32 %v967, %v1865
      %v2225 = vmin.f32 %v522, %v1420
      %v2226 = vmin.f32 %v524, %v1422
      %v2227 = vmin.f32 %v971, %v1869
      %v2228 = vmin.f32 %v973, %v1871
      %v2229 = vmin.f32 %v528, %v1426
      %v2230 = vmin.f32 %v530, %v1428
      %v2231 = vmin.f32 %v977, %v1875
      %v2232 = vmin.f32 %v979, %v1877
      %v2233 = vmin.f32 %v534, %v1432
      %v2234 = vmin.f32 %v536, %v1434
      %v2235 = vmin.f32 %v983, %v1881
      %v2236 = vmin.f32 %v985, %v1883
      %v2237 = vmin.f32 %v540, %v1438
      %v2238 = vmin.f32 %v542, %v1440
      %v2239 = vmin.f32 %v989, %v1887
      %v2240 = vmin.f32 %v991, %v1889
      %v2241 = vmin.f32 %v546, %v1444
      %v2242 = vmin.f32 %v548, %v1446
      %v2243 = vmin.f32 %v995, %v1893
      %v2244 = vmin.f32 %v997, %v1895
      %v2245 = vmin.f32 %v552, %v1450
      %v2246 = vmin.f32 %v554, %v1452
      %v2247 = vmin.f32 %v1001, %v1899
      %v2248 = vmin.f32 %v1003, %v1901
      %v2249 = vmin.f32 %v558, %v1456
      %v2250 = vmin.f32 %v560, %v1458
      %v2251 = vmin.f32 %v1007, %v1905
      %v2252 = vmin.f32 %v1009, %v1907
      %v2253 = vmin.f32 %v564, %v1462
      %v2254 = vmin.f32 %v566, %v1464
      %v2255 = vmin.f32 %v1013, %v1911
      %v2256 = vmin.f32 %v1015, %v1913
      %v2257 = vmin.f32 %v570, %v1468
      %v2258 = vmin.f32 %v572, %v1470
      %v2259 = vmin.f32 %v1019, %v1917
      %v2260 = vmin.f32 %v1021, %v1919
      %v2261 = vmin.f32 %v576, %v1474
      %v2262 = vmin.f32 %v578, %v1476
      %v2263 = vmin.f32 %v1025, %v1923
      %v2264 = vmin.f32 %v1027, %v1925
      %v2265 = vmin.f32 %v582, %v1480
      %v2266 = vmin.f32 %v584, %v1482
      %v2267 = vmin.f32 %v1031, %v1929
      %v2268 = vmin.f32 %v1033, %v1931
      %v2269 = vmin.f32 %v588, %v1486
      %v2270 = vmin.f32 %v590, %v1488
      %v2271 = vmin.f32 %v1037, %v1935
      %v2272 = vmin.f32 %v1039, %v1937
      %v2273 = vmin.f32 %v594, %v1492
      %v2274 = vmin.f32 %v596, %v1494
      %v2275 = vmin.f32 %v1043, %v1941
      %v2276 = vmin.f32 %v1045, %v1943
      %v2277 = vmin.f32 %v600, %v1498
      %v2278 = vmin.f32 %v602, %v1500
      %v2279 = vmin.f32 %v1049, %v1947
      %v2280 = vmin.f32 %v1051, %v1949
      %v2281 = vmin.f32 %v606, %v1504
      %v2282 = vmin.f32 %v608, %v1506
      %v2283 = vmin.f32 %v1055, %v1953
      %v2284 = vmin.f32 %v1057, %v1955
      %v2285 = vmin.f32 %v612, %v1510
      %v2286 = vmin.f32 %v614, %v1512
      %v2287 = vmin.f32 %v1061, %v1959
      %v2288 = vmin.f32 %v1063, %v1961
      %v2289 = vmin.f32 %v618, %v1516
      %v2290 = vmin.f32 %v620, %v1518
      %v2291 = vmin.f32 %v1067, %v1965
      %v2292 = vmin.f32 %v1069, %v1967
      %v2293 = vmin.f32 %v624, %v1522
      %v2294 = vmin.f32 %v626, %v1524
      %v2295 = vmin.f32 %v1073, %v1971
      %v2296 = vmin.f32 %v1075, %v1973
      %v2297 = vmin.f32 %v630, %v1528
      %v2298 = vmin.f32 %v632, %v1530
      %v2299 = vmin.f32 %v1079, %v1977
      %v2300 = vmin.f32 %v1081, %v1979
      %v2301 = vmin.f32 %v636, %v1534
      %v2302 = vmin.f32 %v638, %v1536
      %v2303 = vmin.f32 %v1085, %v1983
      %v2304 = vmin.f32 %v1087, %v1985
      %v2305 = vmin.f32 %v642, %v1540
      %v2306 = vmin.f32 %v644, %v1542
      %v2307 = vmin.f32 %v1091, %v1989
      %v2308 = vmin.f32 %v1093, %v1991
      %v2309 = vmin.f32 %v648, %v1546
      %v2310 = vmin.f32 %v650, %v1548
      %v2311 = vmin.f32 %v1097, %v1995
      %v2312 = vmin.f32 %v1099, %v1997
      %v2313 = vmin.f32 %v654, %v1552
      %v2314 = vmin.f32 %v656, %v1554
      %v2315 = vmin.f32 %v1103, %v2001
      %v2316 = vmin.f32 %v1105, %v2003
      %v2317 = vmin.f32 %v660, %v1558
      %v2318 = vmin.f32 %v662, %v1560
      %v2319 = vmin.f32 %v1109, %v2007
      %v2320 = vmin.f32 %v1111, %v2009
      %v2321 = vmin.f32 %v666, %v1564
      %v2322 = vmin.f32 %v668, %v1566
      %v2323 = vmin.f32 %v1115, %v2013
      %v2324 = vmin.f32 %v1117, %v2015
      %v2325 = vmin.f32 %v672, %v1570
      %v2326 = vmin.f32 %v674, %v1572
      %v2327 = vmin.f32 %v1121, %v2019
      %v2328 = vmin.f32 %v1123, %v2021
      %v2329 = vmin.f32 %v678, %v1576
      %v2330 = vmin.f32 %v680, %v1578
      %v2331 = vmin.f32 %v1127, %v2025
      %v2332 = vmin.f32 %v1129, %v2027
      %v2333 = vmin.f32 %v684, %v1582
      %v2334 = vmin.f32 %v686, %v1584
      %v2335 = vmin.f32 %v1133, %v2031
      %v2336 = vmin.f32 %v1135, %v2033
      %v2337 = vmin.f32 %v690, %v1588
      %v2338 = vmin.f32 %v692, %v1590
      %v2339 = vmin.f32 %v1139, %v2037
      %v2340 = vmin.f32 %v1141, %v2039
      %v2341 = vmin.f32 %v696, %v1594
      %v2342 = vmin.f32 %v698, %v1596
      %v2343 = vmin.f32 %v1145, %v2043
      %v2344 = vmin.f32 %v1147, %v2045
      %v2345 = vmin.f32 %v702, %v1600
      %v2346 = vmin.f32 %v704, %v1602
      %v2347 = vmin.f32 %v1151, %v2049
      %v2348 = vmin.f32 %v1153, %v2051
      %v2349 = vmin.f32 %v708, %v1606
      %v2350 = vmin.f32 %v710, %v1608
      %v2351 = vmin.f32 %v1157, %v2055
      %v2352 = vmin.f32 %v1159, %v2057
      %v2353 = vmin.f32 %v714, %v1612
      %v2354 = vmin.f32 %v716, %v1614
      %v2355 = vmin.f32 %v1163, %v2061
      %v2356 = vmin.f32 %v1165, %v2063
      %v2357 = vmin.f32 %v720, %v1618
      %v2358 = vmin.f32 %v722, %v1620
      %v2359 = vmin.f32 %v1169, %v2067
      %v2360 = vmin.f32 %v1171, %v2069
      %v2361 = vmin.f32 %v726, %v1624
      %v2362 = vmin.f32 %v728, %v1626
      %v2363 = vmin.f32 %v1175, %v2073
      %v2364 = vmin.f32 %v1177, %v2075
      %v2365 = vmin.f32 %v732, %v1630
      %v2366 = vmin.f32 %v734, %v1632
      %v2367 = vmin.f32 %v1181, %v2079
      %v2368 = vmin.f32 %v1183, %v2081
      %v2369 = vmin.f32 %v738, %v1636
      %v2370 = vmin.f32 %v740, %v1638
      %v2371 = vmin.f32 %v1187, %v2085
      %v2372 = vmin.f32 %v1189, %v2087
      %v2373 = vmin.f32 %v744, %v1642
      %v2374 = vmin.f32 %v746, %v1644
      %v2375 = vmin.f32 %v1193, %v2091
      %v2376 = vmin.f32 %v1195, %v2093
      %v2377 = vmin.f32 %v750, %v1648
      %v2378 = vmin.f32 %v752, %v1650
      %v2379 = vmin.f32 %v1199, %v2097
      %v2380 = vmin.f32 %v1201, %v2099
      %v2381 = vmin.f32 %v756, %v1654
      %v2382 = vmin.f32 %v758, %v1656
      %v2383 = vmin.f32 %v1205, %v2103
      %v2384 = vmin.f32 %v1207, %v2105
      %v2385 = vmin.f32 %v762, %v1660
      %v2386 = vmin.f32 %v764, %v1662
      %v2387 = vmin.f32 %v1211, %v2109
      %v2388 = vmin.f32 %v1213, %v2111
      %v2389 = vmin.f32 %v768, %v1666
      %v2390 = vmin.f32 %v770, %v1668
      %v2391 = vmin.f32 %v1217, %v2115
      %v2392 = vmin.f32 %v1219, %v2117
      %v2393 = vmin.f32 %v774, %v1672
      %v2394 = vmin.f32 %v776, %v1674
      %v2395 = vmin.f32 %v1223, %v2121
      %v2396 = vmin.f32 %v1225, %v2123
      %v2397 = vmin.f32 %v780, %v1678
      %v2398 = vmin.f32 %v782, %v1680
      %v2399 = vmin.f32 %v1229, %v2127
      %v2400 = vmin.f32 %v1231, %v2129
      %v2401 = vmin.f32 %v786, %v1684
      %v2402 = vmin.f32 %v788, %v1686
      %v2403 = vmin.f32 %v1235, %v2133
      %v2404 = vmin.f32 %v1237, %v2135
      %v2405 = vmin.f32 %v792, %v1690
      %v2406 = vmin.f32 %v794, %v1692
      %v2407 = vmin.f32 %v1241, %v2139
      %v2408 = vmin.f32 %v1243, %v2141
      %v2409 = vmin.f32 %v798, %v1696
      %v2410 = vmin.f32 %v800, %v1698
      %v2411 = vmin.f32 %v1247, %v2145
      %v2412 = vmin.f32 %v1249, %v2147
      %v2413 = vmin.f32 %v804, %v1702
      %v2414 = vmin.f32 %v806, %v1704
      %v2415 = vmin.f32 %v1253, %v2151
      %v2416 = vmin.f32 %v1255, %v2153
      %v2417 = vmin.f32 %v810, %v1708
      %v2418 = vmin.f32 %v812, %v1710
      %v2419 = vmin.f32 %v1259, %v2157
      %v2420 = vmin.f32 %v1261, %v2159
      %v2421 = vmin.f32 %v816, %v1714
      %v2422 = vmin.f32 %v818, %v1716
      %v2423 = vmin.f32 %v1265, %v2163
      %v2424 = vmin.f32 %v1267, %v2165
      %v2425 = vmin.f32 %v822, %v1720
      %v2426 = vmin.f32 %v824, %v1722
      %v2427 = vmin.f32 %v1271, %v2169
      %v2428 = vmin.f32 %v1273, %v2171
      %v2429 = vmin.f32 %v2173, %v2175
      %v2430 = vmin.f32 %v2174, %v2176
      %v2431 = vmin.f32 %v2177, %v2179
      %v2432 = vmin.f32 %v2178, %v2180
      %v2433 = vmin.f32 %v2181, %v2183
      %v2434 = vmin.f32 %v2182, %v2184
      %v2435 = vmin.f32 %v2185, %v2187
      %v2436 = vmin.f32 %v2186, %v2188
      %v2437 = vmin.f32 %v2189, %v2191
      %v2438 = vmin.f32 %v2190, %v2192
      %v2439 = vmin.f32 %v2193, %v2195
      %v2440 = vmin.f32 %v2194, %v2196
      %v2441 = vmin.f32 %v2197, %v2199
      %v2442 = vmin.f32 %v2198, %v2200
      %v2443 = vmin.f32 %v2201, %v2203
      %v2444 = vmin.f32 %v2202, %v2204
      %v2445 = vmin.f32 %v2205, %v2207
      %v2446 = vmin.f32 %v2206, %v2208
      %v2447 = vmin.f32 %v2209, %v2211
      %v2448 = vmin.f32 %v2210, %v2212
      %v2449 = vmin.f32 %v2213, %v2215
      %v2450 = vmin.f32 %v2214, %v2216
      %v2451 = vmin.f32 %v2217, %v2219
      %v2452 = vmin.f32 %v2218, %v2220
      %v2453 = vmin.f32 %v2221, %v2223
      %v2454 = vmin.f32 %v2222, %v2224
      %v2455 = vmin.f32 %v2225, %v2227
      %v2456 = vmin.f32 %v2226, %v2228
      %v2457 = vmin.f32 %v2229, %v2231
      %v2458 = vmin.f32 %v2230, %v2232
      %v2459 = vmin.f32 %v2233, %v2235
      %v2460 = vmin.f32 %v2234, %v2236
      %v2461 = vmin.f32 %v2237, %v2239
      %v2462 = vmin.f32 %v2238, %v2240
      %v2463 = vmin.f32 %v2241, %v2243
      %v2464 = vmin.f32 %v2242, %v2244
      %v2465 = vmin.f32 %v2245, %v2247
      %v2466 = vmin.f32 %v2246, %v2248
      %v2467 = vmin.f32 %v2249, %v2251
      %v2468 = vmin.f32 %v2250, %v2252
      %v2469 = vmin.f32 %v2253, %v2255
      %v2470 = vmin.f32 %v2254, %v2256
      %v2471 = vmin.f32 %v2257, %v2259
      %v2472 = vmin.f32 %v2258, %v2260
      %v2473 = vmin.f32 %v2261, %v2263
      %v2474 = vmin.f32 %v2262, %v2264
      %v2475 = vmin.f32 %v2265, %v2267
      %v2476 = vmin.f32 %v2266, %v2268
      %v2477 = vmin.f32 %v2269, %v2271
      %v2478 = vmin.f32 %v2270, %v2272
      %v2479 = vmin.f32 %v2273, %v2275
      %v2480 = vmin.f32 %v2274, %v2276
      %v2481 = vmin.f32 %v2277, %v2279
      %v2482 = vmin.f32 %v2278, %v2280
      %v2483 = vmin.f32 %v2281, %v2283
      %v2484 = vmin.f32 %v2282, %v2284
      %v2485 = vmin.f32 %v2285, %v2287
      %v2486 = vmin.f32 %v2286, %v2288
      %v2487 = vmin.f32 %v2289, %v2291
      %v2488 = vmin.f32 %v2290, %v2292
      %v2489 = vmin.f32 %v2293, %v2295
      %v2490 = vmin.f32 %v2294, %v2296
      %v2491 = vmin.f32 %v2297, %v2299
      %v2492 = vmin.f32 %v2298, %v2300
      %v2493 = vmin.f32 %v2301, %v2303
      %v2494 = vmin.f32 %v2302, %v2304
      %v2495 = vmin.f32 %v2305, %v2307
      %v2496 = vmin.f32 %v2306, %v2308
      %v2497 = vmin.f32 %v2309, %v2311
      %v2498 = vmin.f32 %v2310, %v2312
      %v2499 = vmin.f32 %v2313, %v2315
      %v2500 = vmin.f32 %v2314, %v2316
      %v2501 = vmin.f32 %v2317, %v2319
      %v2502 = vmin.f32 %v2318, %v2320
      %v2503 = vmin.f32 %v2321, %v2323
      %v2504 = vmin.f32 %v2322, %v2324
      %v2505 = vmin.f32 %v2325, %v2327
      %v2506 = vmin.f32 %v2326, %v2328
      %v2507 = vmin.f32 %v2329, %v2331
      %v2508 = vmin.f32 %v2330, %v2332
      %v2509 = vmin.f32 %v2333, %v2335
      %v2510 = vmin.f32 %v2334, %v2336
      %v2511 = vmin.f32 %v2337, %v2339
      %v2512 = vmin.f32 %v2338, %v2340
      %v2513 = vmin.f32 %v2341, %v2343
      %v2514 = vmin.f32 %v2342, %v2344
      %v2515 = vmin.f32 %v2345, %v2347
      %v2516 = vmin.f32 %v2346, %v2348
      %v2517 = vmin.f32 %v2349, %v2351
      %v2518 = vmin.f32 %v2350, %v2352
      %v2519 = vmin.f32 %v2353, %v2355
      %v2520 = vmin.f32 %v2354, %v2356
      %v2521 = vmin.f32 %v2357, %v2359
      %v2522 = vmin.f32 %v2358, %v2360
      %v2523 = vmin.f32 %v2361, %v2363
      %v2524 = vmin.f32 %v2362, %v2364
      %v2525 = vmin.f32 %v2365, %v2367
      %v2526 = vmin.f32 %v2366, %v2368
      %v2527 = vmin.f32 %v2369, %v2371
      %v2528 = vmin.f32 %v2370, %v2372
      %v2529 = vmin.f32 %v2373, %v2375
      %v2530 = vmin.f32 %v2374, %v2376
      %v2531 = vmin.f32 %v2377, %v2379
      %v2532 = vmin.f32 %v2378, %v2380
      %v2533 = vmin.f32 %v2381, %v2383
      %v2534 = vmin.f32 %v2382, %v2384
      %v2535 = vmin.f32 %v2385, %v2387
      %v2536 = vmin.f32 %v2386, %v2388
      %v2537 = vmin.f32 %v2389, %v2391
      %v2538 = vmin.f32 %v2390, %v2392
      %v2539 = vmin.f32 %v2393, %v2395
      %v2540 = vmin.f32 %v2394, %v2396
      %v2541 = vmin.f32 %v2397, %v2399
      %v2542 = vmin.f32 %v2398, %v2400
      %v2543 = vmin.f32 %v2401, %v2403
      %v2544 = vmin.f32 %v2402, %v2404
      %v2545 = vmin.f32 %v2405, %v2407
      %v2546 = vmin.f32 %v2406, %v2408
      %v2547 = vmin.f32 %v2409, %v2411
      %v2548 = vmin.f32 %v2410, %v2412
      %v2549 = vmin.f32 %v2413, %v2415
      %v2550 = vmin.f32 %v2414, %v2416
      %v2551 = vmin.f32 %v2417, %v2419
      %v2552 = vmin.f32 %v2418, %v2420
      %v2553 = vmin.f32 %v2421, %v2423
      %v2554 = vmin.f32 %v2422, %v2424
      %v2555 = vmin.f32 %v2425, %v2427
      %v2556 = vmin.f32 %v2426, %v2428
      %v2557 = vmin.f32 %v2429, %v2430
      %v2558 = vmin.f32 %v2431, %v2432
      %v2559 = vmin.f32 %v2433, %v2434
      %v2560 = vmin.f32 %v2435, %v2436
      %v2561 = vmin.f32 %v2437, %v2438
      %v2562 = vmin.f32 %v2439, %v2440
      %v2563 = vmin.f32 %v2441, %v2442
      %v2564 = vmin.f32 %v2443, %v2444
      %v2565 = vmin.f32 %v2445, %v2446
      %v2566 = vmin.f32 %v2447, %v2448
      %v2567 = vmin.f32 %v2449, %v2450
      %v2568 = vmin.f32 %v2451, %v2452
      %v2569 = vmin.f32 %v2453, %v2454
      %v2570 = vmin.f32 %v2455, %v2456
      %v2571 = vmin.f32 %v2457, %v2458
      %v2572 = vmin.f32 %v2459, %v2460
      %v2573 = vmin.f32 %v2461, %v2462
      %v2574 = vmin.f32 %v2463, %v2464
      %v2575 = vmin.f32 %v2465, %v2466
      %v2576 = vmin.f32 %v2467, %v2468
      %v2577 = vmin.f32 %v2469, %v2470
      %v2578 = vmin.f32 %v2471, %v2472
      %v2579 = vmin.f32 %v2473, %v2474
      %v2580 = vmin.f32 %v2475, %v2476
      %v2581 = vmin.f32 %v2477, %v2478
      %v2582 = vmin.f32 %v2479, %v2480
      %v2583 = vmin.f32 %v2481, %v2482
      %v2584 = vmin.f32 %v2483, %v2484
      %v2585 = vmin.f32 %v2485, %v2486
      %v2586 = vmin.f32 %v2487, %v2488
      %v2587 = vmin.f32 %v2489, %v2490
      %v2588 = vmin.f32 %v2491, %v2492
      %v2589 = vmin.f32 %v2493, %v2494
      %v2590 = vmin.f32 %v2495, %v2496
      %v2591 = vmin.f32 %v2497, %v2498
      %v2592 = vmin.f32 %v2499, %v2500
      %v2593 = vmin.f32 %v2501, %v2502
      %v2594 = vmin.f32 %v2503, %v2504
      %v2595 = vmin.f32 %v2505, %v2506
      %v2596 = vmin.f32 %v2507, %v2508
      %v2597 = vmin.f32 %v2509, %v2510
      %v2598 = vmin.f32 %v2511, %v2512
      %v2599 = vmin.f32 %v2513, %v2514
      %v2600 = vmin.f32 %v2515, %v2516
      %v2601 = vmin.f32 %v2517, %v2518
      %v2602 = vmin.f32 %v2519, %v2520
      %v2603 = vmin.f32 %v2521, %v2522
      %v2604 = vmin.f32 %v2523, %v2524
      %v2605 = vmin.f32 %v2525, %v2526
      %v2606 = vmin.f32 %v2527, %v2528
      %v2607 = vmin.f32 %v2529, %v2530
      %v2608 = vmin.f32 %v2531, %v2532
      %v2609 = vmin.f32 %v2533, %v2534
      %v2610 = vmin.f32 %v2535, %v2536
      %v2611 = vmin.f32 %v2537, %v2538
      %v2612 = vmin.f32 %v2539, %v2540
      %v2613 = vmin.f32 %v2541, %v2542
      %v2614 = vmin.f32 %v2543, %v2544
      %v2615 = vmin.f32 %v2545, %v2546
      %v2616 = vmin.f32 %v2547, %v2548
      %v2617 = vmin.f32 %v2549, %v2550
      %v2618 = vmin.f32 %v2551, %v2552
      %v2619 = vmin.f32 %v2553, %v2554
      %v2620 = vmin.f32 %v2555, %v2556
      %v2621 = vld [vmem:[#allocation2] sm:$0xff]
      %v2622 = vld [vmem:[#allocation2 + $0x8] sm:$0xff]
      %v2623 = vld [vmem:[#allocation2 + $0x10] sm:$0xff]
      %v2624 = vld [vmem:[#allocation2 + $0x18] sm:$0xff]
      %v2625 = vld [vmem:[#allocation2 + $0x20] sm:$0xff]
      %v2626 = vld [vmem:[#allocation2 + $0x28] sm:$0xff]
      %v2627 = vld [vmem:[#allocation2 + $0x30] sm:$0xff]
      %v2628 = vld [vmem:[#allocation2 + $0x38] sm:$0xff]
      %v2629 = vld [vmem:[#allocation2 + $0x40] sm:$0xff]
      %v2630 = vld [vmem:[#allocation2 + $0x48] sm:$0xff]
      %v2631 = vld [vmem:[#allocation2 + $0x50] sm:$0xff]
      %v2632 = vld [vmem:[#allocation2 + $0x58] sm:$0xff]
      %v2633 = vld [vmem:[#allocation2 + $0x60] sm:$0xff]
      %v2634 = vld [vmem:[#allocation2 + $0x68] sm:$0xff]
      %v2635 = vld [vmem:[#allocation2 + $0x70] sm:$0xff]
      %v2636 = vld [vmem:[#allocation2 + $0x78] sm:$0xff]
      %v2637 = vld [vmem:[#allocation2 + $0x80] sm:$0xff]
      %v2638 = vld [vmem:[#allocation2 + $0x88] sm:$0xff]
      %v2639 = vld [vmem:[#allocation2 + $0x90] sm:$0xff]
      %v2640 = vld [vmem:[#allocation2 + $0x98] sm:$0xff]
      %v2641 = vld [vmem:[#allocation2 + $0xa0] sm:$0xff]
      %v2642 = vld [vmem:[#allocation2 + $0xa8] sm:$0xff]
      %v2643 = vld [vmem:[#allocation2 + $0xb0] sm:$0xff]
      %v2644 = vld [vmem:[#allocation2 + $0xb8] sm:$0xff]
      %v2645 = vld [vmem:[#allocation2 + $0xc0] sm:$0xff]
      %v2646 = vld [vmem:[#allocation2 + $0xc8] sm:$0xff]
      %v2647 = vld [vmem:[#allocation2 + $0xd0] sm:$0xff]
      %v2648 = vld [vmem:[#allocation2 + $0xd8] sm:$0xff]
      %v2649 = vld [vmem:[#allocation2 + $0xe0] sm:$0xff]
      %v2650 = vld [vmem:[#allocation2 + $0xe8] sm:$0xff]
      %v2651 = vld [vmem:[#allocation2 + $0xf0] sm:$0xff]
      %v2652 = vld [vmem:[#allocation2 + $0xf8] sm:$0xff]
      %v2653 = vld [vmem:[#allocation2 + $0x100] sm:$0xff]
      %v2654 = vld [vmem:[#allocation2 + $0x108] sm:$0xff]
      %v2655 = vld [vmem:[#allocation2 + $0x110] sm:$0xff]
      %v2656 = vld [vmem:[#allocation2 + $0x118] sm:$0xff]
      %v2657 = vld [vmem:[#allocation2 + $0x120] sm:$0xff]
      %v2658 = vld [vmem:[#allocation2 + $0x128] sm:$0xff]
      %v2659 = vld [vmem:[#allocation2 + $0x130] sm:$0xff]
      %v2660 = vld [vmem:[#allocation2 + $0x138] sm:$0xff]
      %v2661 = vld [vmem:[#allocation2 + $0x140] sm:$0xff]
      %v2662 = vld [vmem:[#allocation2 + $0x148] sm:$0xff]
      %v2663 = vld [vmem:[#allocation2 + $0x150] sm:$0xff]
      %v2664 = vld [vmem:[#allocation2 + $0x158] sm:$0xff]
      %v2665 = vld [vmem:[#allocation2 + $0x160] sm:$0xff]
      %v2666 = vld [vmem:[#allocation2 + $0x168] sm:$0xff]
      %v2667 = vld [vmem:[#allocation2 + $0x170] sm:$0xff]
      %v2668 = vld [vmem:[#allocation2 + $0x178] sm:$0xff]
      %v2669 = vld [vmem:[#allocation2 + $0x180] sm:$0xff]
      %v2670 = vld [vmem:[#allocation2 + $0x188] sm:$0xff]
      %v2671 = vld [vmem:[#allocation2 + $0x190] sm:$0xff]
      %v2672 = vld [vmem:[#allocation2 + $0x198] sm:$0xff]
      %v2673 = vld [vmem:[#allocation2 + $0x1a0] sm:$0xff]
      %v2674 = vld [vmem:[#allocation2 + $0x1a8] sm:$0xff]
      %v2675 = vld [vmem:[#allocation2 + $0x1b0] sm:$0xff]
      %v2676 = vld [vmem:[#allocation2 + $0x1b8] sm:$0xff]
      %v2677 = vld [vmem:[#allocation2 + $0x1c0] sm:$0xff]
      %v2678 = vld [vmem:[#allocation2 + $0x1c8] sm:$0xff]
      %v2679 = vld [vmem:[#allocation2 + $0x1d0] sm:$0xff]
      %v2680 = vld [vmem:[#allocation2 + $0x1d8] sm:$0xff]
      %v2681 = vld [vmem:[#allocation2 + $0x1e0] sm:$0xff]
      %v2682 = vld [vmem:[#allocation2 + $0x1e8] sm:$0xff]
      %v2683 = vld [vmem:[#allocation2 + $0x1f0] sm:$0xff]
      %v2684 = vld [vmem:[#allocation2 + $0x1f8] sm:$0xff]
      %v2685 = vmin.f32 %v2621, %v2557
      %v2686 = vmin.f32 %v2622, %v2558
      %v2687 = vmin.f32 %v2623, %v2559
      %v2688 = vmin.f32 %v2624, %v2560
      %v2689 = vmin.f32 %v2625, %v2561
      %v2690 = vmin.f32 %v2626, %v2562
      %v2691 = vmin.f32 %v2627, %v2563
      %v2692 = vmin.f32 %v2628, %v2564
      %v2693 = vmin.f32 %v2629, %v2565
      %v2694 = vmin.f32 %v2630, %v2566
      %v2695 = vmin.f32 %v2631, %v2567
      %v2696 = vmin.f32 %v2632, %v2568
      %v2697 = vmin.f32 %v2633, %v2569
      %v2698 = vmin.f32 %v2634, %v2570
      %v2699 = vmin.f32 %v2635, %v2571
      %v2700 = vmin.f32 %v2636, %v2572
      %v2701 = vmin.f32 %v2637, %v2573
      %v2702 = vmin.f32 %v2638, %v2574
      %v2703 = vmin.f32 %v2639, %v2575
      %v2704 = vmin.f32 %v2640, %v2576
      %v2705 = vmin.f32 %v2641, %v2577
      %v2706 = vmin.f32 %v2642, %v2578
      %v2707 = vmin.f32 %v2643, %v2579
      %v2708 = vmin.f32 %v2644, %v2580
      %v2709 = vmin.f32 %v2645, %v2581
      %v2710 = vmin.f32 %v2646, %v2582
      %v2711 = vmin.f32 %v2647, %v2583
      %v2712 = vmin.f32 %v2648, %v2584
      %v2713 = vmin.f32 %v2649, %v2585
      %v2714 = vmin.f32 %v2650, %v2586
      %v2715 = vmin.f32 %v2651, %v2587
      %v2716 = vmin.f32 %v2652, %v2588
      %v2717 = vmin.f32 %v2653, %v2589
      %v2718 = vmin.f32 %v2654, %v2590
      %v2719 = vmin.f32 %v2655, %v2591
      %v2720 = vmin.f32 %v2656, %v2592
      %v2721 = vmin.f32 %v2657, %v2593
      %v2722 = vmin.f32 %v2658, %v2594
      %v2723 = vmin.f32 %v2659, %v2595
      %v2724 = vmin.f32 %v2660, %v2596
      %v2725 = vmin.f32 %v2661, %v2597
      %v2726 = vmin.f32 %v2662, %v2598
      %v2727 = vmin.f32 %v2663, %v2599
      %v2728 = vmin.f32 %v2664, %v2600
      %v2729 = vmin.f32 %v2665, %v2601
      %v2730 = vmin.f32 %v2666, %v2602
      %v2731 = vmin.f32 %v2667, %v2603
      %v2732 = vmin.f32 %v2668, %v2604
      %v2733 = vmin.f32 %v2669, %v2605
      %v2734 = vmin.f32 %v2670, %v2606
      %v2735 = vmin.f32 %v2671, %v2607
      %v2736 = vmin.f32 %v2672, %v2608
      %v2737 = vmin.f32 %v2673, %v2609
      %v2738 = vmin.f32 %v2674, %v2610
      %v2739 = vmin.f32 %v2675, %v2611
      %v2740 = vmin.f32 %v2676, %v2612
      %v2741 = vmin.f32 %v2677, %v2613
      %v2742 = vmin.f32 %v2678, %v2614
      %v2743 = vmin.f32 %v2679, %v2615
      %v2744 = vmin.f32 %v2680, %v2616
      %v2745 = vmin.f32 %v2681, %v2617
      %v2746 = vmin.f32 %v2682, %v2618
      %v2747 = vmin.f32 %v2683, %v2619
      %v2748 = vmin.f32 %v2684, %v2620
      %2749 = vst [vmem:[#allocation2] sm:$0xff] %v2685
      %2750 = vst [vmem:[#allocation2 + $0x8] sm:$0xff] %v2686
      %2751 = vst [vmem:[#allocation2 + $0x10] sm:$0xff] %v2687
      %2752 = vst [vmem:[#allocation2 + $0x18] sm:$0xff] %v2688
      %2753 = vst [vmem:[#allocation2 + $0x20] sm:$0xff] %v2689
      %2754 = vst [vmem:[#allocation2 + $0x28] sm:$0xff] %v2690
      %2755 = vst [vmem:[#allocation2 + $0x30] sm:$0xff] %v2691
      %2756 = vst [vmem:[#allocation2 + $0x38] sm:$0xff] %v2692
      %2757 = vst [vmem:[#allocation2 + $0x40] sm:$0xff] %v2693
      %2758 = vst [vmem:[#allocation2 + $0x48] sm:$0xff] %v2694
      %2759 = vst [vmem:[#allocation2 + $0x50] sm:$0xff] %v2695
      %2760 = vst [vmem:[#allocation2 + $0x58] sm:$0xff] %v2696
      %2761 = vst [vmem:[#allocation2 + $0x60] sm:$0xff] %v2697
      %2762 = vst [vmem:[#allocation2 + $0x68] sm:$0xff] %v2698
      %2763 = vst [vmem:[#allocation2 + $0x70] sm:$0xff] %v2699
      %2764 = vst [vmem:[#allocation2 + $0x78] sm:$0xff] %v2700
      %2765 = vst [vmem:[#allocation2 + $0x80] sm:$0xff] %v2701
      %2766 = vst [vmem:[#allocation2 + $0x88] sm:$0xff] %v2702
      %2767 = vst [vmem:[#allocation2 + $0x90] sm:$0xff] %v2703
      %2768 = vst [vmem:[#allocation2 + $0x98] sm:$0xff] %v2704
      %2769 = vst [vmem:[#allocation2 + $0xa0] sm:$0xff] %v2705
      %2770 = vst [vmem:[#allocation2 + $0xa8] sm:$0xff] %v2706
      %2771 = vst [vmem:[#allocation2 + $0xb0] sm:$0xff] %v2707
      %2772 = vst [vmem:[#allocation2 + $0xb8] sm:$0xff] %v2708
      %2773 = vst [vmem:[#allocation2 + $0xc0] sm:$0xff] %v2709
      %2774 = vst [vmem:[#allocation2 + $0xc8] sm:$0xff] %v2710
      %2775 = vst [vmem:[#allocation2 + $0xd0] sm:$0xff] %v2711
      %2776 = vst [vmem:[#allocation2 + $0xd8] sm:$0xff] %v2712
      %2777 = vst [vmem:[#allocation2 + $0xe0] sm:$0xff] %v2713
      %2778 = vst [vmem:[#allocation2 + $0xe8] sm:$0xff] %v2714
      %2779 = vst [vmem:[#allocation2 + $0xf0] sm:$0xff] %v2715
      %2780 = vst [vmem:[#allocation2 + $0xf8] sm:$0xff] %v2716
      %2781 = vst [vmem:[#allocation2 + $0x100] sm:$0xff] %v2717
      %2782 = vst [vmem:[#allocation2 + $0x108] sm:$0xff] %v2718
      %2783 = vst [vmem:[#allocation2 + $0x110] sm:$0xff] %v2719
      %2784 = vst [vmem:[#allocation2 + $0x118] sm:$0xff] %v2720
      %2785 = vst [vmem:[#allocation2 + $0x120] sm:$0xff] %v2721
      %2786 = vst [vmem:[#allocation2 + $0x128] sm:$0xff] %v2722
      %2787 = vst [vmem:[#allocation2 + $0x130] sm:$0xff] %v2723
      %2788 = vst [vmem:[#allocation2 + $0x138] sm:$0xff] %v2724
      %2789 = vst [vmem:[#allocation2 + $0x140] sm:$0xff] %v2725
      %2790 = vst [vmem:[#allocation2 + $0x148] sm:$0xff] %v2726
      %2791 = vst [vmem:[#allocation2 + $0x150] sm:$0xff] %v2727
      %2792 = vst [vmem:[#allocation2 + $0x158] sm:$0xff] %v2728
      %2793 = vst [vmem:[#allocation2 + $0x160] sm:$0xff] %v2729
      %2794 = vst [vmem:[#allocation2 + $0x168] sm:$0xff] %v2730
      %2795 = vst [vmem:[#allocation2 + $0x170] sm:$0xff] %v2731
      %2796 = vst [vmem:[#allocation2 + $0x178] sm:$0xff] %v2732
      %2797 = vst [vmem:[#allocation2 + $0x180] sm:$0xff] %v2733
      %2798 = vst [vmem:[#allocation2 + $0x188] sm:$0xff] %v2734
      %2799 = vst [vmem:[#allocation2 + $0x190] sm:$0xff] %v2735
      %2800 = vst [vmem:[#allocation2 + $0x198] sm:$0xff] %v2736
      %2801 = vst [vmem:[#allocation2 + $0x1a0] sm:$0xff] %v2737
      %2802 = vst [vmem:[#allocation2 + $0x1a8] sm:$0xff] %v2738
      %2803 = vst [vmem:[#allocation2 + $0x1b0] sm:$0xff] %v2739
      %2804 = vst [vmem:[#allocation2 + $0x1b8] sm:$0xff] %v2740
      %2805 = vst [vmem:[#allocation2 + $0x1c0] sm:$0xff] %v2741
      %2806 = vst [vmem:[#allocation2 + $0x1c8] sm:$0xff] %v2742
      %2807 = vst [vmem:[#allocation2 + $0x1d0] sm:$0xff] %v2743
      %2808 = vst [vmem:[#allocation2 + $0x1d8] sm:$0xff] %v2744
      %2809 = vst [vmem:[#allocation2 + $0x1e0] sm:$0xff] %v2745
      %2810 = vst [vmem:[#allocation2 + $0x1e8] sm:$0xff] %v2746
      %2811 = vst [vmem:[#allocation2 + $0x1f0] sm:$0xff] %v2747
      %2812 = vst [vmem:[#allocation2 + $0x1f8] sm:$0xff] %v2748
      %v2813 = vmin.f32 %v444, %v636
      %v2814 = vmin.f32 %v446, %v638
      %v2815 = vmin.f32 %v893, %v1085
      %v2816 = vmin.f32 %v895, %v1087
      %v2817 = vmin.f32 %v1342, %v1534
      %v2818 = vmin.f32 %v1344, %v1536
      %v2819 = vmin.f32 %v1791, %v1983
      %v2820 = vmin.f32 %v1793, %v1985
      %v2821 = vmin.f32 %v450, %v642
      %v2822 = vmin.f32 %v452, %v644
      %v2823 = vmin.f32 %v899, %v1091
      %v2824 = vmin.f32 %v901, %v1093
      %v2825 = vmin.f32 %v1348, %v1540
      %v2826 = vmin.f32 %v1350, %v1542
      %v2827 = vmin.f32 %v1797, %v1989
      %v2828 = vmin.f32 %v1799, %v1991
      %v2829 = vmin.f32 %v456, %v648
      %v2830 = vmin.f32 %v458, %v650
      %v2831 = vmin.f32 %v905, %v1097
      %v2832 = vmin.f32 %v907, %v1099
      %v2833 = vmin.f32 %v1354, %v1546
      %v2834 = vmin.f32 %v1356, %v1548
      %v2835 = vmin.f32 %v1803, %v1995
      %v2836 = vmin.f32 %v1805, %v1997
      %v2837 = vmin.f32 %v462, %v654
      %v2838 = vmin.f32 %v464, %v656
      %v2839 = vmin.f32 %v911, %v1103
      %v2840 = vmin.f32 %v913, %v1105
      %v2841 = vmin.f32 %v1360, %v1552
      %v2842 = vmin.f32 %v1362, %v1554
      %v2843 = vmin.f32 %v1809, %v2001
      %v2844 = vmin.f32 %v1811, %v2003
      %v2845 = vmin.f32 %v468, %v660
      %v2846 = vmin.f32 %v470, %v662
      %v2847 = vmin.f32 %v917, %v1109
      %v2848 = vmin.f32 %v919, %v1111
      %v2849 = vmin.f32 %v1366, %v1558
      %v2850 = vmin.f32 %v1368, %v1560
      %v2851 = vmin.f32 %v1815, %v2007
      %v2852 = vmin.f32 %v1817, %v2009
      %v2853 = vmin.f32 %v474, %v666
      %v2854 = vmin.f32 %v476, %v668
      %v2855 = vmin.f32 %v923, %v1115
      %v2856 = vmin.f32 %v925, %v1117
      %v2857 = vmin.f32 %v1372, %v1564
      %v2858 = vmin.f32 %v1374, %v1566
      %v2859 = vmin.f32 %v1821, %v2013
      %v2860 = vmin.f32 %v1823, %v2015
      %v2861 = vmin.f32 %v480, %v672
      %v2862 = vmin.f32 %v482, %v674
      %v2863 = vmin.f32 %v929, %v1121
      %v2864 = vmin.f32 %v931, %v1123
      %v2865 = vmin.f32 %v1378, %v1570
      %v2866 = vmin.f32 %v1380, %v1572
      %v2867 = vmin.f32 %v1827, %v2019
      %v2868 = vmin.f32 %v1829, %v2021
      %v2869 = vmin.f32 %v486, %v678
      %v2870 = vmin.f32 %v488, %v680
      %v2871 = vmin.f32 %v935, %v1127
      %v2872 = vmin.f32 %v937, %v1129
      %v2873 = vmin.f32 %v1384, %v1576
      %v2874 = vmin.f32 %v1386, %v1578
      %v2875 = vmin.f32 %v1833, %v2025
      %v2876 = vmin.f32 %v1835, %v2027
      %v2877 = vmin.f32 %v492, %v684
      %v2878 = vmin.f32 %v494, %v686
      %v2879 = vmin.f32 %v941, %v1133
      %v2880 = vmin.f32 %v943, %v1135
      %v2881 = vmin.f32 %v1390, %v1582
      %v2882 = vmin.f32 %v1392, %v1584
      %v2883 = vmin.f32 %v1839, %v2031
      %v2884 = vmin.f32 %v1841, %v2033
      %v2885 = vmin.f32 %v498, %v690
      %v2886 = vmin.f32 %v500, %v692
      %v2887 = vmin.f32 %v947, %v1139
      %v2888 = vmin.f32 %v949, %v1141
      %v2889 = vmin.f32 %v1396, %v1588
      %v2890 = vmin.f32 %v1398, %v1590
      %v2891 = vmin.f32 %v1845, %v2037
      %v2892 = vmin.f32 %v1847, %v2039
      %v2893 = vmin.f32 %v504, %v696
      %v2894 = vmin.f32 %v506, %v698
      %v2895 = vmin.f32 %v953, %v1145
      %v2896 = vmin.f32 %v955, %v1147
      %v2897 = vmin.f32 %v1402, %v1594
      %v2898 = vmin.f32 %v1404, %v1596
      %v2899 = vmin.f32 %v1851, %v2043
      %v2900 = vmin.f32 %v1853, %v2045
      %v2901 = vmin.f32 %v510, %v702
      %v2902 = vmin.f32 %v512, %v704
      %v2903 = vmin.f32 %v959, %v1151
      %v2904 = vmin.f32 %v961, %v1153
      %v2905 = vmin.f32 %v1408, %v1600
      %v2906 = vmin.f32 %v1410, %v1602
      %v2907 = vmin.f32 %v1857, %v2049
      %v2908 = vmin.f32 %v1859, %v2051
      %v2909 = vmin.f32 %v516, %v708
      %v2910 = vmin.f32 %v518, %v710
      %v2911 = vmin.f32 %v965, %v1157
      %v2912 = vmin.f32 %v967, %v1159
      %v2913 = vmin.f32 %v1414, %v1606
      %v2914 = vmin.f32 %v1416, %v1608
      %v2915 = vmin.f32 %v1863, %v2055
      %v2916 = vmin.f32 %v1865, %v2057
      %v2917 = vmin.f32 %v522, %v714
      %v2918 = vmin.f32 %v524, %v716
      %v2919 = vmin.f32 %v971, %v1163
      %v2920 = vmin.f32 %v973, %v1165
      %v2921 = vmin.f32 %v1420, %v1612
      %v2922 = vmin.f32 %v1422, %v1614
      %v2923 = vmin.f32 %v1869, %v2061
      %v2924 = vmin.f32 %v1871, %v2063
      %v2925 = vmin.f32 %v528, %v720
      %v2926 = vmin.f32 %v530, %v722
      %v2927 = vmin.f32 %v977, %v1169
      %v2928 = vmin.f32 %v979, %v1171
      %v2929 = vmin.f32 %v1426, %v1618
      %v2930 = vmin.f32 %v1428, %v1620
      %v2931 = vmin.f32 %v1875, %v2067
      %v2932 = vmin.f32 %v1877, %v2069
      %v2933 = vmin.f32 %v534, %v726
      %v2934 = vmin.f32 %v536, %v728
      %v2935 = vmin.f32 %v983, %v1175
      %v2936 = vmin.f32 %v985, %v1177
      %v2937 = vmin.f32 %v1432, %v1624
      %v2938 = vmin.f32 %v1434, %v1626
      %v2939 = vmin.f32 %v1881, %v2073
      %v2940 = vmin.f32 %v1883, %v2075
      %v2941 = vmin.f32 %v540, %v732
      %v2942 = vmin.f32 %v542, %v734
      %v2943 = vmin.f32 %v989, %v1181
      %v2944 = vmin.f32 %v991, %v1183
      %v2945 = vmin.f32 %v1438, %v1630
      %v2946 = vmin.f32 %v1440, %v1632
      %v2947 = vmin.f32 %v1887, %v2079
      %v2948 = vmin.f32 %v1889, %v2081
      %v2949 = vmin.f32 %v546, %v738
      %v2950 = vmin.f32 %v548, %v740
      %v2951 = vmin.f32 %v995, %v1187
      %v2952 = vmin.f32 %v997, %v1189
      %v2953 = vmin.f32 %v1444, %v1636
      %v2954 = vmin.f32 %v1446, %v1638
      %v2955 = vmin.f32 %v1893, %v2085
      %v2956 = vmin.f32 %v1895, %v2087
      %v2957 = vmin.f32 %v552, %v744
      %v2958 = vmin.f32 %v554, %v746
      %v2959 = vmin.f32 %v1001, %v1193
      %v2960 = vmin.f32 %v1003, %v1195
      %v2961 = vmin.f32 %v1450, %v1642
      %v2962 = vmin.f32 %v1452, %v1644
      %v2963 = vmin.f32 %v1899, %v2091
      %v2964 = vmin.f32 %v1901, %v2093
      %v2965 = vmin.f32 %v558, %v750
      %v2966 = vmin.f32 %v560, %v752
      %v2967 = vmin.f32 %v1007, %v1199
      %v2968 = vmin.f32 %v1009, %v1201
      %v2969 = vmin.f32 %v1456, %v1648
      %v2970 = vmin.f32 %v1458, %v1650
      %v2971 = vmin.f32 %v1905, %v2097
      %v2972 = vmin.f32 %v1907, %v2099
      %v2973 = vmin.f32 %v564, %v756
      %v2974 = vmin.f32 %v566, %v758
      %v2975 = vmin.f32 %v1013, %v1205
      %v2976 = vmin.f32 %v1015, %v1207
      %v2977 = vmin.f32 %v1462, %v1654
      %v2978 = vmin.f32 %v1464, %v1656
      %v2979 = vmin.f32 %v1911, %v2103
      %v2980 = vmin.f32 %v1913, %v2105
      %v2981 = vmin.f32 %v570, %v762
      %v2982 = vmin.f32 %v572, %v764
      %v2983 = vmin.f32 %v1019, %v1211
      %v2984 = vmin.f32 %v1021, %v1213
      %v2985 = vmin.f32 %v1468, %v1660
      %v2986 = vmin.f32 %v1470, %v1662
      %v2987 = vmin.f32 %v1917, %v2109
      %v2988 = vmin.f32 %v1919, %v2111
      %v2989 = vmin.f32 %v576, %v768
      %v2990 = vmin.f32 %v578, %v770
      %v2991 = vmin.f32 %v1025, %v1217
      %v2992 = vmin.f32 %v1027, %v1219
      %v2993 = vmin.f32 %v1474, %v1666
      %v2994 = vmin.f32 %v1476, %v1668
      %v2995 = vmin.f32 %v1923, %v2115
      %v2996 = vmin.f32 %v1925, %v2117
      %v2997 = vmin.f32 %v582, %v774
      %v2998 = vmin.f32 %v584, %v776
      %v2999 = vmin.f32 %v1031, %v1223
      %v3000 = vmin.f32 %v1033, %v1225
      %v3001 = vmin.f32 %v1480, %v1672
      %v3002 = vmin.f32 %v1482, %v1674
      %v3003 = vmin.f32 %v1929, %v2121
      %v3004 = vmin.f32 %v1931, %v2123
      %v3005 = vmin.f32 %v588, %v780
      %v3006 = vmin.f32 %v590, %v782
      %v3007 = vmin.f32 %v1037, %v1229
      %v3008 = vmin.f32 %v1039, %v1231
      %v3009 = vmin.f32 %v1486, %v1678
      %v3010 = vmin.f32 %v1488, %v1680
      %v3011 = vmin.f32 %v1935, %v2127
      %v3012 = vmin.f32 %v1937, %v2129
      %v3013 = vmin.f32 %v594, %v786
      %v3014 = vmin.f32 %v596, %v788
      %v3015 = vmin.f32 %v1043, %v1235
      %v3016 = vmin.f32 %v1045, %v1237
      %v3017 = vmin.f32 %v1492, %v1684
      %v3018 = vmin.f32 %v1494, %v1686
      %v3019 = vmin.f32 %v1941, %v2133
      %v3020 = vmin.f32 %v1943, %v2135
      %v3021 = vmin.f32 %v600, %v792
      %v3022 = vmin.f32 %v602, %v794
      %v3023 = vmin.f32 %v1049, %v1241
      %v3024 = vmin.f32 %v1051, %v1243
      %v3025 = vmin.f32 %v1498, %v1690
      %v3026 = vmin.f32 %v1500, %v1692
      %v3027 = vmin.f32 %v1947, %v2139
      %v3028 = vmin.f32 %v1949, %v2141
      %v3029 = vmin.f32 %v606, %v798
      %v3030 = vmin.f32 %v608, %v800
      %v3031 = vmin.f32 %v1055, %v1247
      %v3032 = vmin.f32 %v1057, %v1249
      %v3033 = vmin.f32 %v1504, %v1696
      %v3034 = vmin.f32 %v1506, %v1698
      %v3035 = vmin.f32 %v1953, %v2145
      %v3036 = vmin.f32 %v1955, %v2147
      %v3037 = vmin.f32 %v612, %v804
      %v3038 = vmin.f32 %v614, %v806
      %v3039 = vmin.f32 %v1061, %v1253
      %v3040 = vmin.f32 %v1063, %v1255
      %v3041 = vmin.f32 %v1510, %v1702
      %v3042 = vmin.f32 %v1512, %v1704
      %v3043 = vmin.f32 %v1959, %v2151
      %v3044 = vmin.f32 %v1961, %v2153
      %v3045 = vmin.f32 %v618, %v810
      %v3046 = vmin.f32 %v620, %v812
      %v3047 = vmin.f32 %v1067, %v1259
      %v3048 = vmin.f32 %v1069, %v1261
      %v3049 = vmin.f32 %v1516, %v1708
      %v3050 = vmin.f32 %v1518, %v1710
      %v3051 = vmin.f32 %v1965, %v2157
      %v3052 = vmin.f32 %v1967, %v2159
      %v3053 = vmin.f32 %v624, %v816
      %v3054 = vmin.f32 %v626, %v818
      %v3055 = vmin.f32 %v1073, %v1265
      %v3056 = vmin.f32 %v1075, %v1267
      %v3057 = vmin.f32 %v1522, %v1714
      %v3058 = vmin.f32 %v1524, %v1716
      %v3059 = vmin.f32 %v1971, %v2163
      %v3060 = vmin.f32 %v1973, %v2165
      %v3061 = vmin.f32 %v630, %v822
      %v3062 = vmin.f32 %v632, %v824
      %v3063 = vmin.f32 %v1079, %v1271
      %v3064 = vmin.f32 %v1081, %v1273
      %v3065 = vmin.f32 %v1528, %v1720
      %v3066 = vmin.f32 %v1530, %v1722
      %v3067 = vmin.f32 %v1977, %v2169
      %v3068 = vmin.f32 %v1979, %v2171
      %v3069 = vmin.f32 %v2813, %v2941
      %v3070 = vmin.f32 %v2814, %v2942
      %v3071 = vmin.f32 %v2815, %v2943
      %v3072 = vmin.f32 %v2816, %v2944
      %v3073 = vmin.f32 %v2817, %v2945
      %v3074 = vmin.f32 %v2818, %v2946
      %v3075 = vmin.f32 %v2819, %v2947
      %v3076 = vmin.f32 %v2820, %v2948
      %v3077 = vmin.f32 %v2821, %v2949
      %v3078 = vmin.f32 %v2822, %v2950
      %v3079 = vmin.f32 %v2823, %v2951
      %v3080 = vmin.f32 %v2824, %v2952
      %v3081 = vmin.f32 %v2825, %v2953
      %v3082 = vmin.f32 %v2826, %v2954
      %v3083 = vmin.f32 %v2827, %v2955
      %v3084 = vmin.f32 %v2828, %v2956
      %v3085 = vmin.f32 %v2829, %v2957
      %v3086 = vmin.f32 %v2830, %v2958
      %v3087 = vmin.f32 %v2831, %v2959
      %v3088 = vmin.f32 %v2832, %v2960
      %v3089 = vmin.f32 %v2833, %v2961
      %v3090 = vmin.f32 %v2834, %v2962
      %v3091 = vmin.f32 %v2835, %v2963
      %v3092 = vmin.f32 %v2836, %v2964
      %v3093 = vmin.f32 %v2837, %v2965
      %v3094 = vmin.f32 %v2838, %v2966
      %v3095 = vmin.f32 %v2839, %v2967
      %v3096 = vmin.f32 %v2840, %v2968
      %v3097 = vmin.f32 %v2841, %v2969
      %v3098 = vmin.f32 %v2842, %v2970
      %v3099 = vmin.f32 %v2843, %v2971
      %v3100 = vmin.f32 %v2844, %v2972
      %v3101 = vmin.f32 %v2845, %v2973
      %v3102 = vmin.f32 %v2846, %v2974
      %v3103 = vmin.f32 %v2847, %v2975
      %v3104 = vmin.f32 %v2848, %v2976
      %v3105 = vmin.f32 %v2849, %v2977
      %v3106 = vmin.f32 %v2850, %v2978
      %v3107 = vmin.f32 %v2851, %v2979
      %v3108 = vmin.f32 %v2852, %v2980
      %v3109 = vmin.f32 %v2853, %v2981
      %v3110 = vmin.f32 %v2854, %v2982
      %v3111 = vmin.f32 %v2855, %v2983
      %v3112 = vmin.f32 %v2856, %v2984
      %v3113 = vmin.f32 %v2857, %v2985
      %v3114 = vmin.f32 %v2858, %v2986
      %v3115 = vmin.f32 %v2859, %v2987
      %v3116 = vmin.f32 %v2860, %v2988
      %v3117 = vmin.f32 %v2861, %v2989
      %v3118 = vmin.f32 %v2862, %v2990
      %v3119 = vmin.f32 %v2863, %v2991
      %v3120 = vmin.f32 %v2864, %v2992
      %v3121 = vmin.f32 %v2865, %v2993
      %v3122 = vmin.f32 %v2866, %v2994
      %v3123 = vmin.f32 %v2867, %v2995
      %v3124 = vmin.f32 %v2868, %v2996
      %v3125 = vmin.f32 %v2869, %v2997
      %v3126 = vmin.f32 %v2870, %v2998
      %v3127 = vmin.f32 %v2871, %v2999
      %v3128 = vmin.f32 %v2872, %v3000
      %v3129 = vmin.f32 %v2873, %v3001
      %v3130 = vmin.f32 %v2874, %v3002
      %v3131 = vmin.f32 %v2875, %v3003
      %v3132 = vmin.f32 %v2876, %v3004
      %v3133 = vmin.f32 %v2877, %v3005
      %v3134 = vmin.f32 %v2878, %v3006
      %v3135 = vmin.f32 %v2879, %v3007
      %v3136 = vmin.f32 %v2880, %v3008
      %v3137 = vmin.f32 %v2881, %v3009
      %v3138 = vmin.f32 %v2882, %v3010
      %v3139 = vmin.f32 %v2883, %v3011
      %v3140 = vmin.f32 %v2884, %v3012
      %v3141 = vmin.f32 %v2885, %v3013
      %v3142 = vmin.f32 %v2886, %v3014
      %v3143 = vmin.f32 %v2887, %v3015
      %v3144 = vmin.f32 %v2888, %v3016
      %v3145 = vmin.f32 %v2889, %v3017
      %v3146 = vmin.f32 %v2890, %v3018
      %v3147 = vmin.f32 %v2891, %v3019
      %v3148 = vmin.f32 %v2892, %v3020
      %v3149 = vmin.f32 %v2893, %v3021
      %v3150 = vmin.f32 %v2894, %v3022
      %v3151 = vmin.f32 %v2895, %v3023
      %v3152 = vmin.f32 %v2896, %v3024
      %v3153 = vmin.f32 %v2897, %v3025
      %v3154 = vmin.f32 %v2898, %v3026
      %v3155 = vmin.f32 %v2899, %v3027
      %v3156 = vmin.f32 %v2900, %v3028
      %v3157 = vmin.f32 %v2901, %v3029
      %v3158 = vmin.f32 %v2902, %v3030
      %v3159 = vmin.f32 %v2903, %v3031
      %v3160 = vmin.f32 %v2904, %v3032
      %v3161 = vmin.f32 %v2905, %v3033
      %v3162 = vmin.f32 %v2906, %v3034
      %v3163 = vmin.f32 %v2907, %v3035
      %v3164 = vmin.f32 %v2908, %v3036
      %v3165 = vmin.f32 %v2909, %v3037
      %v3166 = vmin.f32 %v2910, %v3038
      %v3167 = vmin.f32 %v2911, %v3039
      %v3168 = vmin.f32 %v2912, %v3040
      %v3169 = vmin.f32 %v2913, %v3041
      %v3170 = vmin.f32 %v2914, %v3042
      %v3171 = vmin.f32 %v2915, %v3043
      %v3172 = vmin.f32 %v2916, %v3044
      %v3173 = vmin.f32 %v2917, %v3045
      %v3174 = vmin.f32 %v2918, %v3046
      %v3175 = vmin.f32 %v2919, %v3047
      %v3176 = vmin.f32 %v2920, %v3048
      %v3177 = vmin.f32 %v2921, %v3049
      %v3178 = vmin.f32 %v2922, %v3050
      %v3179 = vmin.f32 %v2923, %v3051
      %v3180 = vmin.f32 %v2924, %v3052
      %v3181 = vmin.f32 %v2925, %v3053
      %v3182 = vmin.f32 %v2926, %v3054
      %v3183 = vmin.f32 %v2927, %v3055
      %v3184 = vmin.f32 %v2928, %v3056
      %v3185 = vmin.f32 %v2929, %v3057
      %v3186 = vmin.f32 %v2930, %v3058
      %v3187 = vmin.f32 %v2931, %v3059
      %v3188 = vmin.f32 %v2932, %v3060
      %v3189 = vmin.f32 %v2933, %v3061
      %v3190 = vmin.f32 %v2934, %v3062
      %v3191 = vmin.f32 %v2935, %v3063
      %v3192 = vmin.f32 %v2936, %v3064
      %v3193 = vmin.f32 %v2937, %v3065
      %v3194 = vmin.f32 %v2938, %v3066
      %v3195 = vmin.f32 %v2939, %v3067
      %v3196 = vmin.f32 %v2940, %v3068
      %v3197 = vmin.f32 %v3069, %v3133
      %v3198 = vmin.f32 %v3070, %v3134
      %v3199 = vmin.f32 %v3071, %v3135
      %v3200 = vmin.f32 %v3072, %v3136
      %v3201 = vmin.f32 %v3073, %v3137
      %v3202 = vmin.f32 %v3074, %v3138
      %v3203 = vmin.f32 %v3075, %v3139
      %v3204 = vmin.f32 %v3076, %v3140
      %v3205 = vmin.f32 %v3077, %v3141
      %v3206 = vmin.f32 %v3078, %v3142
      %v3207 = vmin.f32 %v3079, %v3143
      %v3208 = vmin.f32 %v3080, %v3144
      %v3209 = vmin.f32 %v3081, %v3145
      %v3210 = vmin.f32 %v3082, %v3146
      %v3211 = vmin.f32 %v3083, %v3147
      %v3212 = vmin.f32 %v3084, %v3148
      %v3213 = vmin.f32 %v3085, %v3149
      %v3214 = vmin.f32 %v3086, %v3150
      %v3215 = vmin.f32 %v3087, %v3151
      %v3216 = vmin.f32 %v3088, %v3152
      %v3217 = vmin.f32 %v3089, %v3153
      %v3218 = vmin.f32 %v3090, %v3154
      %v3219 = vmin.f32 %v3091, %v3155
      %v3220 = vmin.f32 %v3092, %v3156
      %v3221 = vmin.f32 %v3093, %v3157
      %v3222 = vmin.f32 %v3094, %v3158
      %v3223 = vmin.f32 %v3095, %v3159
      %v3224 = vmin.f32 %v3096, %v3160
      %v3225 = vmin.f32 %v3097, %v3161
      %v3226 = vmin.f32 %v3098, %v3162
      %v3227 = vmin.f32 %v3099, %v3163
      %v3228 = vmin.f32 %v3100, %v3164
      %v3229 = vmin.f32 %v3101, %v3165
      %v3230 = vmin.f32 %v3102, %v3166
      %v3231 = vmin.f32 %v3103, %v3167
      %v3232 = vmin.f32 %v3104, %v3168
      %v3233 = vmin.f32 %v3105, %v3169
      %v3234 = vmin.f32 %v3106, %v3170
      %v3235 = vmin.f32 %v3107, %v3171
      %v3236 = vmin.f32 %v3108, %v3172
      %v3237 = vmin.f32 %v3109, %v3173
      %v3238 = vmin.f32 %v3110, %v3174
      %v3239 = vmin.f32 %v3111, %v3175
      %v3240 = vmin.f32 %v3112, %v3176
      %v3241 = vmin.f32 %v3113, %v3177
      %v3242 = vmin.f32 %v3114, %v3178
      %v3243 = vmin.f32 %v3115, %v3179
      %v3244 = vmin.f32 %v3116, %v3180
      %v3245 = vmin.f32 %v3117, %v3181
      %v3246 = vmin.f32 %v3118, %v3182
      %v3247 = vmin.f32 %v3119, %v3183
      %v3248 = vmin.f32 %v3120, %v3184
      %v3249 = vmin.f32 %v3121, %v3185
      %v3250 = vmin.f32 %v3122, %v3186
      %v3251 = vmin.f32 %v3123, %v3187
      %v3252 = vmin.f32 %v3124, %v3188
      %v3253 = vmin.f32 %v3125, %v3189
      %v3254 = vmin.f32 %v3126, %v3190
      %v3255 = vmin.f32 %v3127, %v3191
      %v3256 = vmin.f32 %v3128, %v3192
      %v3257 = vmin.f32 %v3129, %v3193
      %v3258 = vmin.f32 %v3130, %v3194
      %v3259 = vmin.f32 %v3131, %v3195
      %v3260 = vmin.f32 %v3132, %v3196
      %v3261 = vmin.f32 %v3197, %v3229
      %v3262 = vmin.f32 %v3198, %v3230
      %v3263 = vmin.f32 %v3199, %v3231
      %v3264 = vmin.f32 %v3200, %v3232
      %v3265 = vmin.f32 %v3201, %v3233
      %v3266 = vmin.f32 %v3202, %v3234
      %v3267 = vmin.f32 %v3203, %v3235
      %v3268 = vmin.f32 %v3204, %v3236
      %v3269 = vmin.f32 %v3205, %v3237
      %v3270 = vmin.f32 %v3206, %v3238
      %v3271 = vmin.f32 %v3207, %v3239
      %v3272 = vmin.f32 %v3208, %v3240
      %v3273 = vmin.f32 %v3209, %v3241
      %v3274 = vmin.f32 %v3210, %v3242
      %v3275 = vmin.f32 %v3211, %v3243
      %v3276 = vmin.f32 %v3212, %v3244
      %v3277 = vmin.f32 %v3213, %v3245
      %v3278 = vmin.f32 %v3214, %v3246
      %v3279 = vmin.f32 %v3215, %v3247
      %v3280 = vmin.f32 %v3216, %v3248
      %v3281 = vmin.f32 %v3217, %v3249
      %v3282 = vmin.f32 %v3218, %v3250
      %v3283 = vmin.f32 %v3219, %v3251
      %v3284 = vmin.f32 %v3220, %v3252
      %v3285 = vmin.f32 %v3221, %v3253
      %v3286 = vmin.f32 %v3222, %v3254
      %v3287 = vmin.f32 %v3223, %v3255
      %v3288 = vmin.f32 %v3224, %v3256
      %v3289 = vmin.f32 %v3225, %v3257
      %v3290 = vmin.f32 %v3226, %v3258
      %v3291 = vmin.f32 %v3227, %v3259
      %v3292 = vmin.f32 %v3228, %v3260
      %v3293 = vmin.f32 %v3261, %v3277
      %v3294 = vmin.f32 %v3262, %v3278
      %v3295 = vmin.f32 %v3263, %v3279
      %v3296 = vmin.f32 %v3264, %v3280
      %v3297 = vmin.f32 %v3265, %v3281
      %v3298 = vmin.f32 %v3266, %v3282
      %v3299 = vmin.f32 %v3267, %v3283
      %v3300 = vmin.f32 %v3268, %v3284
      %v3301 = vmin.f32 %v3269, %v3285
      %v3302 = vmin.f32 %v3270, %v3286
      %v3303 = vmin.f32 %v3271, %v3287
      %v3304 = vmin.f32 %v3272, %v3288
      %v3305 = vmin.f32 %v3273, %v3289
      %v3306 = vmin.f32 %v3274, %v3290
      %v3307 = vmin.f32 %v3275, %v3291
      %v3308 = vmin.f32 %v3276, %v3292
      %v3309 = vmin.f32 %v3293, %v3301
      %v3310 = vmin.f32 %v3294, %v3302
      %v3311 = vmin.f32 %v3295, %v3303
      %v3312 = vmin.f32 %v3296, %v3304
      %v3313 = vmin.f32 %v3297, %v3305
      %v3314 = vmin.f32 %v3298, %v3306
      %v3315 = vmin.f32 %v3299, %v3307
      %v3316 = vmin.f32 %v3300, %v3308
      %s3317 = smul.u32 0, 8
      %s3318 = smul.addr %s3317, 8
      %s3319 = scalar_lea.vmem [#allocation3], %s3318
      %v3320 = vld [vmem:[%s3319] sm:$0xff]
      %v3321 = vld [vmem:[%s3319 + $0x8] sm:$0xff]
      %v3322 = vld [vmem:[%s3319 + $0x10] sm:$0xff]
      %v3323 = vld [vmem:[%s3319 + $0x18] sm:$0xff]
      %v3324 = vld [vmem:[%s3319 + $0x20] sm:$0xff]
      %v3325 = vld [vmem:[%s3319 + $0x28] sm:$0xff]
      %v3326 = vld [vmem:[%s3319 + $0x30] sm:$0xff]
      %v3327 = vld [vmem:[%s3319 + $0x38] sm:$0xff]
      %v3328 = vmin.f32 %v3320, %v3309
      %v3329 = vmin.f32 %v3321, %v3310
      %v3330 = vmin.f32 %v3322, %v3311
      %v3331 = vmin.f32 %v3323, %v3312
      %v3332 = vmin.f32 %v3324, %v3313
      %v3333 = vmin.f32 %v3325, %v3314
      %v3334 = vmin.f32 %v3326, %v3315
      %v3335 = vmin.f32 %v3327, %v3316
      %3336 = vst [vmem:[%s3319] sm:$0xff] %v3328
      %3337 = vst [vmem:[%s3319 + $0x8] sm:$0xff] %v3329
      %3338 = vst [vmem:[%s3319 + $0x10] sm:$0xff] %v3330
      %3339 = vst [vmem:[%s3319 + $0x18] sm:$0xff] %v3331
      %3340 = vst [vmem:[%s3319 + $0x20] sm:$0xff] %v3332
      %3341 = vst [vmem:[%s3319 + $0x28] sm:$0xff] %v3333
      %3342 = vst [vmem:[%s3319 + $0x30] sm:$0xff] %v3334
      %3343 = vst [vmem:[%s3319 + $0x38] sm:$0xff] %v3335
    $region21: #{perceptual_hausdorff_loss.1} parent=1 // pred_fallthru
      _
    // Predicated region
    $region22: #{perceptual_hausdorff_loss.1} parent=1 // pred_check
      %p3344 = pneg %p24
    $region23: #{perceptual_hausdorff_loss.1} parent=1 // pred_check_branch
      %3346 = sbr.rel (%p3344) target = $region25
    $region24: #{perceptual_hausdorff_loss.1} parent=1 // pred_region
      %v3347 = vld [vmem:[#allocation2] sm:$0xff]
      %v3348 = vld [vmem:[#allocation2 + $0x8] sm:$0xff]
      %v3349 = vld [vmem:[#allocation2 + $0x10] sm:$0xff]
      %v3350 = vld [vmem:[#allocation2 + $0x18] sm:$0xff]
      %v3351 = vld [vmem:[#allocation2 + $0x20] sm:$0xff]
      %v3352 = vld [vmem:[#allocation2 + $0x28] sm:$0xff]
      %v3353 = vld [vmem:[#allocation2 + $0x30] sm:$0xff]
      %v3354 = vld [vmem:[#allocation2 + $0x38] sm:$0xff]
      %v3355 = vld [vmem:[#allocation2 + $0x40] sm:$0xff]
      %v3356 = vld [vmem:[#allocation2 + $0x48] sm:$0xff]
      %v3357 = vld [vmem:[#allocation2 + $0x50] sm:$0xff]
      %v3358 = vld [vmem:[#allocation2 + $0x58] sm:$0xff]
      %v3359 = vld [vmem:[#allocation2 + $0x60] sm:$0xff]
      %v3360 = vld [vmem:[#allocation2 + $0x68] sm:$0xff]
      %v3361 = vld [vmem:[#allocation2 + $0x70] sm:$0xff]
      %v3362 = vld [vmem:[#allocation2 + $0x78] sm:$0xff]
      %v3363 = vld [vmem:[#allocation2 + $0x80] sm:$0xff]
      %v3364 = vld [vmem:[#allocation2 + $0x88] sm:$0xff]
      %v3365 = vld [vmem:[#allocation2 + $0x90] sm:$0xff]
      %v3366 = vld [vmem:[#allocation2 + $0x98] sm:$0xff]
      %v3367 = vld [vmem:[#allocation2 + $0xa0] sm:$0xff]
      %v3368 = vld [vmem:[#allocation2 + $0xa8] sm:$0xff]
      %v3369 = vld [vmem:[#allocation2 + $0xb0] sm:$0xff]
      %v3370 = vld [vmem:[#allocation2 + $0xb8] sm:$0xff]
      %v3371 = vld [vmem:[#allocation2 + $0xc0] sm:$0xff]
      %v3372 = vld [vmem:[#allocation2 + $0xc8] sm:$0xff]
      %v3373 = vld [vmem:[#allocation2 + $0xd0] sm:$0xff]
      %v3374 = vld [vmem:[#allocation2 + $0xd8] sm:$0xff]
      %v3375 = vld [vmem:[#allocation2 + $0xe0] sm:$0xff]
      %v3376 = vld [vmem:[#allocation2 + $0xe8] sm:$0xff]
      %v3377 = vld [vmem:[#allocation2 + $0xf0] sm:$0xff]
      %v3378 = vld [vmem:[#allocation2 + $0xf8] sm:$0xff]
      %v3379 = vld [vmem:[#allocation2 + $0x100] sm:$0xff]
      %v3380 = vld [vmem:[#allocation2 + $0x108] sm:$0xff]
      %v3381 = vld [vmem:[#allocation2 + $0x110] sm:$0xff]
      %v3382 = vld [vmem:[#allocation2 + $0x118] sm:$0xff]
      %v3383 = vld [vmem:[#allocation2 + $0x120] sm:$0xff]
      %v3384 = vld [vmem:[#allocation2 + $0x128] sm:$0xff]
      %v3385 = vld [vmem:[#allocation2 + $0x130] sm:$0xff]
      %v3386 = vld [vmem:[#allocation2 + $0x138] sm:$0xff]
      %v3387 = vld [vmem:[#allocation2 + $0x140] sm:$0xff]
      %v3388 = vld [vmem:[#allocation2 + $0x148] sm:$0xff]
      %v3389 = vld [vmem:[#allocation2 + $0x150] sm:$0xff]
      %v3390 = vld [vmem:[#allocation2 + $0x158] sm:$0xff]
      %v3391 = vld [vmem:[#allocation2 + $0x160] sm:$0xff]
      %v3392 = vld [vmem:[#allocation2 + $0x168] sm:$0xff]
      %v3393 = vld [vmem:[#allocation2 + $0x170] sm:$0xff]
      %v3394 = vld [vmem:[#allocation2 + $0x178] sm:$0xff]
      %v3395 = vld [vmem:[#allocation2 + $0x180] sm:$0xff]
      %v3396 = vld [vmem:[#allocation2 + $0x188] sm:$0xff]
      %v3397 = vld [vmem:[#allocation2 + $0x190] sm:$0xff]
      %v3398 = vld [vmem:[#allocation2 + $0x198] sm:$0xff]
      %v3399 = vld [vmem:[#allocation2 + $0x1a0] sm:$0xff]
      %v3400 = vld [vmem:[#allocation2 + $0x1a8] sm:$0xff]
      %v3401 = vld [vmem:[#allocation2 + $0x1b0] sm:$0xff]
      %v3402 = vld [vmem:[#allocation2 + $0x1b8] sm:$0xff]
      %v3403 = vld [vmem:[#allocation2 + $0x1c0] sm:$0xff]
      %v3404 = vld [vmem:[#allocation2 + $0x1c8] sm:$0xff]
      %v3405 = vld [vmem:[#allocation2 + $0x1d0] sm:$0xff]
      %v3406 = vld [vmem:[#allocation2 + $0x1d8] sm:$0xff]
      %v3407 = vld [vmem:[#allocation2 + $0x1e0] sm:$0xff]
      %v3408 = vld [vmem:[#allocation2 + $0x1e8] sm:$0xff]
      %v3409 = vld [vmem:[#allocation2 + $0x1f0] sm:$0xff]
      %v3410 = vld [vmem:[#allocation2 + $0x1f8] sm:$0xff]
      %v3411 = vlaneseq
      %v3412 = vshrl.u32 %v3411, 7
      %v3413 = vadd.s32 %v3412, 8
      %v3414 = vadd.s32 %v3412, 16
      %v3415 = vadd.s32 %v3412, 24
      %v3416 = vadd.s32 %v3412, 32
      %v3417 = vadd.s32 %v3412, 40
      %v3418 = vadd.s32 %v3412, 48
      %v3419 = vadd.s32 %v3412, 56
      %v3420 = vadd.s32 %v3412, 64
      %v3421 = vadd.s32 %v3412, 72
      %v3422 = vadd.s32 %v3412, 80
      %v3423 = vadd.s32 %v3412, 88
      %v3424 = vadd.s32 %v3412, 96
      %v3425 = vadd.s32 %v3412, 104
      %v3426 = vadd.s32 %v3412, 112
      %v3427 = vadd.s32 %v3412, 120
      %v3428 = vadd.s32 %v3412, 128
      %v3429 = vadd.s32 %v3412, 136
      %v3430 = vadd.s32 %v3412, 144
      %v3431 = vadd.s32 %v3412, 152
      %v3432 = vadd.s32 %v3412, 160
      %v3433 = vadd.s32 %v3412, 168
      %v3434 = vadd.s32 %v3412, 176
      %v3435 = vadd.s32 %v3412, 184
      %v3436 = vadd.s32 %v3412, 192
      %v3437 = vadd.s32 %v3412, 200
      %v3438 = vadd.s32 %v3412, 208
      %v3439 = vadd.s32 %v3412, 216
      %v3440 = vadd.s32 %v3412, 224
      %v3441 = vadd.s32 %v3412, 232
      %v3442 = vadd.s32 %v3412, 240
      %v3443 = vadd.s32 %v3412, 248
      %v3444 = vadd.s32 %v3412, 256
      %v3445 = vadd.s32 %v3412, 264
      %v3446 = vadd.s32 %v3412, 272
      %v3447 = vadd.s32 %v3412, 280
      %v3448 = vadd.s32 %v3412, 288
      %v3449 = vadd.s32 %v3412, 296
      %v3450 = vadd.s32 %v3412, 304
      %v3451 = vadd.s32 %v3412, 312
      %v3452 = vadd.s32 %v3412, 320
      %v3453 = vadd.s32 %v3412, 328
      %v3454 = vadd.s32 %v3412, 336
      %v3455 = vadd.s32 %v3412, 344
      %v3456 = vadd.s32 %v3412, 352
      %v3457 = vadd.s32 %v3412, 360
      %v3458 = vadd.s32 %v3412, 368
      %v3459 = vadd.s32 %v3412, 376
      %v3460 = vadd.s32 %v3412, 384
      %v3461 = vadd.s32 %v3412, 392
      %v3462 = vadd.s32 %v3412, 400
      %v3463 = vadd.s32 %v3412, 408
      %v3464 = vadd.s32 %v3412, 416
      %v3465 = vadd.s32 %v3412, 424
      %v3466 = vadd.s32 %v3412, 432
      %v3467 = vadd.s32 %v3412, 440
      %v3468 = vadd.s32 %v3412, 448
      %v3469 = vadd.s32 %v3412, 456
      %v3470 = vadd.s32 %v3412, 464
      %v3471 = vadd.s32 %v3412, 472
      %v3472 = vadd.s32 %v3412, 480
      %v3473 = vadd.s32 %v3412, 488
      %v3474 = vadd.s32 %v3412, 496
      %v3475 = vadd.s32 %v3412, 504
      %v3476 = vstv %s21
      %v3477 = vadd.s32 %v3476, %v3412
      %v3478 = vadd.s32 %v3476, %v3413
      %v3479 = vadd.s32 %v3476, %v3414
      %v3480 = vadd.s32 %v3476, %v3415
      %v3481 = vadd.s32 %v3476, %v3416
      %v3482 = vadd.s32 %v3476, %v3417
      %v3483 = vadd.s32 %v3476, %v3418
      %v3484 = vadd.s32 %v3476, %v3419
      %v3485 = vadd.s32 %v3476, %v3420
      %v3486 = vadd.s32 %v3476, %v3421
      %v3487 = vadd.s32 %v3476, %v3422
      %v3488 = vadd.s32 %v3476, %v3423
      %v3489 = vadd.s32 %v3476, %v3424
      %v3490 = vadd.s32 %v3476, %v3425
      %v3491 = vadd.s32 %v3476, %v3426
      %v3492 = vadd.s32 %v3476, %v3427
      %v3493 = vadd.s32 %v3476, %v3428
      %v3494 = vadd.s32 %v3476, %v3429
      %v3495 = vadd.s32 %v3476, %v3430
      %v3496 = vadd.s32 %v3476, %v3431
      %v3497 = vadd.s32 %v3476, %v3432
      %v3498 = vadd.s32 %v3476, %v3433
      %v3499 = vadd.s32 %v3476, %v3434
      %v3500 = vadd.s32 %v3476, %v3435
      %v3501 = vadd.s32 %v3476, %v3436
      %v3502 = vadd.s32 %v3476, %v3437
      %v3503 = vadd.s32 %v3476, %v3438
      %v3504 = vadd.s32 %v3476, %v3439
      %v3505 = vadd.s32 %v3476, %v3440
      %v3506 = vadd.s32 %v3476, %v3441
      %v3507 = vadd.s32 %v3476, %v3442
      %v3508 = vadd.s32 %v3476, %v3443
      %v3509 = vadd.s32 %v3476, %v3444
      %v3510 = vadd.s32 %v3476, %v3445
      %v3511 = vadd.s32 %v3476, %v3446
      %v3512 = vadd.s32 %v3476, %v3447
      %v3513 = vadd.s32 %v3476, %v3448
      %v3514 = vadd.s32 %v3476, %v3449
      %v3515 = vadd.s32 %v3476, %v3450
      %v3516 = vadd.s32 %v3476, %v3451
      %v3517 = vadd.s32 %v3476, %v3452
      %v3518 = vadd.s32 %v3476, %v3453
      %v3519 = vadd.s32 %v3476, %v3454
      %v3520 = vadd.s32 %v3476, %v3455
      %v3521 = vadd.s32 %v3476, %v3456
      %v3522 = vadd.s32 %v3476, %v3457
      %v3523 = vadd.s32 %v3476, %v3458
      %v3524 = vadd.s32 %v3476, %v3459
      %v3525 = vadd.s32 %v3476, %v3460
      %v3526 = vadd.s32 %v3476, %v3461
      %v3527 = vadd.s32 %v3476, %v3462
      %v3528 = vadd.s32 %v3476, %v3463
      %v3529 = vadd.s32 %v3476, %v3464
      %v3530 = vadd.s32 %v3476, %v3465
      %v3531 = vadd.s32 %v3476, %v3466
      %v3532 = vadd.s32 %v3476, %v3467
      %v3533 = vadd.s32 %v3476, %v3468
      %v3534 = vadd.s32 %v3476, %v3469
      %v3535 = vadd.s32 %v3476, %v3470
      %v3536 = vadd.s32 %v3476, %v3471
      %v3537 = vadd.s32 %v3476, %v3472
      %v3538 = vadd.s32 %v3476, %v3473
      %v3539 = vadd.s32 %v3476, %v3474
      %v3540 = vadd.s32 %v3476, %v3475
      %v3541 = vstv %s19
      %vm3542 = vcmp.lt.s32.totalorder %v3477, %v3541
      %vm3543 = vcmp.lt.s32.totalorder %v3478, %v3541
      %vm3544 = vcmp.lt.s32.totalorder %v3479, %v3541
      %vm3545 = vcmp.lt.s32.totalorder %v3480, %v3541
      %vm3546 = vcmp.lt.s32.totalorder %v3481, %v3541
      %vm3547 = vcmp.lt.s32.totalorder %v3482, %v3541
      %vm3548 = vcmp.lt.s32.totalorder %v3483, %v3541
      %vm3549 = vcmp.lt.s32.totalorder %v3484, %v3541
      %vm3550 = vcmp.lt.s32.totalorder %v3485, %v3541
      %vm3551 = vcmp.lt.s32.totalorder %v3486, %v3541
      %vm3552 = vcmp.lt.s32.totalorder %v3487, %v3541
      %vm3553 = vcmp.lt.s32.totalorder %v3488, %v3541
      %vm3554 = vcmp.lt.s32.totalorder %v3489, %v3541
      %vm3555 = vcmp.lt.s32.totalorder %v3490, %v3541
      %vm3556 = vcmp.lt.s32.totalorder %v3491, %v3541
      %vm3557 = vcmp.lt.s32.totalorder %v3492, %v3541
      %vm3558 = vcmp.lt.s32.totalorder %v3493, %v3541
      %vm3559 = vcmp.lt.s32.totalorder %v3494, %v3541
      %vm3560 = vcmp.lt.s32.totalorder %v3495, %v3541
      %vm3561 = vcmp.lt.s32.totalorder %v3496, %v3541
      %vm3562 = vcmp.lt.s32.totalorder %v3497, %v3541
      %vm3563 = vcmp.lt.s32.totalorder %v3498, %v3541
      %vm3564 = vcmp.lt.s32.totalorder %v3499, %v3541
      %vm3565 = vcmp.lt.s32.totalorder %v3500, %v3541
      %vm3566 = vcmp.lt.s32.totalorder %v3501, %v3541
      %vm3567 = vcmp.lt.s32.totalorder %v3502, %v3541
      %vm3568 = vcmp.lt.s32.totalorder %v3503, %v3541
      %vm3569 = vcmp.lt.s32.totalorder %v3504, %v3541
      %vm3570 = vcmp.lt.s32.totalorder %v3505, %v3541
      %vm3571 = vcmp.lt.s32.totalorder %v3506, %v3541
      %vm3572 = vcmp.lt.s32.totalorder %v3507, %v3541
      %vm3573 = vcmp.lt.s32.totalorder %v3508, %v3541
      %vm3574 = vcmp.lt.s32.totalorder %v3509, %v3541
      %vm3575 = vcmp.lt.s32.totalorder %v3510, %v3541
      %vm3576 = vcmp.lt.s32.totalorder %v3511, %v3541
      %vm3577 = vcmp.lt.s32.totalorder %v3512, %v3541
      %vm3578 = vcmp.lt.s32.totalorder %v3513, %v3541
      %vm3579 = vcmp.lt.s32.totalorder %v3514, %v3541
      %vm3580 = vcmp.lt.s32.totalorder %v3515, %v3541
      %vm3581 = vcmp.lt.s32.totalorder %v3516, %v3541
      %vm3582 = vcmp.lt.s32.totalorder %v3517, %v3541
      %vm3583 = vcmp.lt.s32.totalorder %v3518, %v3541
      %vm3584 = vcmp.lt.s32.totalorder %v3519, %v3541
      %vm3585 = vcmp.lt.s32.totalorder %v3520, %v3541
      %vm3586 = vcmp.lt.s32.totalorder %v3521, %v3541
      %vm3587 = vcmp.lt.s32.totalorder %v3522, %v3541
      %vm3588 = vcmp.lt.s32.totalorder %v3523, %v3541
      %vm3589 = vcmp.lt.s32.totalorder %v3524, %v3541
      %vm3590 = vcmp.lt.s32.totalorder %v3525, %v3541
      %vm3591 = vcmp.lt.s32.totalorder %v3526, %v3541
      %vm3592 = vcmp.lt.s32.totalorder %v3527, %v3541
      %vm3593 = vcmp.lt.s32.totalorder %v3528, %v3541
      %vm3594 = vcmp.lt.s32.totalorder %v3529, %v3541
      %vm3595 = vcmp.lt.s32.totalorder %v3530, %v3541
      %vm3596 = vcmp.lt.s32.totalorder %v3531, %v3541
      %vm3597 = vcmp.lt.s32.totalorder %v3532, %v3541
      %vm3598 = vcmp.lt.s32.totalorder %v3533, %v3541
      %vm3599 = vcmp.lt.s32.totalorder %v3534, %v3541
      %vm3600 = vcmp.lt.s32.totalorder %v3535, %v3541
      %vm3601 = vcmp.lt.s32.totalorder %v3536, %v3541
      %vm3602 = vcmp.lt.s32.totalorder %v3537, %v3541
      %vm3603 = vcmp.lt.s32.totalorder %v3538, %v3541
      %vm3604 = vcmp.lt.s32.totalorder %v3539, %v3541
      %vm3605 = vcmp.lt.s32.totalorder %v3540, %v3541
      %v3606 = vsel %vm3542, 1, 0
      %v3607 = vsel %vm3543, 1, 0
      %v3608 = vsel %vm3544, 1, 0
      %v3609 = vsel %vm3545, 1, 0
      %v3610 = vsel %vm3546, 1, 0
      %v3611 = vsel %vm3547, 1, 0
      %v3612 = vsel %vm3548, 1, 0
      %v3613 = vsel %vm3549, 1, 0
      %v3614 = vsel %vm3550, 1, 0
      %v3615 = vsel %vm3551, 1, 0
      %v3616 = vsel %vm3552, 1, 0
      %v3617 = vsel %vm3553, 1, 0
      %v3618 = vsel %vm3554, 1, 0
      %v3619 = vsel %vm3555, 1, 0
      %v3620 = vsel %vm3556, 1, 0
      %v3621 = vsel %vm3557, 1, 0
      %v3622 = vsel %vm3558, 1, 0
      %v3623 = vsel %vm3559, 1, 0
      %v3624 = vsel %vm3560, 1, 0
      %v3625 = vsel %vm3561, 1, 0
      %v3626 = vsel %vm3562, 1, 0
      %v3627 = vsel %vm3563, 1, 0
      %v3628 = vsel %vm3564, 1, 0
      %v3629 = vsel %vm3565, 1, 0
      %v3630 = vsel %vm3566, 1, 0
      %v3631 = vsel %vm3567, 1, 0
      %v3632 = vsel %vm3568, 1, 0
      %v3633 = vsel %vm3569, 1, 0
      %v3634 = vsel %vm3570, 1, 0
      %v3635 = vsel %vm3571, 1, 0
      %v3636 = vsel %vm3572, 1, 0
      %v3637 = vsel %vm3573, 1, 0
      %v3638 = vsel %vm3574, 1, 0
      %v3639 = vsel %vm3575, 1, 0
      %v3640 = vsel %vm3576, 1, 0
      %v3641 = vsel %vm3577, 1, 0
      %v3642 = vsel %vm3578, 1, 0
      %v3643 = vsel %vm3579, 1, 0
      %v3644 = vsel %vm3580, 1, 0
      %v3645 = vsel %vm3581, 1, 0
      %v3646 = vsel %vm3582, 1, 0
      %v3647 = vsel %vm3583, 1, 0
      %v3648 = vsel %vm3584, 1, 0
      %v3649 = vsel %vm3585, 1, 0
      %v3650 = vsel %vm3586, 1, 0
      %v3651 = vsel %vm3587, 1, 0
      %v3652 = vsel %vm3588, 1, 0
      %v3653 = vsel %vm3589, 1, 0
      %v3654 = vsel %vm3590, 1, 0
      %v3655 = vsel %vm3591, 1, 0
      %v3656 = vsel %vm3592, 1, 0
      %v3657 = vsel %vm3593, 1, 0
      %v3658 = vsel %vm3594, 1, 0
      %v3659 = vsel %vm3595, 1, 0
      %v3660 = vsel %vm3596, 1, 0
      %v3661 = vsel %vm3597, 1, 0
      %v3662 = vsel %vm3598, 1, 0
      %v3663 = vsel %vm3599, 1, 0
      %v3664 = vsel %vm3600, 1, 0
      %v3665 = vsel %vm3601, 1, 0
      %v3666 = vsel %vm3602, 1, 0
      %v3667 = vsel %vm3603, 1, 0
      %v3668 = vsel %vm3604, 1, 0
      %v3669 = vsel %vm3605, 1, 0
      %vm3670 = vcmp.eq.s32.totalorder %v3606, 1
      %vm3671 = vcmp.eq.s32.totalorder %v3607, 1
      %vm3672 = vcmp.eq.s32.totalorder %v3608, 1
      %vm3673 = vcmp.eq.s32.totalorder %v3609, 1
      %vm3674 = vcmp.eq.s32.totalorder %v3610, 1
      %vm3675 = vcmp.eq.s32.totalorder %v3611, 1
      %vm3676 = vcmp.eq.s32.totalorder %v3612, 1
      %vm3677 = vcmp.eq.s32.totalorder %v3613, 1
      %vm3678 = vcmp.eq.s32.totalorder %v3614, 1
      %vm3679 = vcmp.eq.s32.totalorder %v3615, 1
      %vm3680 = vcmp.eq.s32.totalorder %v3616, 1
      %vm3681 = vcmp.eq.s32.totalorder %v3617, 1
      %vm3682 = vcmp.eq.s32.totalorder %v3618, 1
      %vm3683 = vcmp.eq.s32.totalorder %v3619, 1
      %vm3684 = vcmp.eq.s32.totalorder %v3620, 1
      %vm3685 = vcmp.eq.s32.totalorder %v3621, 1
      %vm3686 = vcmp.eq.s32.totalorder %v3622, 1
      %vm3687 = vcmp.eq.s32.totalorder %v3623, 1
      %vm3688 = vcmp.eq.s32.totalorder %v3624, 1
      %vm3689 = vcmp.eq.s32.totalorder %v3625, 1
      %vm3690 = vcmp.eq.s32.totalorder %v3626, 1
      %vm3691 = vcmp.eq.s32.totalorder %v3627, 1
      %vm3692 = vcmp.eq.s32.totalorder %v3628, 1
      %vm3693 = vcmp.eq.s32.totalorder %v3629, 1
      %vm3694 = vcmp.eq.s32.totalorder %v3630, 1
      %vm3695 = vcmp.eq.s32.totalorder %v3631, 1
      %vm3696 = vcmp.eq.s32.totalorder %v3632, 1
      %vm3697 = vcmp.eq.s32.totalorder %v3633, 1
      %vm3698 = vcmp.eq.s32.totalorder %v3634, 1
      %vm3699 = vcmp.eq.s32.totalorder %v3635, 1
      %vm3700 = vcmp.eq.s32.totalorder %v3636, 1
      %vm3701 = vcmp.eq.s32.totalorder %v3637, 1
      %vm3702 = vcmp.eq.s32.totalorder %v3638, 1
      %vm3703 = vcmp.eq.s32.totalorder %v3639, 1
      %vm3704 = vcmp.eq.s32.totalorder %v3640, 1
      %vm3705 = vcmp.eq.s32.totalorder %v3641, 1
      %vm3706 = vcmp.eq.s32.totalorder %v3642, 1
      %vm3707 = vcmp.eq.s32.totalorder %v3643, 1
      %vm3708 = vcmp.eq.s32.totalorder %v3644, 1
      %vm3709 = vcmp.eq.s32.totalorder %v3645, 1
      %vm3710 = vcmp.eq.s32.totalorder %v3646, 1
      %vm3711 = vcmp.eq.s32.totalorder %v3647, 1
      %vm3712 = vcmp.eq.s32.totalorder %v3648, 1
      %vm3713 = vcmp.eq.s32.totalorder %v3649, 1
      %vm3714 = vcmp.eq.s32.totalorder %v3650, 1
      %vm3715 = vcmp.eq.s32.totalorder %v3651, 1
      %vm3716 = vcmp.eq.s32.totalorder %v3652, 1
      %vm3717 = vcmp.eq.s32.totalorder %v3653, 1
      %vm3718 = vcmp.eq.s32.totalorder %v3654, 1
      %vm3719 = vcmp.eq.s32.totalorder %v3655, 1
      %vm3720 = vcmp.eq.s32.totalorder %v3656, 1
      %vm3721 = vcmp.eq.s32.totalorder %v3657, 1
      %vm3722 = vcmp.eq.s32.totalorder %v3658, 1
      %vm3723 = vcmp.eq.s32.totalorder %v3659, 1
      %vm3724 = vcmp.eq.s32.totalorder %v3660, 1
      %vm3725 = vcmp.eq.s32.totalorder %v3661, 1
      %vm3726 = vcmp.eq.s32.totalorder %v3662, 1
      %vm3727 = vcmp.eq.s32.totalorder %v3663, 1
      %vm3728 = vcmp.eq.s32.totalorder %v3664, 1
      %vm3729 = vcmp.eq.s32.totalorder %v3665, 1
      %vm3730 = vcmp.eq.s32.totalorder %v3666, 1
      %vm3731 = vcmp.eq.s32.totalorder %v3667, 1
      %vm3732 = vcmp.eq.s32.totalorder %v3668, 1
      %vm3733 = vcmp.eq.s32.totalorder %v3669, 1
      %v3734 = vsel %vm3670, %v3347, -1.0
      %v3735 = vsel %vm3671, %v3348, -1.0
      %v3736 = vsel %vm3672, %v3349, -1.0
      %v3737 = vsel %vm3673, %v3350, -1.0
      %v3738 = vsel %vm3674, %v3351, -1.0
      %v3739 = vsel %vm3675, %v3352, -1.0
      %v3740 = vsel %vm3676, %v3353, -1.0
      %v3741 = vsel %vm3677, %v3354, -1.0
      %v3742 = vsel %vm3678, %v3355, -1.0
      %v3743 = vsel %vm3679, %v3356, -1.0
      %v3744 = vsel %vm3680, %v3357, -1.0
      %v3745 = vsel %vm3681, %v3358, -1.0
      %v3746 = vsel %vm3682, %v3359, -1.0
      %v3747 = vsel %vm3683, %v3360, -1.0
      %v3748 = vsel %vm3684, %v3361, -1.0
      %v3749 = vsel %vm3685, %v3362, -1.0
      %v3750 = vsel %vm3686, %v3363, -1.0
      %v3751 = vsel %vm3687, %v3364, -1.0
      %v3752 = vsel %vm3688, %v3365, -1.0
      %v3753 = vsel %vm3689, %v3366, -1.0
      %v3754 = vsel %vm3690, %v3367, -1.0
      %v3755 = vsel %vm3691, %v3368, -1.0
      %v3756 = vsel %vm3692, %v3369, -1.0
      %v3757 = vsel %vm3693, %v3370, -1.0
      %v3758 = vsel %vm3694, %v3371, -1.0
      %v3759 = vsel %vm3695, %v3372, -1.0
      %v3760 = vsel %vm3696, %v3373, -1.0
      %v3761 = vsel %vm3697, %v3374, -1.0
      %v3762 = vsel %vm3698, %v3375, -1.0
      %v3763 = vsel %vm3699, %v3376, -1.0
      %v3764 = vsel %vm3700, %v3377, -1.0
      %v3765 = vsel %vm3701, %v3378, -1.0
      %v3766 = vsel %vm3702, %v3379, -1.0
      %v3767 = vsel %vm3703, %v3380, -1.0
      %v3768 = vsel %vm3704, %v3381, -1.0
      %v3769 = vsel %vm3705, %v3382, -1.0
      %v3770 = vsel %vm3706, %v3383, -1.0
      %v3771 = vsel %vm3707, %v3384, -1.0
      %v3772 = vsel %vm3708, %v3385, -1.0
      %v3773 = vsel %vm3709, %v3386, -1.0
      %v3774 = vsel %vm3710, %v3387, -1.0
      %v3775 = vsel %vm3711, %v3388, -1.0
      %v3776 = vsel %vm3712, %v3389, -1.0
      %v3777 = vsel %vm3713, %v3390, -1.0
      %v3778 = vsel %vm3714, %v3391, -1.0
      %v3779 = vsel %vm3715, %v3392, -1.0
      %v3780 = vsel %vm3716, %v3393, -1.0
      %v3781 = vsel %vm3717, %v3394, -1.0
      %v3782 = vsel %vm3718, %v3395, -1.0
      %v3783 = vsel %vm3719, %v3396, -1.0
      %v3784 = vsel %vm3720, %v3397, -1.0
      %v3785 = vsel %vm3721, %v3398, -1.0
      %v3786 = vsel %vm3722, %v3399, -1.0
      %v3787 = vsel %vm3723, %v3400, -1.0
      %v3788 = vsel %vm3724, %v3401, -1.0
      %v3789 = vsel %vm3725, %v3402, -1.0
      %v3790 = vsel %vm3726, %v3403, -1.0
      %v3791 = vsel %vm3727, %v3404, -1.0
      %v3792 = vsel %vm3728, %v3405, -1.0
      %v3793 = vsel %vm3729, %v3406, -1.0
      %v3794 = vsel %vm3730, %v3407, -1.0
      %v3795 = vsel %vm3731, %v3408, -1.0
      %v3796 = vsel %vm3732, %v3409, -1.0
      %v3797 = vsel %vm3733, %v3410, -1.0
      %3798 = vmin.xlane.f32.xlu0 %v3734
      %v3799 = vpop.xlane.xlu0 %3798
      %3800 = vmin.xlane.f32.xlu0 %v3735
      %v3801 = vpop.xlane.xlu0 %3800
      %3802 = vmin.xlane.f32.xlu0 %v3736
      %v3803 = vpop.xlane.xlu0 %3802
      %3804 = vmin.xlane.f32.xlu0 %v3737
      %v3805 = vpop.xlane.xlu0 %3804
      %3806 = vmin.xlane.f32.xlu0 %v3738
      %v3807 = vpop.xlane.xlu0 %3806
      %3808 = vmin.xlane.f32.xlu0 %v3739
      %v3809 = vpop.xlane.xlu0 %3808
      %3810 = vmin.xlane.f32.xlu0 %v3740
      %v3811 = vpop.xlane.xlu0 %3810
      %3812 = vmin.xlane.f32.xlu0 %v3741
      %v3813 = vpop.xlane.xlu0 %3812
      %3814 = vmin.xlane.f32.xlu0 %v3742
      %v3815 = vpop.xlane.xlu0 %3814
      %3816 = vmin.xlane.f32.xlu0 %v3743
      %v3817 = vpop.xlane.xlu0 %3816
      %3818 = vmin.xlane.f32.xlu0 %v3744
      %v3819 = vpop.xlane.xlu0 %3818
      %3820 = vmin.xlane.f32.xlu0 %v3745
      %v3821 = vpop.xlane.xlu0 %3820
      %3822 = vmin.xlane.f32.xlu0 %v3746
      %v3823 = vpop.xlane.xlu0 %3822
      %3824 = vmin.xlane.f32.xlu0 %v3747
      %v3825 = vpop.xlane.xlu0 %3824
      %3826 = vmin.xlane.f32.xlu0 %v3748
      %v3827 = vpop.xlane.xlu0 %3826
      %3828 = vmin.xlane.f32.xlu0 %v3749
      %v3829 = vpop.xlane.xlu0 %3828
      %3830 = vmin.xlane.f32.xlu0 %v3750
      %v3831 = vpop.xlane.xlu0 %3830
      %3832 = vmin.xlane.f32.xlu0 %v3751
      %v3833 = vpop.xlane.xlu0 %3832
      %3834 = vmin.xlane.f32.xlu0 %v3752
      %v3835 = vpop.xlane.xlu0 %3834
      %3836 = vmin.xlane.f32.xlu0 %v3753
      %v3837 = vpop.xlane.xlu0 %3836
      %3838 = vmin.xlane.f32.xlu0 %v3754
      %v3839 = vpop.xlane.xlu0 %3838
      %3840 = vmin.xlane.f32.xlu0 %v3755
      %v3841 = vpop.xlane.xlu0 %3840
      %3842 = vmin.xlane.f32.xlu0 %v3756
      %v3843 = vpop.xlane.xlu0 %3842
      %3844 = vmin.xlane.f32.xlu0 %v3757
      %v3845 = vpop.xlane.xlu0 %3844
      %3846 = vmin.xlane.f32.xlu0 %v3758
      %v3847 = vpop.xlane.xlu0 %3846
      %3848 = vmin.xlane.f32.xlu0 %v3759
      %v3849 = vpop.xlane.xlu0 %3848
      %3850 = vmin.xlane.f32.xlu0 %v3760
      %v3851 = vpop.xlane.xlu0 %3850
      %3852 = vmin.xlane.f32.xlu0 %v3761
      %v3853 = vpop.xlane.xlu0 %3852
      %3854 = vmin.xlane.f32.xlu0 %v3762
      %v3855 = vpop.xlane.xlu0 %3854
      %3856 = vmin.xlane.f32.xlu0 %v3763
      %v3857 = vpop.xlane.xlu0 %3856
      %3858 = vmin.xlane.f32.xlu0 %v3764
      %v3859 = vpop.xlane.xlu0 %3858
      %3860 = vmin.xlane.f32.xlu0 %v3765
      %v3861 = vpop.xlane.xlu0 %3860
      %3862 = vmin.xlane.f32.xlu0 %v3766
      %v3863 = vpop.xlane.xlu0 %3862
      %3864 = vmin.xlane.f32.xlu0 %v3767
      %v3865 = vpop.xlane.xlu0 %3864
      %3866 = vmin.xlane.f32.xlu0 %v3768
      %v3867 = vpop.xlane.xlu0 %3866
      %3868 = vmin.xlane.f32.xlu0 %v3769
      %v3869 = vpop.xlane.xlu0 %3868
      %3870 = vmin.xlane.f32.xlu0 %v3770
      %v3871 = vpop.xlane.xlu0 %3870
      %3872 = vmin.xlane.f32.xlu0 %v3771
      %v3873 = vpop.xlane.xlu0 %3872
      %3874 = vmin.xlane.f32.xlu0 %v3772
      %v3875 = vpop.xlane.xlu0 %3874
      %3876 = vmin.xlane.f32.xlu0 %v3773
      %v3877 = vpop.xlane.xlu0 %3876
      %3878 = vmin.xlane.f32.xlu0 %v3774
      %v3879 = vpop.xlane.xlu0 %3878
      %3880 = vmin.xlane.f32.xlu0 %v3775
      %v3881 = vpop.xlane.xlu0 %3880
      %3882 = vmin.xlane.f32.xlu0 %v3776
      %v3883 = vpop.xlane.xlu0 %3882
      %3884 = vmin.xlane.f32.xlu0 %v3777
      %v3885 = vpop.xlane.xlu0 %3884
      %3886 = vmin.xlane.f32.xlu0 %v3778
      %v3887 = vpop.xlane.xlu0 %3886
      %3888 = vmin.xlane.f32.xlu0 %v3779
      %v3889 = vpop.xlane.xlu0 %3888
      %3890 = vmin.xlane.f32.xlu0 %v3780
      %v3891 = vpop.xlane.xlu0 %3890
      %3892 = vmin.xlane.f32.xlu0 %v3781
      %v3893 = vpop.xlane.xlu0 %3892
      %3894 = vmin.xlane.f32.xlu0 %v3782
      %v3895 = vpop.xlane.xlu0 %3894
      %3896 = vmin.xlane.f32.xlu0 %v3783
      %v3897 = vpop.xlane.xlu0 %3896
      %3898 = vmin.xlane.f32.xlu0 %v3784
      %v3899 = vpop.xlane.xlu0 %3898
      %3900 = vmin.xlane.f32.xlu0 %v3785
      %v3901 = vpop.xlane.xlu0 %3900
      %3902 = vmin.xlane.f32.xlu0 %v3786
      %v3903 = vpop.xlane.xlu0 %3902
      %3904 = vmin.xlane.f32.xlu0 %v3787
      %v3905 = vpop.xlane.xlu0 %3904
      %3906 = vmin.xlane.f32.xlu0 %v3788
      %v3907 = vpop.xlane.xlu0 %3906
      %3908 = vmin.xlane.f32.xlu0 %v3789
      %v3909 = vpop.xlane.xlu0 %3908
      %3910 = vmin.xlane.f32.xlu0 %v3790
      %v3911 = vpop.xlane.xlu0 %3910
      %3912 = vmin.xlane.f32.xlu0 %v3791
      %v3913 = vpop.xlane.xlu0 %3912
      %3914 = vmin.xlane.f32.xlu0 %v3792
      %v3915 = vpop.xlane.xlu0 %3914
      %3916 = vmin.xlane.f32.xlu0 %v3793
      %v3917 = vpop.xlane.xlu0 %3916
      %3918 = vmin.xlane.f32.xlu0 %v3794
      %v3919 = vpop.xlane.xlu0 %3918
      %3920 = vmin.xlane.f32.xlu0 %v3795
      %v3921 = vpop.xlane.xlu0 %3920
      %3922 = vmin.xlane.f32.xlu0 %v3796
      %v3923 = vpop.xlane.xlu0 %3922
      %3924 = vmin.xlane.f32.xlu0 %v3797
      %v3925 = vpop.xlane.xlu0 %3924
      %v3926 = vmax.f32 %v3799, %v3807
      %v3927 = vmax.f32 %v3801, %v3809
      %v3928 = vmax.f32 %v3803, %v3811
      %v3929 = vmax.f32 %v3805, %v3813
      %v3930 = vmax.f32 %v3926, %v3815
      %v3931 = vmax.f32 %v3927, %v3817
      %v3932 = vmax.f32 %v3928, %v3819
      %v3933 = vmax.f32 %v3929, %v3821
      %v3934 = vmax.f32 %v3930, %v3823
      %v3935 = vmax.f32 %v3931, %v3825
      %v3936 = vmax.f32 %v3932, %v3827
      %v3937 = vmax.f32 %v3933, %v3829
      %v3938 = vmax.f32 %v3934, %v3831
      %v3939 = vmax.f32 %v3935, %v3833
      %v3940 = vmax.f32 %v3936, %v3835
      %v3941 = vmax.f32 %v3937, %v3837
      %v3942 = vmax.f32 %v3938, %v3839
      %v3943 = vmax.f32 %v3939, %v3841
      %v3944 = vmax.f32 %v3940, %v3843
      %v3945 = vmax.f32 %v3941, %v3845
      %v3946 = vmax.f32 %v3942, %v3847
      %v3947 = vmax.f32 %v3943, %v3849
      %v3948 = vmax.f32 %v3944, %v3851
      %v3949 = vmax.f32 %v3945, %v3853
      %v3950 = vmax.f32 %v3946, %v3855
      %v3951 = vmax.f32 %v3947, %v3857
      %v3952 = vmax.f32 %v3948, %v3859
      %v3953 = vmax.f32 %v3949, %v3861
      %v3954 = vmax.f32 %v3950, %v3863
      %v3955 = vmax.f32 %v3951, %v3865
      %v3956 = vmax.f32 %v3952, %v3867
      %v3957 = vmax.f32 %v3953, %v3869
      %v3958 = vmax.f32 %v3954, %v3871
      %v3959 = vmax.f32 %v3955, %v3873
      %v3960 = vmax.f32 %v3956, %v3875
      %v3961 = vmax.f32 %v3957, %v3877
      %v3962 = vmax.f32 %v3958, %v3879
      %v3963 = vmax.f32 %v3959, %v3881
      %v3964 = vmax.f32 %v3960, %v3883
      %v3965 = vmax.f32 %v3961, %v3885
      %v3966 = vmax.f32 %v3962, %v3887
      %v3967 = vmax.f32 %v3963, %v3889
      %v3968 = vmax.f32 %v3964, %v3891
      %v3969 = vmax.f32 %v3965, %v3893
      %v3970 = vmax.f32 %v3966, %v3895
      %v3971 = vmax.f32 %v3967, %v3897
      %v3972 = vmax.f32 %v3968, %v3899
      %v3973 = vmax.f32 %v3969, %v3901
      %v3974 = vmax.f32 %v3970, %v3903
      %v3975 = vmax.f32 %v3971, %v3905
      %v3976 = vmax.f32 %v3972, %v3907
      %v3977 = vmax.f32 %v3973, %v3909
      %v3978 = vmax.f32 %v3974, %v3911
      %v3979 = vmax.f32 %v3975, %v3913
      %v3980 = vmax.f32 %v3976, %v3915
      %v3981 = vmax.f32 %v3977, %v3917
      %v3982 = vmax.f32 %v3978, %v3919
      %v3983 = vmax.f32 %v3979, %v3921
      %v3984 = vmax.f32 %v3980, %v3923
      %v3985 = vmax.f32 %v3981, %v3925
      %v3986 = vmax.f32 %v3982, %v3983
      %v3987 = vmax.f32 %v3984, %v3985
      %v3988 = vmax.f32 %v3986, %v3987
      %v3989 = vrot.slane %v3988, 4
      %v3990 = vmax.f32 %v3988, %v3989
      %v3991 = vrot.slane %v3990, 2
      %v3992 = vmax.f32 %v3990, %v3991
      %v3993 = vrot.slane %v3992, 1
      %v3994 = vmax.f32 %v3992, %v3993
      %s3995 = vtos %v3994
      %v3996 = vld [vmem:[#allocation4] sm:$0x1]
      %v3997 = vstv %s3995
      %v3998 = vmax.f32 %v3996, %v3997
      %vm3999 = vcmask 0
      %4000 = vst.msk [vmem:[#allocation4] sm:$0x1] %vm3999, %v3998
    $region25: #{perceptual_hausdorff_loss.1} parent=1 // pred_fallthru
      _
    // Predicated region
    $region26: #{perceptual_hausdorff_loss.1} parent=1 // pred_check
      _
    $region27: #{perceptual_hausdorff_loss.1} parent=1 // pred_check_branch
      %4002 = sbr.rel (%p25) target = $region29
    $region28: #{perceptual_hausdorff_loss.1} parent=1 // pred_region
      %v4003 = vld [vmem:[#allocation4] sm:$0x1]
      %v4004 = vld [vmem:[#allocation3] sm:$0xff]
      %v4005 = vld [vmem:[#allocation3 + $0x8] sm:$0xff]
      %v4006 = vld [vmem:[#allocation3 + $0x10] sm:$0xff]
      %v4007 = vld [vmem:[#allocation3 + $0x18] sm:$0xff]
      %v4008 = vld [vmem:[#allocation3 + $0x20] sm:$0xff]
      %v4009 = vld [vmem:[#allocation3 + $0x28] sm:$0xff]
      %v4010 = vld [vmem:[#allocation3 + $0x30] sm:$0xff]
      %v4011 = vld [vmem:[#allocation3 + $0x38] sm:$0xff]
      %v4012 = vrot.slane %v4004, 4
      %v4013 = vmin.f32 %v4004, %v4012
      %v4014 = vrot.slane %v4013, 2
      %v4015 = vmin.f32 %v4013, %v4014
      %v4016 = vrot.slane %v4015, 1
      %v4017 = vmin.f32 %v4015, %v4016
      %v4018 = vrot.slane %v4005, 4
      %v4019 = vmin.f32 %v4005, %v4018
      %v4020 = vrot.slane %v4019, 2
      %v4021 = vmin.f32 %v4019, %v4020
      %v4022 = vrot.slane %v4021, 1
      %v4023 = vmin.f32 %v4021, %v4022
      %v4024 = vrot.slane %v4006, 4
      %v4025 = vmin.f32 %v4006, %v4024
      %v4026 = vrot.slane %v4025, 2
      %v4027 = vmin.f32 %v4025, %v4026
      %v4028 = vrot.slane %v4027, 1
      %v4029 = vmin.f32 %v4027, %v4028
      %v4030 = vrot.slane %v4007, 4
      %v4031 = vmin.f32 %v4007, %v4030
      %v4032 = vrot.slane %v4031, 2
      %v4033 = vmin.f32 %v4031, %v4032
      %v4034 = vrot.slane %v4033, 1
      %v4035 = vmin.f32 %v4033, %v4034
      %v4036 = vrot.slane %v4008, 4
      %v4037 = vmin.f32 %v4008, %v4036
      %v4038 = vrot.slane %v4037, 2
      %v4039 = vmin.f32 %v4037, %v4038
      %v4040 = vrot.slane %v4039, 1
      %v4041 = vmin.f32 %v4039, %v4040
      %v4042 = vrot.slane %v4009, 4
      %v4043 = vmin.f32 %v4009, %v4042
      %v4044 = vrot.slane %v4043, 2
      %v4045 = vmin.f32 %v4043, %v4044
      %v4046 = vrot.slane %v4045, 1
      %v4047 = vmin.f32 %v4045, %v4046
      %v4048 = vrot.slane %v4010, 4
      %v4049 = vmin.f32 %v4010, %v4048
      %v4050 = vrot.slane %v4049, 2
      %v4051 = vmin.f32 %v4049, %v4050
      %v4052 = vrot.slane %v4051, 1
      %v4053 = vmin.f32 %v4051, %v4052
      %v4054 = vrot.slane %v4011, 4
      %v4055 = vmin.f32 %v4011, %v4054
      %v4056 = vrot.slane %v4055, 2
      %v4057 = vmin.f32 %v4055, %v4056
      %v4058 = vrot.slane %v4057, 1
      %v4059 = vmin.f32 %v4057, %v4058
      %v4060 = vlaneseq
      %v4061 = vand.u32 %v4060, 127
      %v4062 = vadd.s32 %v4061, 128
      %v4063 = vadd.s32 %v4061, 256
      %v4064 = vadd.s32 %v4061, 384
      %v4065 = vadd.s32 %v4061, 512
      %v4066 = vadd.s32 %v4061, 640
      %v4067 = vadd.s32 %v4061, 768
      %v4068 = vadd.s32 %v4061, 896
      %v4069 = vstv %s20
      %vm4070 = vcmp.lt.s32.totalorder %v4061, %v4069
      %vm4071 = vcmp.lt.s32.totalorder %v4062, %v4069
      %vm4072 = vcmp.lt.s32.totalorder %v4063, %v4069
      %vm4073 = vcmp.lt.s32.totalorder %v4064, %v4069
      %vm4074 = vcmp.lt.s32.totalorder %v4065, %v4069
      %vm4075 = vcmp.lt.s32.totalorder %v4066, %v4069
      %vm4076 = vcmp.lt.s32.totalorder %v4067, %v4069
      %vm4077 = vcmp.lt.s32.totalorder %v4068, %v4069
      %v4078 = vsel %vm4070, %v4017, -1.0
      %v4079 = vsel %vm4071, %v4023, -1.0
      %v4080 = vsel %vm4072, %v4029, -1.0
      %v4081 = vsel %vm4073, %v4035, -1.0
      %v4082 = vsel %vm4074, %v4041, -1.0
      %v4083 = vsel %vm4075, %v4047, -1.0
      %v4084 = vsel %vm4076, %v4053, -1.0
      %v4085 = vsel %vm4077, %v4059, -1.0
      %v4086 = vmax.f32 %v4078, %v4082
      %v4087 = vmax.f32 %v4079, %v4083
      %v4088 = vmax.f32 %v4080, %v4084
      %v4089 = vmax.f32 %v4081, %v4085
      %v4090 = vmax.f32 %v4086, %v4087
      %v4091 = vmax.f32 %v4088, %v4089
      %v4092 = vmax.f32 %v4090, %v4091
      %4093 = vmax.xlane.f32.xlu0 %v4092
      %v4094 = vpop.xlane.xlu0 %4093
      %s4095 = vtos %v4094
      %v4096 = vstv %s4095
      %v4097 = vmax.f32 %v4003, %v4096
      %vm4098 = vcmp.le.f32.partialorder %v4097, 4.0
      %v4099 = vmax.f32 %v4097, 0.0
      %v4100 = vrsqrt.pop %v4099
      %v4101 = vmul.f32 %v4099, %v4100
      %vm4102 = vcmp.eq.f32.partialorder %v4099, inf
      %v4103 = vsel %vm4102, %v4099, %v4101
      %vm4104 = vcmp.eq.f32.partialorder %v4099, 0.0
      %v4105 = vand.u32 %v4099, 2147483648
      %v4106 = vsel %vm4104, %v4105, %v4103
      %v4107 = vsel %vm4098, 0.0, %v4106
      %vm4108 = vcmask 0
      %4109 = vst.msk [vmem:[#allocation7] sm:$0x1] %vm4108, %v4107
    $region29: #{perceptual_hausdorff_loss.1} parent=1 // pred_fallthru
      _
    // Predicated region
    $region30: #{perceptual_hausdorff_loss.1} parent=1 // pred_check
      _
    $region31: #{perceptual_hausdorff_loss.1} parent=1 // pred_check_branch
      %4111 = sbr.rel (0) target = $region33
    $region32: #{perceptual_hausdorff_loss.1} parent=1 // pred_region
      %s4113 = ssub.s32 16, 16
      %4114 = vsyncadd [#allocation8], %s4113
      %s4116 = sshll.u32 [#allocation7], 4
      %s4117 = int_to_ptr.vmem [resolvable:$true] %s4116
      %4119 = dma.vmem_to_hbm [thread:$0]  %s4117, 16, %s3, [#allocation8]
    $region33: #{perceptual_hausdorff_loss.1} parent=1 // pred_fallthru
      _
    // Predicated region
    $region34: #{perceptual_hausdorff_loss.1} parent=1 // pred_check
      _
    $region35: #{perceptual_hausdorff_loss.1} parent=1 // pred_check_branch
      %4121 = sbr.rel (0) target = $region37
    $region36: #{perceptual_hausdorff_loss.1} parent=1 // pred_region
      %4122 = dma.done [#allocation8], 16
    $region37: #{perceptual_hausdorff_loss.1} parent=1 // pred_fallthru
      _
    %4123 = vsyncpa [#allocation8], 1

</llo_original>
